<compile_context>
chip_gen: v7x
topology: tpu7x:2x2x1
jax: 0.10.0
libtpu: 0.0.40
codegen_flags: <defaults>
</compile_context>

<pallas_src>
import functools
import math

import jax
import jax.numpy as jnp
from jax.experimental import pallas as pl
from jax.experimental.pallas import tpu as pltpu


# ----------------------------- per-generation config ------------------------

def _select_config():
    """(vmem_limit_bytes, TM, TN, TK) chosen from the local chip's VMEM size."""
    vmem_cap = None
    try:
        info = pltpu.get_tpu_info()
        vmem_cap = getattr(info, "vmem_capacity_bytes", None)
    except Exception:
        vmem_cap = None
    if vmem_cap is not None and vmem_cap >= 100 * 1024 * 1024:
        # v5e / v6e: 128 MiB VMEM per TensorCore -> big tiles, big scoped budget.
        return 96 * 1024 * 1024, 512, 512, 512
    # v7x (64 MiB) or unknown: conservative.
    return 48 * 1024 * 1024, 256, 256, 512


_VMEM_LIMIT, _TM, _TN, _TK = _select_config()


def _round_up(x, m):
    return ((x + m - 1) // m) * m


def _fit_tile(dim, target, align):
    """Largest tile <= target that evenly divides `dim` and is `align`-aligned.

    Falls back to the full dimension (always a legal block) when no aligned
    divisor exists; callers pad hazard-sized dims (vocab) at init instead.
    """
    if dim <= target:
        return dim
    t = (target // align) * align
    while t >= align:
        if dim % t == 0:
            return t
        t -= align
    return dim


def _row_tile(m, target):
    """Row tile; prefers >=2 tiles so both v7x TensorCores get work."""
    t = _fit_tile(m, target, 8)
    if m // t < 2 and m >= 16:
        t2 = _fit_tile(m, max(8, m // 2), 8)
        if m // t2 >= 2:
            t = t2
    return t


def _mosaic_params(dims):
    return pltpu.CompilerParams(
        dimension_semantics=dims, vmem_limit_bytes=_VMEM_LIMIT
    )


# ----------------------------- tiled dense (+ bias, optional ReLU) ----------

def _dense_kernel(x_ref, w_ref, b_ref, o_ref, acc_ref, *, activation):
    k = pl.program_id(2)

    @pl.when(k == 0)
    def _():
        acc_ref[...] = jnp.zeros_like(acc_ref)

    x = x_ref[...]
    if x.dtype != w_ref.dtype:
        x = x.astype(w_ref.dtype)
    acc_ref[...] += jnp.dot(x, w_ref[...], preferred_element_type=jnp.float32)

    @pl.when(k == pl.num_programs(2) - 1)
    def _():
        h = acc_ref[...] + b_ref[...]
        if activation == "relu":
            h = jnp.maximum(h, 0.0)
        o_ref[...] = h.astype(o_ref.dtype)


def pallas_dense(x2d, w_bf16, b, *, activation=None, out_dtype=jnp.bfloat16):
    M, K = x2d.shape
    N = w_bf16.shape[1]
    tm = _row_tile(M, _TM)
    tn = _fit_tile(N, _TN, 128)
    tk = _fit_tile(K, _TK, 128)
    grid = (M // tm, N // tn, K // tk)
    return pl.pallas_call(
        functools.partial(_dense_kernel, activation=activation),
        out_shape=jax.ShapeDtypeStruct((M, N), out_dtype),
        grid_spec=pltpu.PrefetchScalarGridSpec(
            num_scalar_prefetch=0,
            grid=grid,
            in_specs=[
                pl.BlockSpec((tm, tk), lambda i, j, k: (i, k)),
                pl.BlockSpec((tk, tn), lambda i, j, k: (k, j)),
                pl.BlockSpec((1, tn), lambda i, j, k: (0, j)),
            ],
            out_specs=pl.BlockSpec((tm, tn), lambda i, j, k: (i, j)),
            scratch_shapes=[pltpu.VMEM((tm, tn), jnp.float32)],
        ),
        compiler_params=_mosaic_params(("parallel", "parallel", "arbitrary")),
    )(x2d, w_bf16, b.reshape(1, N))


# --------------- tiled dense + bias + residual + LayerNorm (fused epilogue) -

def _dense_residual_ln_kernel(x_ref, w_ref, b_ref, r_ref, g_ref, bt_ref,
                              o_ref, acc_ref, *, eps):
    k = pl.program_id(1)

    @pl.when(k == 0)
    def _():
        acc_ref[...] = jnp.zeros_like(acc_ref)

    x = x_ref[...]
    if x.dtype != w_ref.dtype:
        x = x.astype(w_ref.dtype)
    acc_ref[...] += jnp.dot(x, w_ref[...], preferred_element_type=jnp.float32)

    @pl.when(k == pl.num_programs(1) - 1)
    def _():
        h = acc_ref[...] + b_ref[...] + r_ref[...].astype(jnp.float32)
        mu = jnp.mean(h, axis=-1, keepdims=True)
        var = jnp.mean((h - mu) * (h - mu), axis=-1, keepdims=True)
        y = (h - mu) * jax.lax.rsqrt(var + eps) * g_ref[...] + bt_ref[...]
        o_ref[...] = y.astype(o_ref.dtype)


def pallas_dense_residual_ln(x2d, w_bf16, b, residual, gamma, beta, *, eps=1e-5):
    M, K = x2d.shape
    N = w_bf16.shape[1]          # LayerNorm needs the full feature dim resident.
    tm = _row_tile(M, _TM)
    tk = _fit_tile(K, _TK, 128)
    grid = (M // tm, K // tk)
    return pl.pallas_call(
        functools.partial(_dense_residual_ln_kernel, eps=eps),
        out_shape=jax.ShapeDtypeStruct((M, N), jnp.bfloat16),
        grid_spec=pltpu.PrefetchScalarGridSpec(
            num_scalar_prefetch=0,
            grid=grid,
            in_specs=[
                pl.BlockSpec((tm, tk), lambda i, k: (i, k)),
                pl.BlockSpec((tk, N), lambda i, k: (k, 0)),
                pl.BlockSpec((1, N), lambda i, k: (0, 0)),
                pl.BlockSpec((tm, N), lambda i, k: (i, 0)),
                pl.BlockSpec((1, N), lambda i, k: (0, 0)),
                pl.BlockSpec((1, N), lambda i, k: (0, 0)),
            ],
            out_specs=pl.BlockSpec((tm, N), lambda i, k: (i, 0)),
            scratch_shapes=[pltpu.VMEM((tm, N), jnp.float32)],
        ),
        compiler_params=_mosaic_params(("parallel", "arbitrary")),
    )(x2d, w_bf16, b.reshape(1, N), residual,
      gamma.reshape(1, N), beta.reshape(1, N))


# ---------------- fused LayerNorm (prologue, cached) + vocab projection -----

def _ln_dense_kernel(x_ref, g_ref, bt_ref, w_ref, b_ref, o_ref, xn_ref, *, eps):
    # Compute LN once per m-tile (j == 0) and cache the normalized slab in
    # VMEM; all vocab N-tiles reuse it (vocab axis is the inner loop).
    @pl.when(pl.program_id(1) == 0)
    def _():
        x = x_ref[...].astype(jnp.float32)
        mu = jnp.mean(x, axis=-1, keepdims=True)
        var = jnp.mean((x - mu) * (x - mu), axis=-1, keepdims=True)
        xn = (x - mu) * jax.lax.rsqrt(var + eps) * g_ref[...] + bt_ref[...]
        xn_ref[...] = xn.astype(xn_ref.dtype)

    o_ref[...] = (
        jnp.dot(xn_ref[...], w_ref[...], preferred_element_type=jnp.float32)
        + b_ref[...]
    ).astype(o_ref.dtype)


def pallas_ln_dense(x2d, gamma, beta, w_bf16, b, *, eps=1e-5):
    M, K = x2d.shape             # K = embed dim, fully resident per m-tile.
    N = w_bf16.shape[1]          # padded vocab (multiple of 128).
    tm = _row_tile(M, _TM)
    tn = _fit_tile(N, _TN, 128)  # vocab streamed N-tiled.
    grid = (M // tm, N // tn)
    return pl.pallas_call(
        functools.partial(_ln_dense_kernel, eps=eps),
        out_shape=jax.ShapeDtypeStruct((M, N), jnp.float32),
        grid_spec=pltpu.PrefetchScalarGridSpec(
            num_scalar_prefetch=0,
            grid=grid,
            in_specs=[
                pl.BlockSpec((tm, K), lambda i, j: (i, 0)),
                pl.BlockSpec((1, K), lambda i, j: (0, 0)),
                pl.BlockSpec((1, K), lambda i, j: (0, 0)),
                pl.BlockSpec((K, tn), lambda i, j: (0, j)),
                pl.BlockSpec((1, tn), lambda i, j: (0, j)),
            ],
            out_specs=pl.BlockSpec((tm, tn), lambda i, j: (i, j)),
            scratch_shapes=[pltpu.VMEM((tm, K), jnp.bfloat16)],
        ),
        # N axis must stay sequential per-core so the cached LN slab is valid.
        compiler_params=_mosaic_params(("parallel", "arbitrary")),
    )(x2d, gamma.reshape(1, K), beta.reshape(1, K), w_bf16, b.reshape(1, N))


# ----------------------------- attention ------------------------------------

def _attention_kernel(qkv_ref, o_ref, w_ref, *, H, Dh, hidden, tq, scale):
    # One batch element x one query tile per grid step; all heads processed
    # here so the merged-head output can be stored lane-dense as (tq, hidden).
    qi = pl.program_id(1)
    q_start = pl.multiple_of(qi * tq, 8)
    q_rows = qkv_ref[0, pl.ds(q_start, tq), :]       # (tq, 3*hidden) bf16
    kv = qkv_ref[0]                                  # (S, 3*hidden)  bf16

    outs = []
    for h in range(H):                               # static unroll over heads
        q = q_rows[:, h * Dh:(h + 1) * Dh]
        k = kv[:, hidden + h * Dh: hidden + (h + 1) * Dh]
        v = kv[:, 2 * hidden + h * Dh: 2 * hidden + (h + 1) * Dh]
        s = jax.lax.dot_general(q, k, (((1,), (1,)), ((), ())),
                                preferred_element_type=jnp.float32) * scale
        m = jnp.max(s, axis=-1, keepdims=True)
        e = jnp.exp(s - m)
        p = e / jnp.sum(e, axis=-1, keepdims=True)   # exact softmax (weights returned)
        w_ref[0, h] = p
        outs.append(jnp.dot(p.astype(v.dtype), v,
                            preferred_element_type=jnp.float32))
    o_ref[0] = jnp.concatenate(outs, axis=-1).astype(o_ref.dtype)


def pallas_attention(qkv3, *, num_heads):
    # qkv3: (B, S, 3*hidden) bf16 (fused QKV matmul output, free reshape).
    # Returns merged-head output (B, S, hidden) bf16 and weights (B,H,S,S) f32.
    # TODO(synk): the PyTorch module returns full f32 attention weights, so a
    # flash-style (no SxS materialization) kernel cannot be used.
    B, S, three_hidden = qkv3.shape
    hidden = three_hidden // 3
    H = num_heads
    Dh = hidden // H
    tq = _fit_tile(S, 256, 8)        # query tiling bounds VMEM on v7x
    grid = (B, S // tq)
    scale = 1.0 / math.sqrt(Dh)
    return pl.pallas_call(
        functools.partial(_attention_kernel, H=H, Dh=Dh, hidden=hidden,
                          tq=tq, scale=scale),
        out_shape=(
            jax.ShapeDtypeStruct((B, S, hidden), jnp.bfloat16),
            jax.ShapeDtypeStruct((B, H, S, S), jnp.float32),
        ),
        grid_spec=pltpu.PrefetchScalarGridSpec(
            num_scalar_prefetch=0,
            grid=grid,
            in_specs=[
                pl.BlockSpec((1, S, three_hidden), lambda b, qi: (b, 0, 0)),
            ],
            out_specs=(
                pl.BlockSpec((1, tq, hidden), lambda b, qi: (b, qi, 0)),
                pl.BlockSpec((1, H, tq, S), lambda b, qi: (b, 0, qi, 0)),
            ),
        ),
        compiler_params=_mosaic_params(("parallel", "parallel")),
    )(qkv3)


# ----------------------------- model (glue + kernels) -----------------------

def sinusoidal_pe(seq_len, embed_dim):
    pos = jnp.arange(seq_len, dtype=jnp.float32)[:, None]
    i = jnp.arange(0, embed_dim, 2, dtype=jnp.float32)
    div = jnp.exp(-jnp.log(10000.0) * i / embed_dim)
    pe = jnp.zeros((seq_len, embed_dim), jnp.float32)
    pe = pe.at[:, 0::2].set(jnp.sin(pos * div))
    pe = pe.at[:, 1::2].set(jnp.cos(pos * div))
    return pe


def init_params(key, vocab_size, embed_dim, hidden_dim, num_heads,
                enc_ffn_h_dim, num_enc, seq_len):
    ks = iter(jax.random.split(key, 2 + 6 * num_enc))
    w = lambda shape: jax.random.normal(next(ks), shape, jnp.float32) * 0.02

    # Pad the vocab projection to a multiple of 128 so the kernel never falls
    # back to an untiled (E, vocab) block; logits are sliced back afterwards.
    vocab_pad = _round_up(vocab_size, 128)
    out_w = jnp.pad(w((embed_dim, vocab_size)),
                    ((0, 0), (0, vocab_pad - vocab_size)))

    params = {
        "embed": w((vocab_size, embed_dim)),
        "pe": sinusoidal_pe(seq_len, embed_dim),        # precomputed once
        "encoders": [],
        "ln_g": jnp.ones((embed_dim,), jnp.float32),
        "ln_b": jnp.zeros((embed_dim,), jnp.float32),
        "out_w": out_w.astype(jnp.bfloat16),
        "out_b": jnp.zeros((vocab_pad,), jnp.float32),
    }
    for _ in range(num_enc):
        wq = w((embed_dim, hidden_dim))
        wk = w((embed_dim, hidden_dim))
        wv = w((embed_dim, hidden_dim))
        enc = {
            # fused QKV weight (scores are scaled by 1/sqrt(Dh) in-kernel)
            "wqkv": jnp.concatenate([wq, wk, wv], axis=1).astype(jnp.bfloat16),
            "bqkv": jnp.zeros((3 * hidden_dim,), jnp.float32),
            "wo": w((hidden_dim, embed_dim)).astype(jnp.bfloat16),
            "bo": jnp.zeros((embed_dim,), jnp.float32),
            "ln1_g": jnp.ones((embed_dim,), jnp.float32),
            "ln1_b": jnp.zeros((embed_dim,), jnp.float32),
            "ffn_w1": w((embed_dim, enc_ffn_h_dim)).astype(jnp.bfloat16),
            "ffn_b1": jnp.zeros((enc_ffn_h_dim,), jnp.float32),
            "ffn_w2": w((enc_ffn_h_dim, embed_dim)).astype(jnp.bfloat16),
            "ffn_b2": jnp.zeros((embed_dim,), jnp.float32),
            "ln2_g": jnp.ones((embed_dim,), jnp.float32),
            "ln2_b": jnp.zeros((embed_dim,), jnp.float32),
        }
        params["encoders"].append(enc)
    return params


def encoder_block(x2d, enc, B, S, num_heads):
    # x2d: (B*S, E) bf16 residual stream
    M, E = x2d.shape
    hidden = enc["wo"].shape[0]

    # Fused QKV projection; output feeds attention with a free reshape only.
    qkv = pallas_dense(x2d, enc["wqkv"], enc["bqkv"], out_dtype=jnp.bfloat16)
    qkv3 = qkv.reshape(B, S, 3 * hidden)

    attn_out, attn_w = pallas_attention(qkv3, num_heads=num_heads)
    attn_out2d = attn_out.reshape(M, hidden)           # free reshape

    # output projection + bias + residual + LayerNorm fused in one kernel
    h1 = pallas_dense_residual_ln(attn_out2d, enc["wo"], enc["bo"],
                                  x2d, enc["ln1_g"], enc["ln1_b"])

    # FFN: Linear + ReLU (fused), then Linear + bias + residual + LN (fused)
    ff = pallas_dense(h1, enc["ffn_w1"], enc["ffn_b1"],
                      activation="relu", out_dtype=jnp.bfloat16)
    h2 = pallas_dense_residual_ln(ff, enc["ffn_w2"], enc["ffn_b2"],
                                  h1, enc["ln2_g"], enc["ln2_b"])
    return h2, attn_w


@functools.partial(jax.jit, static_argnames=("num_heads",))
def encoder_only_transformer(params, token_ids, *, num_heads):
    B, S = token_ids.shape
    # TODO(synk): the embedding gather + PE add stay in XLA (no clean tiled
    # Pallas equivalent for the token gather); everything downstream is Pallas.
    x = jnp.take(params["embed"], token_ids, axis=0)          # (B, S, E) f32
    x = x + params["pe"][None, :S, :]
    E = x.shape[-1]
    x2d = x.reshape(B * S, E).astype(jnp.bfloat16)            # bf16 residual stream

    attention_weights = []
    for enc in params["encoders"]:
        x2d, w = encoder_block(x2d, enc, B, S, num_heads)
        attention_weights.append(w)

    # final LayerNorm fused as prologue of the (padded) vocab projection
    logits = pallas_ln_dense(x2d, params["ln_g"], params["ln_b"],
                             params["out_w"], params["out_b"])
    vocab = params["embed"].shape[0]
    logits = logits.reshape(B, S, -1)[:, :, :vocab]
    # TODO(synk): nn.Dropout(p=0.2) is identity at inference.
    return logits, attention_weights


# ----------------------------- main -----------------------------------------

if __name__ == "__main__":
    vocab_size = 32
    embed_dim = 32
    seq_len = 8
    hidden_dim = 32
    num_heads = 4
    enc_ffn_h_dim = 64
    num_enc = 2
    batch = 2

    key = jax.random.PRNGKey(0)
    k_param, k_data = jax.random.split(key)

    params = init_params(k_param, vocab_size, embed_dim, hidden_dim,
                         num_heads, enc_ffn_h_dim, num_enc, seq_len)
    token_ids = jax.random.randint(k_data, (batch, seq_len), 0, vocab_size,
                                   dtype=jnp.int32)

    logits, attn_weights = encoder_only_transformer(params, token_ids,
                                                    num_heads=num_heads)
    jax.block_until_ready(logits)
    for w in attn_weights:
        jax.block_until_ready(w)

    assert logits.shape == (batch, seq_len, vocab_size)
    assert logits.dtype == jnp.float32
    assert len(attn_weights) == num_enc
    assert attn_weights[0].shape == (batch, num_heads, seq_len, seq_len)
    assert attn_weights[0].dtype == jnp.float32
    print("KERNEL_OK")
</pallas_src>

<mosaic_0001>
module attributes {stable_mosaic.version = 11 : i64} {
  func.func @_dense_kernel(%arg0: i32, %arg1: i32, %arg2: i32, %arg3: memref<8x32xbf16, #tpu.memory_space<vmem>>, %arg4: memref<32x96xbf16, #tpu.memory_space<vmem>>, %arg5: memref<1x96xf32, #tpu.memory_space<vmem>>, %arg6: memref<8x96xbf16, #tpu.memory_space<vmem>>, %arg7: memref<8x96xf32, #tpu.memory_space<vmem>>) attributes {dimension_semantics = [#tpu.dimension_semantics<parallel>, #tpu.dimension_semantics<parallel>, #tpu.dimension_semantics<arbitrary>], iteration_bounds = array<i64: 2, 1, 1>, scalar_prefetch = 0 : i64, scratch_operands = 1 : i64, tpu.core_type = #tpu.core_type<tc>, window_params = [{transform_indices = @transform_0, window_bounds = array<i64: 8, 32>}, {transform_indices = @transform_1, window_bounds = array<i64: 32, 96>}, {transform_indices = @transform_2, window_bounds = array<i64: 1, 96>}, {transform_indices = @transform_3, window_bounds = array<i64: 8, 96>}]} {
    %c0_i32 = arith.constant 0 : i32
    %0 = arith.cmpi eq, %arg2, %c0_i32 : i32
    %1 = arith.extui %0 : i1 to i32
    %c0_i32_0 = arith.constant 0 : i32
    %2 = arith.cmpi ne, %1, %c0_i32_0 : i32
    scf.if %2 {
      %cst_10 = arith.constant 0.000000e+00 : f32
      %12 = vector.broadcast %cst_10 : f32 to vector<8x96xf32>
      %c0_11 = arith.constant 0 : index
      %c0_12 = arith.constant 0 : index
      %13 = vector.load %arg7[%c0_11, %c0_12] : memref<8x96xf32, #tpu.memory_space<vmem>>, vector<8x96xf32>
      tpu.vector_store %arg7[%c0_11, %c0_12], %12 {strides = array<i32>} : memref<8x96xf32, #tpu.memory_space<vmem>>, vector<8x96xf32>,
    } else {
    }
    %c0 = arith.constant 0 : index
    %c0_1 = arith.constant 0 : index
    %3 = vector.load %arg3[%c0, %c0_1] : memref<8x32xbf16, #tpu.memory_space<vmem>>, vector<8x32xbf16>
    %c0_2 = arith.constant 0 : index
    %c0_3 = arith.constant 0 : index
    %4 = vector.load %arg7[%c0_2, %c0_3] : memref<8x96xf32, #tpu.memory_space<vmem>>, vector<8x96xf32>
    %c0_4 = arith.constant 0 : index
    %c0_5 = arith.constant 0 : index
    %5 = vector.load %arg4[%c0_4, %c0_5] : memref<32x96xbf16, #tpu.memory_space<vmem>>, vector<32x96xbf16>
    %cst = arith.constant dense<0.000000e+00> : vector<8x96xf32>
    %6 = tpu.matmul %3, %5, %cst {dimension_numbers = #tpu.dot_dimension_numbers<[1], [0], [0], [1], [0, 0, 1, 1], [], []>} : vector<8x32xbf16>, vector<32x96xbf16>, vector<8x96xf32> -> vector<8x96xf32>
    %7 = arith.addf %4, %6 : vector<8x96xf32>
    %c0_6 = arith.constant 0 : index
    %c0_7 = arith.constant 0 : index
    %8 = vector.load %arg7[%c0_6, %c0_7] : memref<8x96xf32, #tpu.memory_space<vmem>>, vector<8x96xf32>
    tpu.vector_store %arg7[%c0_6, %c0_7], %7 {strides = array<i32>} : memref<8x96xf32, #tpu.memory_space<vmem>>, vector<8x96xf32>,
    %c0_i32_8 = arith.constant 0 : i32
    %9 = arith.cmpi eq, %arg2, %c0_i32_8 : i32
    %10 = arith.extui %9 : i1 to i32
    %c0_i32_9 = arith.constant 0 : i32
    %11 = arith.cmpi ne, %10, %c0_i32_9 : i32
    scf.if %11 {
      %c0_10 = arith.constant 0 : index
      %c0_11 = arith.constant 0 : index
      %12 = vector.load %arg7[%c0_10, %c0_11] : memref<8x96xf32, #tpu.memory_space<vmem>>, vector<8x96xf32>
      %c0_12 = arith.constant 0 : index
      %c0_13 = arith.constant 0 : index
      %13 = vector.load %arg5[%c0_12, %c0_13] : memref<1x96xf32, #tpu.memory_space<vmem>>, vector<1x96xf32>
      %14 = vector.broadcast %13 : vector<1x96xf32> to vector<8x96xf32>
      %15 = arith.addf %12, %14 : vector<8x96xf32>
      %16 = arith.truncf %15 : vector<8x96xf32> to vector<8x96xbf16>
      %c0_14 = arith.constant 0 : index
      %c0_15 = arith.constant 0 : index
      %17 = vector.load %arg6[%c0_14, %c0_15] : memref<8x96xbf16, #tpu.memory_space<vmem>>, vector<8x96xbf16>
      tpu.vector_store %arg6[%c0_14, %c0_15], %16 {strides = array<i32>} : memref<8x96xbf16, #tpu.memory_space<vmem>>, vector<8x96xbf16>,
    } else {
    }
    return
  }
  func.func @transform_0(%arg0: i32, %arg1: i32, %arg2: i32) -> (i32, i32) {
    %c0_i32 = arith.constant 0 : i32
    return %arg0, %arg2 : i32, i32
  }
  func.func @transform_1(%arg0: i32, %arg1: i32, %arg2: i32) -> (i32, i32) {
    %c0_i32 = arith.constant 0 : i32
    return %arg2, %arg1 : i32, i32
  }
  func.func @transform_2(%arg0: i32, %arg1: i32, %arg2: i32) -> (i32, i32) {
    %c0_i32 = arith.constant 0 : i32
    %c0_i32_0 = arith.constant 0 : i32
    return %c0_i32, %arg1 : i32, i32
  }
  func.func @transform_3(%arg0: i32, %arg1: i32, %arg2: i32) -> (i32, i32) {
    %c0_i32 = arith.constant 0 : i32
    return %arg0, %arg1 : i32, i32
  }
}

module attributes {stable_mosaic.version = 11 : i64} {
  func.func @_dense_kernel(%arg0: i32, %arg1: i32, %arg2: i32, %arg3: memref<8x32xbf16, #tpu.memory_space<vmem>>, %arg4: memref<32x64xbf16, #tpu.memory_space<vmem>>, %arg5: memref<1x64xf32, #tpu.memory_space<vmem>>, %arg6: memref<8x64xbf16, #tpu.memory_space<vmem>>, %arg7: memref<8x64xf32, #tpu.memory_space<vmem>>) attributes {dimension_semantics = [#tpu.dimension_semantics<parallel>, #tpu.dimension_semantics<parallel>, #tpu.dimension_semantics<arbitrary>], iteration_bounds = array<i64: 2, 1, 1>, scalar_prefetch = 0 : i64, scratch_operands = 1 : i64, tpu.core_type = #tpu.core_type<tc>, window_params = [{transform_indices = @transform_0, window_bounds = array<i64: 8, 32>}, {transform_indices = @transform_1, window_bounds = array<i64: 32, 64>}, {transform_indices = @transform_2, window_bounds = array<i64: 1, 64>}, {transform_indices = @transform_3, window_bounds = array<i64: 8, 64>}]} {
    %c0_i32 = arith.constant 0 : i32
    %0 = arith.cmpi eq, %arg2, %c0_i32 : i32
    %1 = arith.extui %0 : i1 to i32
    %c0_i32_0 = arith.constant 0 : i32
    %2 = arith.cmpi ne, %1, %c0_i32_0 : i32
    scf.if %2 {
      %cst_10 = arith.constant 0.000000e+00 : f32
      %12 = vector.broadcast %cst_10 : f32 to vector<8x64xf32>
      %c0_11 = arith.constant 0 : index
      %c0_12 = arith.constant 0 : index
      %13 = vector.load %arg7[%c0_11, %c0_12] : memref<8x64xf32, #tpu.memory_space<vmem>>, vector<8x64xf32>
      tpu.vector_store %arg7[%c0_11, %c0_12], %12 {strides = array<i32>} : memref<8x64xf32, #tpu.memory_space<vmem>>, vector<8x64xf32>,
    } else {
    }
    %c0 = arith.constant 0 : index
    %c0_1 = arith.constant 0 : index
    %3 = vector.load %arg3[%c0, %c0_1] : memref<8x32xbf16, #tpu.memory_space<vmem>>, vector<8x32xbf16>
    %c0_2 = arith.constant 0 : index
    %c0_3 = arith.constant 0 : index
    %4 = vector.load %arg7[%c0_2, %c0_3] : memref<8x64xf32, #tpu.memory_space<vmem>>, vector<8x64xf32>
    %c0_4 = arith.constant 0 : index
    %c0_5 = arith.constant 0 : index
    %5 = vector.load %arg4[%c0_4, %c0_5] : memref<32x64xbf16, #tpu.memory_space<vmem>>, vector<32x64xbf16>
    %cst = arith.constant dense<0.000000e+00> : vector<8x64xf32>
    %6 = tpu.matmul %3, %5, %cst {dimension_numbers = #tpu.dot_dimension_numbers<[1], [0], [0], [1], [0, 0, 1, 1], [], []>} : vector<8x32xbf16>, vector<32x64xbf16>, vector<8x64xf32> -> vector<8x64xf32>
    %7 = arith.addf %4, %6 : vector<8x64xf32>
    %c0_6 = arith.constant 0 : index
    %c0_7 = arith.constant 0 : index
    %8 = vector.load %arg7[%c0_6, %c0_7] : memref<8x64xf32, #tpu.memory_space<vmem>>, vector<8x64xf32>
    tpu.vector_store %arg7[%c0_6, %c0_7], %7 {strides = array<i32>} : memref<8x64xf32, #tpu.memory_space<vmem>>, vector<8x64xf32>,
    %c0_i32_8 = arith.constant 0 : i32
    %9 = arith.cmpi eq, %arg2, %c0_i32_8 : i32
    %10 = arith.extui %9 : i1 to i32
    %c0_i32_9 = arith.constant 0 : i32
    %11 = arith.cmpi ne, %10, %c0_i32_9 : i32
    scf.if %11 {
      %c0_10 = arith.constant 0 : index
      %c0_11 = arith.constant 0 : index
      %12 = vector.load %arg7[%c0_10, %c0_11] : memref<8x64xf32, #tpu.memory_space<vmem>>, vector<8x64xf32>
      %c0_12 = arith.constant 0 : index
      %c0_13 = arith.constant 0 : index
      %13 = vector.load %arg5[%c0_12, %c0_13] : memref<1x64xf32, #tpu.memory_space<vmem>>, vector<1x64xf32>
      %14 = vector.broadcast %13 : vector<1x64xf32> to vector<8x64xf32>
      %15 = arith.addf %12, %14 : vector<8x64xf32>
      %cst_14 = arith.constant 0.000000e+00 : f32
      %16 = vector.broadcast %cst_14 : f32 to vector<8x64xf32>
      %17 = arith.maximumf %15, %16 : vector<8x64xf32>
      %18 = arith.truncf %17 : vector<8x64xf32> to vector<8x64xbf16>
      %c0_15 = arith.constant 0 : index
      %c0_16 = arith.constant 0 : index
      %19 = vector.load %arg6[%c0_15, %c0_16] : memref<8x64xbf16, #tpu.memory_space<vmem>>, vector<8x64xbf16>
      tpu.vector_store %arg6[%c0_15, %c0_16], %18 {strides = array<i32>} : memref<8x64xbf16, #tpu.memory_space<vmem>>, vector<8x64xbf16>,
    } else {
    }
    return
  }
  func.func @transform_0(%arg0: i32, %arg1: i32, %arg2: i32) -> (i32, i32) {
    %c0_i32 = arith.constant 0 : i32
    return %arg0, %arg2 : i32, i32
  }
  func.func @transform_1(%arg0: i32, %arg1: i32, %arg2: i32) -> (i32, i32) {
    %c0_i32 = arith.constant 0 : i32
    return %arg2, %arg1 : i32, i32
  }
  func.func @transform_2(%arg0: i32, %arg1: i32, %arg2: i32) -> (i32, i32) {
    %c0_i32 = arith.constant 0 : i32
    %c0_i32_0 = arith.constant 0 : i32
    return %c0_i32, %arg1 : i32, i32
  }
  func.func @transform_3(%arg0: i32, %arg1: i32, %arg2: i32) -> (i32, i32) {
    %c0_i32 = arith.constant 0 : i32
    return %arg0, %arg1 : i32, i32
  }
}

module attributes {stable_mosaic.version = 11 : i64} {
  func.func @_dense_residual_ln_kernel(%arg0: i32, %arg1: i32, %arg2: memref<8x32xbf16, #tpu.memory_space<vmem>>, %arg3: memref<32x32xbf16, #tpu.memory_space<vmem>>, %arg4: memref<1x32xf32, #tpu.memory_space<vmem>>, %arg5: memref<8x32xbf16, #tpu.memory_space<vmem>>, %arg6: memref<1x32xf32, #tpu.memory_space<vmem>>, %arg7: memref<1x32xf32, #tpu.memory_space<vmem>>, %arg8: memref<8x32xbf16, #tpu.memory_space<vmem>>, %arg9: memref<8x32xf32, #tpu.memory_space<vmem>>) attributes {dimension_semantics = [#tpu.dimension_semantics<parallel>, #tpu.dimension_semantics<arbitrary>], iteration_bounds = array<i64: 2, 1>, scalar_prefetch = 0 : i64, scratch_operands = 1 : i64, tpu.core_type = #tpu.core_type<tc>, window_params = [{transform_indices = @transform_0, window_bounds = array<i64: 8, 32>}, {transform_indices = @transform_1, window_bounds = array<i64: 32, 32>}, {pipeline_mode = #tpu.pipeline_mode<synchronous>, transform_indices = @transform_2, window_bounds = array<i64: 1, 32>}, {transform_indices = @transform_3, window_bounds = array<i64: 8, 32>}, {pipeline_mode = #tpu.pipeline_mode<synchronous>, transform_indices = @transform_4, window_bounds = array<i64: 1, 32>}, {pipeline_mode = #tpu.pipeline_mode<synchronous>, transform_indices = @transform_5, window_bounds = array<i64: 1, 32>}, {transform_indices = @transform_6, window_bounds = array<i64: 8, 32>}]} {
    %c0_i32 = arith.constant 0 : i32
    %0 = arith.cmpi eq, %arg1, %c0_i32 : i32
    %1 = arith.extui %0 : i1 to i32
    %c0_i32_0 = arith.constant 0 : i32
    %2 = arith.cmpi ne, %1, %c0_i32_0 : i32
    scf.if %2 {
      %cst_10 = arith.constant 0.000000e+00 : f32
      %12 = vector.broadcast %cst_10 : f32 to vector<8x32xf32>
      %c0_11 = arith.constant 0 : index
      %c0_12 = arith.constant 0 : index
      %13 = vector.load %arg9[%c0_11, %c0_12] : memref<8x32xf32, #tpu.memory_space<vmem>>, vector<8x32xf32>
      tpu.vector_store %arg9[%c0_11, %c0_12], %12 {strides = array<i32>} : memref<8x32xf32, #tpu.memory_space<vmem>>, vector<8x32xf32>,
    } else {
    }
    %c0 = arith.constant 0 : index
    %c0_1 = arith.constant 0 : index
    %3 = vector.load %arg2[%c0, %c0_1] : memref<8x32xbf16, #tpu.memory_space<vmem>>, vector<8x32xbf16>
    %c0_2 = arith.constant 0 : index
    %c0_3 = arith.constant 0 : index
    %4 = vector.load %arg9[%c0_2, %c0_3] : memref<8x32xf32, #tpu.memory_space<vmem>>, vector<8x32xf32>
    %c0_4 = arith.constant 0 : index
    %c0_5 = arith.constant 0 : index
    %5 = vector.load %arg3[%c0_4, %c0_5] : memref<32x32xbf16, #tpu.memory_space<vmem>>, vector<32x32xbf16>
    %cst = arith.constant dense<0.000000e+00> : vector<8x32xf32>
    %6 = tpu.matmul %3, %5, %cst {dimension_numbers = #tpu.dot_dimension_numbers<[1], [0], [0], [1], [0, 0, 1, 1], [], []>} : vector<8x32xbf16>, vector<32x32xbf16>, vector<8x32xf32> -> vector<8x32xf32>
    %7 = arith.addf %4, %6 : vector<8x32xf32>
    %c0_6 = arith.constant 0 : index
    %c0_7 = arith.constant 0 : index
    %8 = vector.load %arg9[%c0_6, %c0_7] : memref<8x32xf32, #tpu.memory_space<vmem>>, vector<8x32xf32>
    tpu.vector_store %arg9[%c0_6, %c0_7], %7 {strides = array<i32>} : memref<8x32xf32, #tpu.memory_space<vmem>>, vector<8x32xf32>,
    %c0_i32_8 = arith.constant 0 : i32
    %9 = arith.cmpi eq, %arg1, %c0_i32_8 : i32
    %10 = arith.extui %9 : i1 to i32
    %c0_i32_9 = arith.constant 0 : i32
    %11 = arith.cmpi ne, %10, %c0_i32_9 : i32
    scf.if %11 {
      %c0_10 = arith.constant 0 : index
      %c0_11 = arith.constant 0 : index
      %12 = vector.load %arg9[%c0_10, %c0_11] : memref<8x32xf32, #tpu.memory_space<vmem>>, vector<8x32xf32>
      %c0_12 = arith.constant 0 : index
      %c0_13 = arith.constant 0 : index
      %13 = vector.load %arg4[%c0_12, %c0_13] : memref<1x32xf32, #tpu.memory_space<vmem>>, vector<1x32xf32>
      %14 = vector.broadcast %13 : vector<1x32xf32> to vector<8x32xf32>
      %15 = arith.addf %12, %14 : vector<8x32xf32>
      %c0_14 = arith.constant 0 : index
      %c0_15 = arith.constant 0 : index
      %16 = vector.load %arg5[%c0_14, %c0_15] : memref<8x32xbf16, #tpu.memory_space<vmem>>, vector<8x32xbf16>
      %17 = arith.extf %16 : vector<8x32xbf16> to vector<8x32xf32>
      %18 = arith.addf %15, %17 : vector<8x32xf32>
      %cst_16 = arith.constant dense<0.000000e+00> : vector<8xf32>
      %19 = vector.multi_reduction <add>, %18, %cst_16 [1] : vector<8x32xf32> to vector<8xf32>
      %20 = vector.shape_cast %19 : vector<8xf32> to vector<8x1xf32>
      %cst_17 = arith.constant 3.200000e+01 : f32
      %21 = vector.broadcast %cst_17 : f32 to vector<8x1xf32>
      %22 = arith.divf %20, %21 : vector<8x1xf32>
      %23 = vector.broadcast %22 : vector<8x1xf32> to vector<8x32xf32>
      %24 = arith.subf %18, %23 : vector<8x32xf32>
      %25 = vector.broadcast %22 : vector<8x1xf32> to vector<8x32xf32>
      %26 = arith.subf %18, %25 : vector<8x32xf32>
      %27 = arith.mulf %24, %26 : vector<8x32xf32>
      %cst_18 = arith.constant dense<0.000000e+00> : vector<8xf32>
      %28 = vector.multi_reduction <add>, %27, %cst_18 [1] : vector<8x32xf32> to vector<8xf32>
      %29 = vector.shape_cast %28 : vector<8xf32> to vector<8x1xf32>
      %cst_19 = arith.constant 3.200000e+01 : f32
      %30 = vector.broadcast %cst_19 : f32 to vector<8x1xf32>
      %31 = arith.divf %29, %30 : vector<8x1xf32>
      %32 = vector.broadcast %22 : vector<8x1xf32> to vector<8x32xf32>
      %33 = arith.subf %18, %32 : vector<8x32xf32>
      %cst_20 = arith.constant 9.99999974E-6 : f32
      %34 = vector.broadcast %cst_20 : f32 to vector<8x1xf32>
      %35 = arith.addf %31, %34 : vector<8x1xf32>
      %36 = math.rsqrt %35 : vector<8x1xf32>
      %37 = vector.broadcast %36 : vector<8x1xf32> to vector<8x32xf32>
      %38 = arith.mulf %33, %37 : vector<8x32xf32>
      %c0_21 = arith.constant 0 : index
      %c0_22 = arith.constant 0 : index
      %39 = vector.load %arg6[%c0_21, %c0_22] : memref<1x32xf32, #tpu.memory_space<vmem>>, vector<1x32xf32>
      %40 = vector.broadcast %39 : vector<1x32xf32> to vector<8x32xf32>
      %41 = arith.mulf %38, %40 : vector<8x32xf32>
      %c0_23 = arith.constant 0 : index
      %c0_24 = arith.constant 0 : index
      %42 = vector.load %arg7[%c0_23, %c0_24] : memref<1x32xf32, #tpu.memory_space<vmem>>, vector<1x32xf32>
      %43 = vector.broadcast %42 : vector<1x32xf32> to vector<8x32xf32>
      %44 = arith.addf %41, %43 : vector<8x32xf32>
      %45 = arith.truncf %44 : vector<8x32xf32> to vector<8x32xbf16>
      %c0_25 = arith.constant 0 : index
      %c0_26 = arith.constant 0 : index
      %46 = vector.load %arg8[%c0_25, %c0_26] : memref<8x32xbf16, #tpu.memory_space<vmem>>, vector<8x32xbf16>
      tpu.vector_store %arg8[%c0_25, %c0_26], %45 {strides = array<i32>} : memref<8x32xbf16, #tpu.memory_space<vmem>>, vector<8x32xbf16>,
    } else {
    }
    return
  }
  func.func @transform_0(%arg0: i32, %arg1: i32) -> (i32, i32) {
    %c0_i32 = arith.constant 0 : i32
    return %arg0, %arg1 : i32, i32
  }
  func.func @transform_1(%arg0: i32, %arg1: i32) -> (i32, i32) {
    %c0_i32 = arith.constant 0 : i32
    %c0_i32_0 = arith.constant 0 : i32
    return %arg1, %c0_i32 : i32, i32
  }
  func.func @transform_2(%arg0: i32, %arg1: i32) -> (i32, i32) {
    %c0_i32 = arith.constant 0 : i32
    %c0_i32_0 = arith.constant 0 : i32
    %c0_i32_1 = arith.constant 0 : i32
    return %c0_i32, %c0_i32_0 : i32, i32
  }
  func.func @transform_3(%arg0: i32, %arg1: i32) -> (i32, i32) {
    %c0_i32 = arith.constant 0 : i32
    %c0_i32_0 = arith.constant 0 : i32
    return %arg0, %c0_i32 : i32, i32
  }
  func.func @transform_4(%arg0: i32, %arg1: i32) -> (i32, i32) {
    %c0_i32 = arith.constant 0 : i32
    %c0_i32_0 = arith.constant 0 : i32
    %c0_i32_1 = arith.constant 0 : i32
    return %c0_i32, %c0_i32_0 : i32, i32
  }
  func.func @transform_5(%arg0: i32, %arg1: i32) -> (i32, i32) {
    %c0_i32 = arith.constant 0 : i32
    %c0_i32_0 = arith.constant 0 : i32
    %c0_i32_1 = arith.constant 0 : i32
    return %c0_i32, %c0_i32_0 : i32, i32
  }
  func.func @transform_6(%arg0: i32, %arg1: i32) -> (i32, i32) {
    %c0_i32 = arith.constant 0 : i32
    %c0_i32_0 = arith.constant 0 : i32
    return %arg0, %c0_i32 : i32, i32
  }
}

module attributes {stable_mosaic.version = 11 : i64} {
  func.func @_attention_kernel(%arg0: i32, %arg1: i32, %arg2: memref<1x8x96xbf16, #tpu.memory_space<vmem>>, %arg3: memref<1x8x32xbf16, #tpu.memory_space<vmem>>, %arg4: memref<1x4x8x8xf32, #tpu.memory_space<vmem>>) attributes {dimension_semantics = [#tpu.dimension_semantics<parallel>, #tpu.dimension_semantics<parallel>], iteration_bounds = array<i64: 2, 1>, scalar_prefetch = 0 : i64, scratch_operands = 0 : i64, tpu.core_type = #tpu.core_type<tc>, window_params = [{transform_indices = @transform_0, window_bounds = array<i64: 1, 8, 96>}, {transform_indices = @transform_1, window_bounds = array<i64: 1, 8, 32>}, {transform_indices = @transform_2, window_bounds = array<i64: 1, 4, 8, 8>}]} {
    %c8_i32 = arith.constant 8 : i32
    %0 = arith.muli %arg1, %c8_i32 : i32
    %1 = tpu.assume_multiple %0, 8 : i32
    %c0 = arith.constant 0 : index
    %2 = arith.index_cast %1 : i32 to index
    %c0_0 = arith.constant 0 : index
    %3 = vector.load %arg2[%c0, %2, %c0_0] : memref<1x8x96xbf16, #tpu.memory_space<vmem>>, vector<1x8x96xbf16>
    %4 = vector.shape_cast %3 : vector<1x8x96xbf16> to vector<8x96xbf16>
    %c0_1 = arith.constant 0 : index
    %c0_2 = arith.constant 0 : index
    %c0_3 = arith.constant 0 : index
    %5 = vector.load %arg2[%c0_1, %c0_2, %c0_3] : memref<1x8x96xbf16, #tpu.memory_space<vmem>>, vector<1x8x96xbf16>
    %6 = vector.shape_cast %5 : vector<1x8x96xbf16> to vector<8x96xbf16>
    %7 = vector.extract_strided_slice %4 {offsets = [0, 0], sizes = [8, 8], strides = [1, 1]} : vector<8x96xbf16> to vector<8x8xbf16>
    %8 = vector.extract_strided_slice %6 {offsets = [0, 32], sizes = [8, 8], strides = [1, 1]} : vector<8x96xbf16> to vector<8x8xbf16>
    %9 = vector.extract_strided_slice %6 {offsets = [0, 64], sizes = [8, 8], strides = [1, 1]} : vector<8x96xbf16> to vector<8x8xbf16>
    %cst = arith.constant dense<0.000000e+00> : vector<8x8xf32>
    %10 = tpu.matmul %7, %8, %cst {dimension_numbers = #tpu.dot_dimension_numbers<[1], [1], [0], [0], [0, 0, 1, 0], [], []>} : vector<8x8xbf16>, vector<8x8xbf16>, vector<8x8xf32> -> vector<8x8xf32>
    %cst_4 = arith.constant 0.353553385 : f32
    %11 = vector.broadcast %cst_4 : f32 to vector<8x8xf32>
    %12 = arith.mulf %10, %11 : vector<8x8xf32>
    %cst_5 = arith.constant dense<0xFF800000> : vector<8xf32>
    %13 = vector.multi_reduction <maximumf>, %12, %cst_5 [1] : vector<8x8xf32> to vector<8xf32>
    %14 = vector.shape_cast %13 : vector<8xf32> to vector<8x1xf32>
    %15 = vector.broadcast %14 : vector<8x1xf32> to vector<8x8xf32>
    %16 = arith.subf %12, %15 : vector<8x8xf32>
    %17 = math.exp %16 : vector<8x8xf32>
    %cst_6 = arith.constant dense<0.000000e+00> : vector<8xf32>
    %18 = vector.multi_reduction <add>, %17, %cst_6 [1] : vector<8x8xf32> to vector<8xf32>
    %19 = vector.shape_cast %18 : vector<8xf32> to vector<8x1xf32>
    %20 = vector.broadcast %19 : vector<8x1xf32> to vector<8x8xf32>
    %21 = arith.divf %17, %20 : vector<8x8xf32>
    %c0_7 = arith.constant 0 : index
    %c0_8 = arith.constant 0 : index
    %c0_9 = arith.constant 0 : index
    %c0_10 = arith.constant 0 : index
    %22 = vector.load %arg4[%c0_7, %c0_8, %c0_9, %c0_10] : memref<1x4x8x8xf32, #tpu.memory_space<vmem>>, vector<1x1x8x8xf32>
    %23 = vector.shape_cast %22 : vector<1x1x8x8xf32> to vector<8x8xf32>
    %24 = vector.shape_cast %21 : vector<8x8xf32> to vector<1x1x8x8xf32>
    tpu.vector_store %arg4[%c0_7, %c0_8, %c0_9, %c0_10], %24 {strides = array<i32>} : memref<1x4x8x8xf32, #tpu.memory_space<vmem>>, vector<1x1x8x8xf32>,
    %25 = arith.truncf %21 : vector<8x8xf32> to vector<8x8xbf16>
    %cst_11 = arith.constant dense<0.000000e+00> : vector<8x8xf32>
    %26 = tpu.matmul %25, %9, %cst_11 {dimension_numbers = #tpu.dot_dimension_numbers<[1], [0], [0], [1], [0, 0, 1, 1], [], []>} : vector<8x8xbf16>, vector<8x8xbf16>, vector<8x8xf32> -> vector<8x8xf32>
    %27 = vector.extract_strided_slice %4 {offsets = [0, 8], sizes = [8, 8], strides = [1, 1]} : vector<8x96xbf16> to vector<8x8xbf16>
    %28 = vector.extract_strided_slice %6 {offsets = [0, 40], sizes = [8, 8], strides = [1, 1]} : vector<8x96xbf16> to vector<8x8xbf16>
    %29 = vector.extract_strided_slice %6 {offsets = [0, 72], sizes = [8, 8], strides = [1, 1]} : vector<8x96xbf16> to vector<8x8xbf16>
    %cst_12 = arith.constant dense<0.000000e+00> : vector<8x8xf32>
    %30 = tpu.matmul %27, %28, %cst_12 {dimension_numbers = #tpu.dot_dimension_numbers<[1], [1], [0], [0], [0, 0, 1, 0], [], []>} : vector<8x8xbf16>, vector<8x8xbf16>, vector<8x8xf32> -> vector<8x8xf32>
    %cst_13 = arith.constant 0.353553385 : f32
    %31 = vector.broadcast %cst_13 : f32 to vector<8x8xf32>
    %32 = arith.mulf %30, %31 : vector<8x8xf32>
    %cst_14 = arith.constant dense<0xFF800000> : vector<8xf32>
    %33 = vector.multi_reduction <maximumf>, %32, %cst_14 [1] : vector<8x8xf32> to vector<8xf32>
    %34 = vector.shape_cast %33 : vector<8xf32> to vector<8x1xf32>
    %35 = vector.broadcast %34 : vector<8x1xf32> to vector<8x8xf32>
    %36 = arith.subf %32, %35 : vector<8x8xf32>
    %37 = math.exp %36 : vector<8x8xf32>
    %cst_15 = arith.constant dense<0.000000e+00> : vector<8xf32>
    %38 = vector.multi_reduction <add>, %37, %cst_15 [1] : vector<8x8xf32> to vector<8xf32>
    %39 = vector.shape_cast %38 : vector<8xf32> to vector<8x1xf32>
    %40 = vector.broadcast %39 : vector<8x1xf32> to vector<8x8xf32>
    %41 = arith.divf %37, %40 : vector<8x8xf32>
    %c0_16 = arith.constant 0 : index
    %c1 = arith.constant 1 : index
    %c0_17 = arith.constant 0 : index
    %c0_18 = arith.constant 0 : index
    %42 = vector.load %arg4[%c0_16, %c1, %c0_17, %c0_18] : memref<1x4x8x8xf32, #tpu.memory_space<vmem>>, vector<1x1x8x8xf32>
    %43 = vector.shape_cast %42 : vector<1x1x8x8xf32> to vector<8x8xf32>
    %44 = vector.shape_cast %41 : vector<8x8xf32> to vector<1x1x8x8xf32>
    tpu.vector_store %arg4[%c0_16, %c1, %c0_17, %c0_18], %44 {strides = array<i32>} : memref<1x4x8x8xf32, #tpu.memory_space<vmem>>, vector<1x1x8x8xf32>,
    %45 = arith.truncf %41 : vector<8x8xf32> to vector<8x8xbf16>
    %cst_19 = arith.constant dense<0.000000e+00> : vector<8x8xf32>
    %46 = tpu.matmul %45, %29, %cst_19 {dimension_numbers = #tpu.dot_dimension_numbers<[1], [0], [0], [1], [0, 0, 1, 1], [], []>} : vector<8x8xbf16>, vector<8x8xbf16>, vector<8x8xf32> -> vector<8x8xf32>
    %47 = vector.extract_strided_slice %4 {offsets = [0, 16], sizes = [8, 8], strides = [1, 1]} : vector<8x96xbf16> to vector<8x8xbf16>
    %48 = vector.extract_strided_slice %6 {offsets = [0, 48], sizes = [8, 8], strides = [1, 1]} : vector<8x96xbf16> to vector<8x8xbf16>
    %49 = vector.extract_strided_slice %6 {offsets = [0, 80], sizes = [8, 8], strides = [1, 1]} : vector<8x96xbf16> to vector<8x8xbf16>
    %cst_20 = arith.constant dense<0.000000e+00> : vector<8x8xf32>
    %50 = tpu.matmul %47, %48, %cst_20 {dimension_numbers = #tpu.dot_dimension_numbers<[1], [1], [0], [0], [0, 0, 1, 0], [], []>} : vector<8x8xbf16>, vector<8x8xbf16>, vector<8x8xf32> -> vector<8x8xf32>
    %cst_21 = arith.constant 0.353553385 : f32
    %51 = vector.broadcast %cst_21 : f32 to vector<8x8xf32>
    %52 = arith.mulf %50, %51 : vector<8x8xf32>
    %cst_22 = arith.constant dense<0xFF800000> : vector<8xf32>
    %53 = vector.multi_reduction <maximumf>, %52, %cst_22 [1] : vector<8x8xf32> to vector<8xf32>
    %54 = vector.shape_cast %53 : vector<8xf32> to vector<8x1xf32>
    %55 = vector.broadcast %54 : vector<8x1xf32> to vector<8x8xf32>
    %56 = arith.subf %52, %55 : vector<8x8xf32>
    %57 = math.exp %56 : vector<8x8xf32>
    %cst_23 = arith.constant dense<0.000000e+00> : vector<8xf32>
    %58 = vector.multi_reduction <add>, %57, %cst_23 [1] : vector<8x8xf32> to vector<8xf32>
    %59 = vector.shape_cast %58 : vector<8xf32> to vector<8x1xf32>
    %60 = vector.broadcast %59 : vector<8x1xf32> to vector<8x8xf32>
    %61 = arith.divf %57, %60 : vector<8x8xf32>
    %c0_24 = arith.constant 0 : index
    %c2 = arith.constant 2 : index
    %c0_25 = arith.constant 0 : index
    %c0_26 = arith.constant 0 : index
    %62 = vector.load %arg4[%c0_24, %c2, %c0_25, %c0_26] : memref<1x4x8x8xf32, #tpu.memory_space<vmem>>, vector<1x1x8x8xf32>
    %63 = vector.shape_cast %62 : vector<1x1x8x8xf32> to vector<8x8xf32>
    %64 = vector.shape_cast %61 : vector<8x8xf32> to vector<1x1x8x8xf32>
    tpu.vector_store %arg4[%c0_24, %c2, %c0_25, %c0_26], %64 {strides = array<i32>} : memref<1x4x8x8xf32, #tpu.memory_space<vmem>>, vector<1x1x8x8xf32>,
    %65 = arith.truncf %61 : vector<8x8xf32> to vector<8x8xbf16>
    %cst_27 = arith.constant dense<0.000000e+00> : vector<8x8xf32>
    %66 = tpu.matmul %65, %49, %cst_27 {dimension_numbers = #tpu.dot_dimension_numbers<[1], [0], [0], [1], [0, 0, 1, 1], [], []>} : vector<8x8xbf16>, vector<8x8xbf16>, vector<8x8xf32> -> vector<8x8xf32>
    %67 = vector.extract_strided_slice %4 {offsets = [0, 24], sizes = [8, 8], strides = [1, 1]} : vector<8x96xbf16> to vector<8x8xbf16>
    %68 = vector.extract_strided_slice %6 {offsets = [0, 56], sizes = [8, 8], strides = [1, 1]} : vector<8x96xbf16> to vector<8x8xbf16>
    %69 = vector.extract_strided_slice %6 {offsets = [0, 88], sizes = [8, 8], strides = [1, 1]} : vector<8x96xbf16> to vector<8x8xbf16>
    %cst_28 = arith.constant dense<0.000000e+00> : vector<8x8xf32>
    %70 = tpu.matmul %67, %68, %cst_28 {dimension_numbers = #tpu.dot_dimension_numbers<[1], [1], [0], [0], [0, 0, 1, 0], [], []>} : vector<8x8xbf16>, vector<8x8xbf16>, vector<8x8xf32> -> vector<8x8xf32>
    %cst_29 = arith.constant 0.353553385 : f32
    %71 = vector.broadcast %cst_29 : f32 to vector<8x8xf32>
    %72 = arith.mulf %70, %71 : vector<8x8xf32>
    %cst_30 = arith.constant dense<0xFF800000> : vector<8xf32>
    %73 = vector.multi_reduction <maximumf>, %72, %cst_30 [1] : vector<8x8xf32> to vector<8xf32>
    %74 = vector.shape_cast %73 : vector<8xf32> to vector<8x1xf32>
    %75 = vector.broadcast %74 : vector<8x1xf32> to vector<8x8xf32>
    %76 = arith.subf %72, %75 : vector<8x8xf32>
    %77 = math.exp %76 : vector<8x8xf32>
    %cst_31 = arith.constant dense<0.000000e+00> : vector<8xf32>
    %78 = vector.multi_reduction <add>, %77, %cst_31 [1] : vector<8x8xf32> to vector<8xf32>
    %79 = vector.shape_cast %78 : vector<8xf32> to vector<8x1xf32>
    %80 = vector.broadcast %79 : vector<8x1xf32> to vector<8x8xf32>
    %81 = arith.divf %77, %80 : vector<8x8xf32>
    %c0_32 = arith.constant 0 : index
    %c3 = arith.constant 3 : index
    %c0_33 = arith.constant 0 : index
    %c0_34 = arith.constant 0 : index
    %82 = vector.load %arg4[%c0_32, %c3, %c0_33, %c0_34] : memref<1x4x8x8xf32, #tpu.memory_space<vmem>>, vector<1x1x8x8xf32>
    %83 = vector.shape_cast %82 : vector<1x1x8x8xf32> to vector<8x8xf32>
    %84 = vector.shape_cast %81 : vector<8x8xf32> to vector<1x1x8x8xf32>
    tpu.vector_store %arg4[%c0_32, %c3, %c0_33, %c0_34], %84 {strides = array<i32>} : memref<1x4x8x8xf32, #tpu.memory_space<vmem>>, vector<1x1x8x8xf32>,
    %85 = arith.truncf %81 : vector<8x8xf32> to vector<8x8xbf16>
    %cst_35 = arith.constant dense<0.000000e+00> : vector<8x8xf32>
    %86 = tpu.matmul %85, %69, %cst_35 {dimension_numbers = #tpu.dot_dimension_numbers<[1], [0], [0], [1], [0, 0, 1, 1], [], []>} : vector<8x8xbf16>, vector<8x8xbf16>, vector<8x8xf32> -> vector<8x8xf32>
    %87 = tpu.concatenate %26, %46, %66, %86 in 1 : vector<8x8xf32>, vector<8x8xf32>, vector<8x8xf32>, vector<8x8xf32> -> vector<8x32xf32>
    %88 = arith.truncf %87 : vector<8x32xf32> to vector<8x32xbf16>
    %c0_36 = arith.constant 0 : index
    %c0_37 = arith.constant 0 : index
    %c0_38 = arith.constant 0 : index
    %89 = vector.load %arg3[%c0_36, %c0_37, %c0_38] : memref<1x8x32xbf16, #tpu.memory_space<vmem>>, vector<1x8x32xbf16>
    %90 = vector.shape_cast %89 : vector<1x8x32xbf16> to vector<8x32xbf16>
    %91 = vector.shape_cast %88 : vector<8x32xbf16> to vector<1x8x32xbf16>
    tpu.vector_store %arg3[%c0_36, %c0_37, %c0_38], %91 {strides = array<i32>} : memref<1x8x32xbf16, #tpu.memory_space<vmem>>, vector<1x8x32xbf16>,
    return
  }
  func.func @transform_0(%arg0: i32, %arg1: i32) -> (i32, i32, i32) {
    %c0_i32 = arith.constant 0 : i32
    %c0_i32_0 = arith.constant 0 : i32
    %c0_i32_1 = arith.constant 0 : i32
    return %arg0, %c0_i32, %c0_i32_0 : i32, i32, i32
  }
  func.func @transform_1(%arg0: i32, %arg1: i32) -> (i32, i32, i32) {
    %c0_i32 = arith.constant 0 : i32
    %c0_i32_0 = arith.constant 0 : i32
    return %arg0, %arg1, %c0_i32 : i32, i32, i32
  }
  func.func @transform_2(%arg0: i32, %arg1: i32) -> (i32, i32, i32, i32) {
    %c0_i32 = arith.constant 0 : i32
    %c0_i32_0 = arith.constant 0 : i32
    %c0_i32_1 = arith.constant 0 : i32
    return %arg0, %c0_i32, %arg1, %c0_i32_0 : i32, i32, i32, i32
  }
}

module attributes {stable_mosaic.version = 11 : i64} {
  func.func @_ln_dense_kernel(%arg0: i32, %arg1: i32, %arg2: memref<8x32xbf16, #tpu.memory_space<vmem>>, %arg3: memref<1x32xf32, #tpu.memory_space<vmem>>, %arg4: memref<1x32xf32, #tpu.memory_space<vmem>>, %arg5: memref<32x128xbf16, #tpu.memory_space<vmem>>, %arg6: memref<1x128xf32, #tpu.memory_space<vmem>>, %arg7: memref<8x128xf32, #tpu.memory_space<vmem>>, %arg8: memref<8x32xbf16, #tpu.memory_space<vmem>>) attributes {dimension_semantics = [#tpu.dimension_semantics<parallel>, #tpu.dimension_semantics<arbitrary>], iteration_bounds = array<i64: 2, 1>, scalar_prefetch = 0 : i64, scratch_operands = 1 : i64, tpu.core_type = #tpu.core_type<tc>, window_params = [{transform_indices = @transform_0, window_bounds = array<i64: 8, 32>}, {pipeline_mode = #tpu.pipeline_mode<synchronous>, transform_indices = @transform_1, window_bounds = array<i64: 1, 32>}, {pipeline_mode = #tpu.pipeline_mode<synchronous>, transform_indices = @transform_2, window_bounds = array<i64: 1, 32>}, {transform_indices = @transform_3, window_bounds = array<i64: 32, 128>}, {transform_indices = @transform_4, window_bounds = array<i64: 1, 128>}, {transform_indices = @transform_5, window_bounds = array<i64: 8, 128>}]} {
    %c0_i32 = arith.constant 0 : i32
    %0 = arith.cmpi eq, %arg1, %c0_i32 : i32
    %1 = arith.extui %0 : i1 to i32
    %c0_i32_0 = arith.constant 0 : i32
    %2 = arith.cmpi ne, %1, %c0_i32_0 : i32
    scf.if %2 {
      %c0_8 = arith.constant 0 : index
      %c0_9 = arith.constant 0 : index
      %10 = vector.load %arg2[%c0_8, %c0_9] : memref<8x32xbf16, #tpu.memory_space<vmem>>, vector<8x32xbf16>
      %11 = arith.extf %10 : vector<8x32xbf16> to vector<8x32xf32>
      %cst_10 = arith.constant dense<0.000000e+00> : vector<8xf32>
      %12 = vector.multi_reduction <add>, %11, %cst_10 [1] : vector<8x32xf32> to vector<8xf32>
      %13 = vector.shape_cast %12 : vector<8xf32> to vector<8x1xf32>
      %cst_11 = arith.constant 3.200000e+01 : f32
      %14 = vector.broadcast %cst_11 : f32 to vector<8x1xf32>
      %15 = arith.divf %13, %14 : vector<8x1xf32>
      %16 = vector.broadcast %15 : vector<8x1xf32> to vector<8x32xf32>
      %17 = arith.subf %11, %16 : vector<8x32xf32>
      %18 = vector.broadcast %15 : vector<8x1xf32> to vector<8x32xf32>
      %19 = arith.subf %11, %18 : vector<8x32xf32>
      %20 = arith.mulf %17, %19 : vector<8x32xf32>
      %cst_12 = arith.constant dense<0.000000e+00> : vector<8xf32>
      %21 = vector.multi_reduction <add>, %20, %cst_12 [1] : vector<8x32xf32> to vector<8xf32>
      %22 = vector.shape_cast %21 : vector<8xf32> to vector<8x1xf32>
      %cst_13 = arith.constant 3.200000e+01 : f32
      %23 = vector.broadcast %cst_13 : f32 to vector<8x1xf32>
      %24 = arith.divf %22, %23 : vector<8x1xf32>
      %25 = vector.broadcast %15 : vector<8x1xf32> to vector<8x32xf32>
      %26 = arith.subf %11, %25 : vector<8x32xf32>
      %cst_14 = arith.constant 9.99999974E-6 : f32
      %27 = vector.broadcast %cst_14 : f32 to vector<8x1xf32>
      %28 = arith.addf %24, %27 : vector<8x1xf32>
      %29 = math.rsqrt %28 : vector<8x1xf32>
      %30 = vector.broadcast %29 : vector<8x1xf32> to vector<8x32xf32>
      %31 = arith.mulf %26, %30 : vector<8x32xf32>
      %c0_15 = arith.constant 0 : index
      %c0_16 = arith.constant 0 : index
      %32 = vector.load %arg3[%c0_15, %c0_16] : memref<1x32xf32, #tpu.memory_space<vmem>>, vector<1x32xf32>
      %33 = vector.broadcast %32 : vector<1x32xf32> to vector<8x32xf32>
      %34 = arith.mulf %31, %33 : vector<8x32xf32>
      %c0_17 = arith.constant 0 : index
      %c0_18 = arith.constant 0 : index
      %35 = vector.load %arg4[%c0_17, %c0_18] : memref<1x32xf32, #tpu.memory_space<vmem>>, vector<1x32xf32>
      %36 = vector.broadcast %35 : vector<1x32xf32> to vector<8x32xf32>
      %37 = arith.addf %34, %36 : vector<8x32xf32>
      %38 = arith.truncf %37 : vector<8x32xf32> to vector<8x32xbf16>
      %c0_19 = arith.constant 0 : index
      %c0_20 = arith.constant 0 : index
      %39 = vector.load %arg8[%c0_19, %c0_20] : memref<8x32xbf16, #tpu.memory_space<vmem>>, vector<8x32xbf16>
      tpu.vector_store %arg8[%c0_19, %c0_20], %38 {strides = array<i32>} : memref<8x32xbf16, #tpu.memory_space<vmem>>, vector<8x32xbf16>,
    } else {
    }
    %c0 = arith.constant 0 : index
    %c0_1 = arith.constant 0 : index
    %3 = vector.load %arg8[%c0, %c0_1] : memref<8x32xbf16, #tpu.memory_space<vmem>>, vector<8x32xbf16>
    %c0_2 = arith.constant 0 : index
    %c0_3 = arith.constant 0 : index
    %4 = vector.load %arg5[%c0_2, %c0_3] : memref<32x128xbf16, #tpu.memory_space<vmem>>, vector<32x128xbf16>
    %cst = arith.constant dense<0.000000e+00> : vector<8x128xf32>
    %5 = tpu.matmul %3, %4, %cst {dimension_numbers = #tpu.dot_dimension_numbers<[1], [0], [0], [1], [0, 0, 1, 1], [], []>} : vector<8x32xbf16>, vector<32x128xbf16>, vector<8x128xf32> -> vector<8x128xf32>
    %c0_4 = arith.constant 0 : index
    %c0_5 = arith.constant 0 : index
    %6 = vector.load %arg6[%c0_4, %c0_5] : memref<1x128xf32, #tpu.memory_space<vmem>>, vector<1x128xf32>
    %7 = vector.broadcast %6 : vector<1x128xf32> to vector<8x128xf32>
    %8 = arith.addf %5, %7 : vector<8x128xf32>
    %c0_6 = arith.constant 0 : index
    %c0_7 = arith.constant 0 : index
    %9 = vector.load %arg7[%c0_6, %c0_7] : memref<8x128xf32, #tpu.memory_space<vmem>>, vector<8x128xf32>
    tpu.vector_store %arg7[%c0_6, %c0_7], %8 {strides = array<i32>} : memref<8x128xf32, #tpu.memory_space<vmem>>, vector<8x128xf32>,
    return
  }
  func.func @transform_0(%arg0: i32, %arg1: i32) -> (i32, i32) {
    %c0_i32 = arith.constant 0 : i32
    %c0_i32_0 = arith.constant 0 : i32
    return %arg0, %c0_i32 : i32, i32
  }
  func.func @transform_1(%arg0: i32, %arg1: i32) -> (i32, i32) {
    %c0_i32 = arith.constant 0 : i32
    %c0_i32_0 = arith.constant 0 : i32
    %c0_i32_1 = arith.constant 0 : i32
    return %c0_i32, %c0_i32_0 : i32, i32
  }
  func.func @transform_2(%arg0: i32, %arg1: i32) -> (i32, i32) {
    %c0_i32 = arith.constant 0 : i32
    %c0_i32_0 = arith.constant 0 : i32
    %c0_i32_1 = arith.constant 0 : i32
    return %c0_i32, %c0_i32_0 : i32, i32
  }
  func.func @transform_3(%arg0: i32, %arg1: i32) -> (i32, i32) {
    %c0_i32 = arith.constant 0 : i32
    %c0_i32_0 = arith.constant 0 : i32
    return %c0_i32, %arg1 : i32, i32
  }
  func.func @transform_4(%arg0: i32, %arg1: i32) -> (i32, i32) {
    %c0_i32 = arith.constant 0 : i32
    %c0_i32_0 = arith.constant 0 : i32
    return %c0_i32, %arg1 : i32, i32
  }
  func.func @transform_5(%arg0: i32, %arg1: i32) -> (i32, i32) {
    %c0_i32 = arith.constant 0 : i32
    return %arg0, %arg1 : i32, i32
  }
}

module attributes {stable_mosaic.version = 11 : i64} {
  func.func @_dense_residual_ln_kernel(%arg0: i32, %arg1: i32, %arg2: memref<8x64xbf16, #tpu.memory_space<vmem>>, %arg3: memref<64x32xbf16, #tpu.memory_space<vmem>>, %arg4: memref<1x32xf32, #tpu.memory_space<vmem>>, %arg5: memref<8x32xbf16, #tpu.memory_space<vmem>>, %arg6: memref<1x32xf32, #tpu.memory_space<vmem>>, %arg7: memref<1x32xf32, #tpu.memory_space<vmem>>, %arg8: memref<8x32xbf16, #tpu.memory_space<vmem>>, %arg9: memref<8x32xf32, #tpu.memory_space<vmem>>) attributes {dimension_semantics = [#tpu.dimension_semantics<parallel>, #tpu.dimension_semantics<arbitrary>], iteration_bounds = array<i64: 2, 1>, scalar_prefetch = 0 : i64, scratch_operands = 1 : i64, tpu.core_type = #tpu.core_type<tc>, window_params = [{transform_indices = @transform_0, window_bounds = array<i64: 8, 64>}, {transform_indices = @transform_1, window_bounds = array<i64: 64, 32>}, {pipeline_mode = #tpu.pipeline_mode<synchronous>, transform_indices = @transform_2, window_bounds = array<i64: 1, 32>}, {transform_indices = @transform_3, window_bounds = array<i64: 8, 32>}, {pipeline_mode = #tpu.pipeline_mode<synchronous>, transform_indices = @transform_4, window_bounds = array<i64: 1, 32>}, {pipeline_mode = #tpu.pipeline_mode<synchronous>, transform_indices = @transform_5, window_bounds = array<i64: 1, 32>}, {transform_indices = @transform_6, window_bounds = array<i64: 8, 32>}]} {
    %c0_i32 = arith.constant 0 : i32
    %0 = arith.cmpi eq, %arg1, %c0_i32 : i32
    %1 = arith.extui %0 : i1 to i32
    %c0_i32_0 = arith.constant 0 : i32
    %2 = arith.cmpi ne, %1, %c0_i32_0 : i32
    scf.if %2 {
      %cst_10 = arith.constant 0.000000e+00 : f32
      %12 = vector.broadcast %cst_10 : f32 to vector<8x32xf32>
      %c0_11 = arith.constant 0 : index
      %c0_12 = arith.constant 0 : index
      %13 = vector.load %arg9[%c0_11, %c0_12] : memref<8x32xf32, #tpu.memory_space<vmem>>, vector<8x32xf32>
      tpu.vector_store %arg9[%c0_11, %c0_12], %12 {strides = array<i32>} : memref<8x32xf32, #tpu.memory_space<vmem>>, vector<8x32xf32>,
    } else {
    }
    %c0 = arith.constant 0 : index
    %c0_1 = arith.constant 0 : index
    %3 = vector.load %arg2[%c0, %c0_1] : memref<8x64xbf16, #tpu.memory_space<vmem>>, vector<8x64xbf16>
    %c0_2 = arith.constant 0 : index
    %c0_3 = arith.constant 0 : index
    %4 = vector.load %arg9[%c0_2, %c0_3] : memref<8x32xf32, #tpu.memory_space<vmem>>, vector<8x32xf32>
    %c0_4 = arith.constant 0 : index
    %c0_5 = arith.constant 0 : index
    %5 = vector.load %arg3[%c0_4, %c0_5] : memref<64x32xbf16, #tpu.memory_space<vmem>>, vector<64x32xbf16>
    %cst = arith.constant dense<0.000000e+00> : vector<8x32xf32>
    %6 = tpu.matmul %3, %5, %cst {dimension_numbers = #tpu.dot_dimension_numbers<[1], [0], [0], [1], [0, 0, 1, 1], [], []>} : vector<8x64xbf16>, vector<64x32xbf16>, vector<8x32xf32> -> vector<8x32xf32>
    %7 = arith.addf %4, %6 : vector<8x32xf32>
    %c0_6 = arith.constant 0 : index
    %c0_7 = arith.constant 0 : index
    %8 = vector.load %arg9[%c0_6, %c0_7] : memref<8x32xf32, #tpu.memory_space<vmem>>, vector<8x32xf32>
    tpu.vector_store %arg9[%c0_6, %c0_7], %7 {strides = array<i32>} : memref<8x32xf32, #tpu.memory_space<vmem>>, vector<8x32xf32>,
    %c0_i32_8 = arith.constant 0 : i32
    %9 = arith.cmpi eq, %arg1, %c0_i32_8 : i32
    %10 = arith.extui %9 : i1 to i32
    %c0_i32_9 = arith.constant 0 : i32
    %11 = arith.cmpi ne, %10, %c0_i32_9 : i32
    scf.if %11 {
      %c0_10 = arith.constant 0 : index
      %c0_11 = arith.constant 0 : index
      %12 = vector.load %arg9[%c0_10, %c0_11] : memref<8x32xf32, #tpu.memory_space<vmem>>, vector<8x32xf32>
      %c0_12 = arith.constant 0 : index
      %c0_13 = arith.constant 0 : index
      %13 = vector.load %arg4[%c0_12, %c0_13] : memref<1x32xf32, #tpu.memory_space<vmem>>, vector<1x32xf32>
      %14 = vector.broadcast %13 : vector<1x32xf32> to vector<8x32xf32>
      %15 = arith.addf %12, %14 : vector<8x32xf32>
      %c0_14 = arith.constant 0 : index
      %c0_15 = arith.constant 0 : index
      %16 = vector.load %arg5[%c0_14, %c0_15] : memref<8x32xbf16, #tpu.memory_space<vmem>>, vector<8x32xbf16>
      %17 = arith.extf %16 : vector<8x32xbf16> to vector<8x32xf32>
      %18 = arith.addf %15, %17 : vector<8x32xf32>
      %cst_16 = arith.constant dense<0.000000e+00> : vector<8xf32>
      %19 = vector.multi_reduction <add>, %18, %cst_16 [1] : vector<8x32xf32> to vector<8xf32>
      %20 = vector.shape_cast %19 : vector<8xf32> to vector<8x1xf32>
      %cst_17 = arith.constant 3.200000e+01 : f32
      %21 = vector.broadcast %cst_17 : f32 to vector<8x1xf32>
      %22 = arith.divf %20, %21 : vector<8x1xf32>
      %23 = vector.broadcast %22 : vector<8x1xf32> to vector<8x32xf32>
      %24 = arith.subf %18, %23 : vector<8x32xf32>
      %25 = vector.broadcast %22 : vector<8x1xf32> to vector<8x32xf32>
      %26 = arith.subf %18, %25 : vector<8x32xf32>
      %27 = arith.mulf %24, %26 : vector<8x32xf32>
      %cst_18 = arith.constant dense<0.000000e+00> : vector<8xf32>
      %28 = vector.multi_reduction <add>, %27, %cst_18 [1] : vector<8x32xf32> to vector<8xf32>
      %29 = vector.shape_cast %28 : vector<8xf32> to vector<8x1xf32>
      %cst_19 = arith.constant 3.200000e+01 : f32
      %30 = vector.broadcast %cst_19 : f32 to vector<8x1xf32>
      %31 = arith.divf %29, %30 : vector<8x1xf32>
      %32 = vector.broadcast %22 : vector<8x1xf32> to vector<8x32xf32>
      %33 = arith.subf %18, %32 : vector<8x32xf32>
      %cst_20 = arith.constant 9.99999974E-6 : f32
      %34 = vector.broadcast %cst_20 : f32 to vector<8x1xf32>
      %35 = arith.addf %31, %34 : vector<8x1xf32>
      %36 = math.rsqrt %35 : vector<8x1xf32>
      %37 = vector.broadcast %36 : vector<8x1xf32> to vector<8x32xf32>
      %38 = arith.mulf %33, %37 : vector<8x32xf32>
      %c0_21 = arith.constant 0 : index
      %c0_22 = arith.constant 0 : index
      %39 = vector.load %arg6[%c0_21, %c0_22] : memref<1x32xf32, #tpu.memory_space<vmem>>, vector<1x32xf32>
      %40 = vector.broadcast %39 : vector<1x32xf32> to vector<8x32xf32>
      %41 = arith.mulf %38, %40 : vector<8x32xf32>
      %c0_23 = arith.constant 0 : index
      %c0_24 = arith.constant 0 : index
      %42 = vector.load %arg7[%c0_23, %c0_24] : memref<1x32xf32, #tpu.memory_space<vmem>>, vector<1x32xf32>
      %43 = vector.broadcast %42 : vector<1x32xf32> to vector<8x32xf32>
      %44 = arith.addf %41, %43 : vector<8x32xf32>
      %45 = arith.truncf %44 : vector<8x32xf32> to vector<8x32xbf16>
      %c0_25 = arith.constant 0 : index
      %c0_26 = arith.constant 0 : index
      %46 = vector.load %arg8[%c0_25, %c0_26] : memref<8x32xbf16, #tpu.memory_space<vmem>>, vector<8x32xbf16>
      tpu.vector_store %arg8[%c0_25, %c0_26], %45 {strides = array<i32>} : memref<8x32xbf16, #tpu.memory_space<vmem>>, vector<8x32xbf16>,
    } else {
    }
    return
  }
  func.func @transform_0(%arg0: i32, %arg1: i32) -> (i32, i32) {
    %c0_i32 = arith.constant 0 : i32
    return %arg0, %arg1 : i32, i32
  }
  func.func @transform_1(%arg0: i32, %arg1: i32) -> (i32, i32) {
    %c0_i32 = arith.constant 0 : i32
    %c0_i32_0 = arith.constant 0 : i32
    return %arg1, %c0_i32 : i32, i32
  }
  func.func @transform_2(%arg0: i32, %arg1: i32) -> (i32, i32) {
    %c0_i32 = arith.constant 0 : i32
    %c0_i32_0 = arith.constant 0 : i32
    %c0_i32_1 = arith.constant 0 : i32
    return %c0_i32, %c0_i32_0 : i32, i32
  }
  func.func @transform_3(%arg0: i32, %arg1: i32) -> (i32, i32) {
    %c0_i32 = arith.constant 0 : i32
    %c0_i32_0 = arith.constant 0 : i32
    return %arg0, %c0_i32 : i32, i32
  }
  func.func @transform_4(%arg0: i32, %arg1: i32) -> (i32, i32) {
    %c0_i32 = arith.constant 0 : i32
    %c0_i32_0 = arith.constant 0 : i32
    %c0_i32_1 = arith.constant 0 : i32
    return %c0_i32, %c0_i32_0 : i32, i32
  }
  func.func @transform_5(%arg0: i32, %arg1: i32) -> (i32, i32) {
    %c0_i32 = arith.constant 0 : i32
    %c0_i32_0 = arith.constant 0 : i32
    %c0_i32_1 = arith.constant 0 : i32
    return %c0_i32, %c0_i32_0 : i32, i32
  }
  func.func @transform_6(%arg0: i32, %arg1: i32) -> (i32, i32) {
    %c0_i32 = arith.constant 0 : i32
    %c0_i32_0 = arith.constant 0 : i32
    return %arg0, %c0_i32 : i32, i32
  }
}

</mosaic_0001>

<llo_original>
// kernel: encoder_only_transformer.11
$region0: #{encoder_only_transformer.11}
  #allocation0 [shape = 'u32[]', space=smem, size = 0x4, offset = 0x4, fixed_abs, tag = 'smem constant byte address 0x4 - core index']
  #allocation1 [shape = 'u32[144,128]{1,0:T(1,128)}', space=vmem, size = 0x12000, scoped, tag = 'internal scratch']
  #allocation2 [shape = 'f32[8,96]{1,0:T(8,128)}', space=vmem, size = 0x1000, scoped, tag = 'scratch operand']
  %s0 = inlined_call_operand.vmem [shape: bf16[16,32], index: 0, kind: input, shape index: {}]
  %s1 = inlined_call_operand.vmem [shape: bf16[32,96], index: 1, kind: input, shape index: {}]
  %s2 = inlined_call_operand.vmem [shape: f32[1,96], index: 2, kind: input, shape index: {}]
  %s3 = inlined_call_operand.vmem [shape: bf16[16,96], index: 3, kind: output, shape index: {}]
  %s4 = sld [smem:[#allocation0]]
  $region53: #{encoder_only_transformer.11} parent=0
    _
  %s6 = ssub.s32 1, %s4
  %s7 = scalar_select 0, %s6, %s4
  loop: start=0, step=1, limit=4
  $region2: #{encoder_only_transformer.11} parent=0 // loop_pre_header
    _
  $region3: #{encoder_only_transformer.11} parent=0 // loop_header
    %s9 = sphi 0, %s13
    %p10 = scmp.ge.s32.totalorder %s9, 4
    %s16 = sphi 0, %s35
    %s17 = sphi 0, %s31
    %s18 = sphi 0, %s27
    %s19 = sphi 0, %s16
    %s20 = sphi 0, %s17
    %s21 = sphi 0, %s18
    %s22 = sphi 0, %s19
    %s23 = sphi 0, %s20
    %s24 = sphi 0, %s21
    %s40 = sphi 0, %s42
    %s43 = sphi 0, %s40
    %s44 = sphi 0, %s43
    %s60 = sphi 0, %s44
    %s68 = sphi 0, %s70
    %s71 = sphi 0, %s68
    %s72 = sphi 0, %s71
    %s88 = sphi 0, %s72
    %s94 = sphi 0, %s96
    %s97 = sphi 0, %s94
    %s98 = sphi 0, %s97
    %s114 = sphi 0, %s98
    %s122 = sphi 0, %s124
    %s125 = sphi 0, %s122
    %s126 = sphi 0, %s125
    %s142 = sphi 0, %s126
  $region4: #{encoder_only_transformer.11} parent=0 // loop_header_branch
    %12 = sbr.rel (%p10) target = $region8
  $region5: #{encoder_only_transformer.11} parent=0 // loop_body
    %s14 = ssub.s32 %s9, 1
    %s15 = ssub.s32 %s9, 2
    %s25 = sadd.s32 1, %s18
    %p26 = scmp.ge.s32.totalorder %s25, 1
    %s27 = scalar_select %p26, 0, %s25
    %s28 = sadd.s32 1, %s17
    %s29 = scalar_select %p26, %s28, %s17
    %p30 = scmp.ge.s32.totalorder %s29, 1
    %s31 = scalar_select %p30, 0, %s29
    %s32 = sadd.s32 1, %s16
    %s33 = scalar_select %p30, %s32, %s16
    %p34 = scmp.ge.s32.totalorder %s33, 2
    %s35 = scalar_select %p34, 0, %s33
    %s36 = ssub.s32 %s16, %s35
    %s37 = ssub.s32 %s18, %s27
    %s38 = sor.u32 %s36, %s37
    %p39 = scmp.eq.s32.totalorder %s38, 0
    %s41 = sadd.s32 %s40, 1
    %s42 = scalar_select %p39, %s40, %s41
    %p45 = pneg %p39
    %p46 = scmp.eq.s32.totalorder %s9, 1
    %p47 = por %p45, %p46
    %p48 = scmp.ne.s32.totalorder %s40, %s43
    %p49 = scmp.eq.s32.totalorder %s9, 0
    %p50 = por %p48, %p49
    %p51 = scmp.ne.s32.totalorder %s40, %s43
    %p52 = scmp.eq.s32.totalorder %s14, 1
    %p53 = por %p51, %p52
    %p54 = scmp.ne.s32.totalorder %s43, %s44
    %p55 = scmp.eq.s32.totalorder %s14, 0
    %p56 = por %p54, %p55
    %p57 = scmp.ne.s32.totalorder %s43, %s44
    %p58 = scmp.eq.s32.totalorder %s15, 1
    %p59 = por %p57, %p58
    %p61 = scmp.ne.s32.totalorder %s44, %s60
    %p62 = scmp.eq.s32.totalorder %s15, 0
    %p63 = por %p61, %p62
    %s64 = ssub.s32 %s18, %s27
    %s65 = ssub.s32 %s17, %s31
    %s66 = sor.u32 %s64, %s65
    %p67 = scmp.eq.s32.totalorder %s66, 0
    %s69 = sadd.s32 %s68, 1
    %s70 = scalar_select %p67, %s68, %s69
    %p73 = pneg %p67
    %p74 = scmp.eq.s32.totalorder %s9, 1
    %p75 = por %p73, %p74
    %p76 = scmp.ne.s32.totalorder %s68, %s71
    %p77 = scmp.eq.s32.totalorder %s9, 0
    %p78 = por %p76, %p77
    %p79 = scmp.ne.s32.totalorder %s68, %s71
    %p80 = scmp.eq.s32.totalorder %s14, 1
    %p81 = por %p79, %p80
    %p82 = scmp.ne.s32.totalorder %s71, %s72
    %p83 = scmp.eq.s32.totalorder %s14, 0
    %p84 = por %p82, %p83
    %p85 = scmp.ne.s32.totalorder %s71, %s72
    %p86 = scmp.eq.s32.totalorder %s15, 1
    %p87 = por %p85, %p86
    %p89 = scmp.ne.s32.totalorder %s72, %s88
    %p90 = scmp.eq.s32.totalorder %s15, 0
    %p91 = por %p89, %p90
    %s92 = ssub.s32 %s17, %s31
    %p93 = scmp.eq.s32.totalorder %s92, 0
    %s95 = sadd.s32 %s94, 1
    %s96 = scalar_select %p93, %s94, %s95
    %p99 = pneg %p93
    %p100 = scmp.eq.s32.totalorder %s9, 1
    %p101 = por %p99, %p100
    %p102 = scmp.ne.s32.totalorder %s94, %s97
    %p103 = scmp.eq.s32.totalorder %s9, 0
    %p104 = por %p102, %p103
    %p105 = scmp.ne.s32.totalorder %s94, %s97
    %p106 = scmp.eq.s32.totalorder %s14, 1
    %p107 = por %p105, %p106
    %p108 = scmp.ne.s32.totalorder %s97, %s98
    %p109 = scmp.eq.s32.totalorder %s14, 0
    %p110 = por %p108, %p109
    %p111 = scmp.ne.s32.totalorder %s97, %s98
    %p112 = scmp.eq.s32.totalorder %s15, 1
    %p113 = por %p111, %p112
    %p115 = scmp.ne.s32.totalorder %s98, %s114
    %p116 = scmp.eq.s32.totalorder %s15, 0
    %p117 = por %p115, %p116
    %s118 = ssub.s32 %s16, %s35
    %s119 = ssub.s32 %s17, %s31
    %s120 = sor.u32 %s118, %s119
    %p121 = scmp.eq.s32.totalorder %s120, 0
    %s123 = sadd.s32 %s122, 1
    %s124 = scalar_select %p121, %s122, %s123
    %p127 = pneg %p121
    %p128 = scmp.eq.s32.totalorder %s9, 1
    %p129 = por %p127, %p128
    %p130 = scmp.ne.s32.totalorder %s122, %s125
    %p131 = scmp.eq.s32.totalorder %s9, 0
    %p132 = por %p130, %p131
    %p133 = scmp.ne.s32.totalorder %s122, %s125
    %p134 = scmp.eq.s32.totalorder %s14, 1
    %p135 = por %p133, %p134
    %p136 = scmp.ne.s32.totalorder %s125, %s126
    %p137 = scmp.eq.s32.totalorder %s14, 0
    %p138 = por %p136, %p137
    %p139 = scmp.ne.s32.totalorder %s125, %s126
    %p140 = scmp.eq.s32.totalorder %s15, 1
    %p141 = por %p139, %p140
    %p143 = scmp.ne.s32.totalorder %s126, %s142
    %p144 = scmp.eq.s32.totalorder %s15, 0
    %p145 = por %p143, %p144
    %p146 = scmp.le.s32.totalorder 1, %s9
    %p147 = scmp.lt.s32.totalorder %s9, 3
    %p148 = pnand %p146, %p147
    %p149 = pneg %p148
    // Predicated region
    $region9: #{encoder_only_transformer.11} parent=5 // pred_check
      _
    $region10: #{encoder_only_transformer.11} parent=5 // pred_check_branch
      %151 = sbr.rel (%p148) target = $region12
    $region11: #{encoder_only_transformer.11} parent=5 // pred_region
      %s152 = ssub.s32 %s9, 1
      // Predicated region
      $region13: #{encoder_only_transformer.11} parent=11 // pred_check
        %p153 = pneg %p84
      $region14: #{encoder_only_transformer.11} parent=11 // pred_check_branch
        %155 = sbr.rel (%p153) target = $region16
      $region15: #{encoder_only_transformer.11} parent=11 // pred_region
        %s156 = smul.u32 4, %s21
        %p157 = scmp.lt.s32.totalorder %s156, 3
        %s158 = scalar_select %p157, %s156, 3
        %p159 = scmp.lt.s32.totalorder %s20, 0
        %s160 = scalar_select %p159, %s20, 0
        %s161 = sadd.s32 %s160, %s158
        %s162 = smul.addr %s161, 4
        %s163 = scalar_lea.vmem %s1, %s162
        %s164 = smul.u32 4, %s21
      $region16: #{encoder_only_transformer.11} parent=11 // pred_fallthru
        _
      // Predicated region
      $region17: #{encoder_only_transformer.11} parent=11 // pred_check
        %p165 = pneg %p110
      $region18: #{encoder_only_transformer.11} parent=11 // pred_check_branch
        %167 = sbr.rel (%p165) target = $region20
      $region19: #{encoder_only_transformer.11} parent=11 // pred_region
        %p168 = scmp.lt.s32.totalorder %s20, 0
        %s169 = scalar_select %p168, %s20, 0
        %s170 = scalar_lea.vmem %s2, %s169
      $region20: #{encoder_only_transformer.11} parent=11 // pred_fallthru
        _
    $region12: #{encoder_only_transformer.11} parent=5 // pred_fallthru
      _
    %p171 = scmp.lt.s32.totalorder %s9, 2
    // Predicated region
    $region21: #{encoder_only_transformer.11} parent=5 // pred_check
      %p172 = pneg %p171
    $region22: #{encoder_only_transformer.11} parent=5 // pred_check_branch
      %174 = sbr.rel (%p172) target = $region24
    $region23: #{encoder_only_transformer.11} parent=5 // pred_region
      // Predicated region
      $region25: #{encoder_only_transformer.11} parent=23 // pred_check
        %p175 = pneg %p50
      $region26: #{encoder_only_transformer.11} parent=23 // pred_check_branch
        %177 = sbr.rel (%p175) target = $region28
      $region27: #{encoder_only_transformer.11} parent=23 // pred_region
        %p178 = scmp.lt.s32.totalorder %s16, 1
        %s179 = scalar_select %p178, %s16, 1
        %p180 = scmp.lt.s32.totalorder %s18, 0
        %s181 = scalar_select %p180, %s18, 0
        %s182 = sadd.s32 %s181, %s179
        %s183 = smul.addr %s182, 4
        %s184 = scalar_lea.vmem %s0, %s183
      $region28: #{encoder_only_transformer.11} parent=23 // pred_fallthru
        _
    $region24: #{encoder_only_transformer.11} parent=5 // pred_fallthru
      _
    %p185 = scmp.le.s32.totalorder 1, %s9
    %p186 = scmp.lt.s32.totalorder %s9, 3
    %p187 = pnand %p185, %p186
    %p188 = pneg %p187
    // Predicated region
    $region29: #{encoder_only_transformer.11} parent=5 // pred_check
      _
    $region30: #{encoder_only_transformer.11} parent=5 // pred_check_branch
      %190 = sbr.rel (%p187) target = $region32
    $region31: #{encoder_only_transformer.11} parent=5 // pred_region
      %s191 = ssub.s32 %s9, 1
      %p192 = scmp.lt.s32.totalorder %s19, 1
      %s193 = scalar_select %p192, %s19, 1
      %p194 = scmp.lt.s32.totalorder %s21, 0
      %s195 = scalar_select %p194, %s21, 0
      %s196 = sadd.s32 %s195, %s193
      %s197 = smul.addr %s196, 4
      %s198 = scalar_lea.vmem %s0, %s197
      %p199 = pneg %p56
      %p200 = pneg %p53
      %s201 = smul.u32 4, %s21
      %p202 = scmp.lt.s32.totalorder %s201, 3
      %s203 = scalar_select %p202, %s201, 3
      %p204 = scmp.lt.s32.totalorder %s20, 0
      %s205 = scalar_select %p204, %s20, 0
      %s206 = sadd.s32 %s205, %s203
      %s207 = smul.addr %s206, 4
      %s208 = scalar_lea.vmem %s1, %s207
      %p209 = pneg %p84
      %p210 = pneg %p81
      %p211 = scmp.lt.s32.totalorder %s20, 0
      %s212 = scalar_select %p211, %s20, 0
      %s213 = scalar_lea.vmem %s2, %s212
      %p214 = pneg %p110
      %p215 = pneg %p107
      %p216 = pneg %p138
      %p217 = pneg %p135
      %p218 = scmp.lt.s32.totalorder %s19, 1
      %s219 = scalar_select %p218, %s19, 1
      %p220 = scmp.lt.s32.totalorder %s20, 0
      %s221 = scalar_select %p220, %s20, 0
      %s222 = sadd.s32 %s221, %s219
      %s223 = smul.addr %s222, 4
      %s224 = scalar_lea.vmem %s3, %s223
      %p225 = scmp.lt.s32.totalorder %s19, 1
      %s226 = scalar_select %p225, %s19, 1
      %p227 = scmp.lt.s32.totalorder %s21, 0
      %s228 = scalar_select %p227, %s21, 0
      %s229 = sadd.s32 %s228, %s226
      %s230 = smul.addr %s229, 4
      %s231 = scalar_lea.vmem %s0, %s230
      %s232 = smul.u32 4, %s21
      %p233 = scmp.lt.s32.totalorder %s232, 3
      %s234 = scalar_select %p233, %s232, 3
      %p235 = scmp.lt.s32.totalorder %s20, 0
      %s236 = scalar_select %p235, %s20, 0
      %s237 = sadd.s32 %s236, %s234
      %s238 = smul.addr %s237, 4
      %s239 = scalar_lea.vmem %s1, %s238
      %s240 = smul.u32 4, %s21
      %p241 = scmp.lt.s32.totalorder %s20, 0
      %s242 = scalar_select %p241, %s20, 0
      %s243 = scalar_lea.vmem %s2, %s242
      %p244 = scmp.lt.s32.totalorder %s19, 1
      %s245 = scalar_select %p244, %s19, 1
      %p246 = scmp.lt.s32.totalorder %s20, 0
      %s247 = scalar_select %p246, %s20, 0
      %s248 = sadd.s32 %s247, %s245
      %s249 = smul.addr %s248, 4
      %s250 = scalar_lea.vmem %s3, %s249
      %p252 = scmp.eq.s32.totalorder %s21, 0
      // Predicated region
      $region33: #{encoder_only_transformer.11} parent=31 // pred_check
        %p253 = pneg %p252
      $region34: #{encoder_only_transformer.11} parent=31 // pred_check_branch
        %255 = sbr.rel (%p253) target = $region36
      $region35: #{encoder_only_transformer.11} parent=31 // pred_region
        %vm256 = vcmask 785408
        %257 = vst.msk [vmem:[#allocation2] sm:$0xff] %vm256, 0.0
      $region36: #{encoder_only_transformer.11} parent=31 // pred_fallthru
        _
      %v258 = vld [vmem:[%s231] sm:$0xf]
      %v259 = vld [vmem:[#allocation2] sm:$0xff]
      %v260 = vld [vmem:[%s239] sm:$0xf]
      %v261 = vld [vmem:[%s239 + $0x4] sm:$0xf]
      %v262 = vld [vmem:[%s239 + $0x8] sm:$0xf]
      %v263 = vld [vmem:[%s239 + $0xc] sm:$0xf]
      %v268 = vunpack.c.l.b16 %v260
      %v269 = vunpack.c.l.b16 %v261
      %v270 = vunpack.c.l.b16 %v262
      %v271 = vunpack.c.l.b16 %v263
      %v272 = vpack.c.b16 %v269, %v268
      %v273 = vpack.c.b16 %v271, %v270
      %vm276 = vcmask 261120
      %v278 = vsel %vm276, %v258, 0
      %280 = vmatprep.subr.bf16.mxu0 0
      %281 = vmatpush1.bf16.msra.mxu0 %v272
      %282 = vmatprep.subr.bf16.mxu0 0
      %283 = vmatpush1.bf16.msra.mxu0 %v273
      %284 = vmatprep.subr.bf16.mxu0 0
      %285 = vmatpush1.bf16.msra.mxu0 0
      %286 = vmatprep.subr.bf16.mxu0 0
      %287 = vmatpush1.bf16.msra.mxu0 0
      %288 = vmatprep.subr.bf16.mxu0 0
      %289 = vmatpush1.bf16.msra.mxu0 0
      %290 = vmatprep.subr.bf16.mxu0 0
      %291 = vmatpush1.bf16.msra.mxu0 0
      %292 = vmatprep.subr.bf16.mxu0 0
      %293 = vmatpush1.bf16.msra.mxu0 0
      %294 = vmatprep.subr.bf16.mxu0 0
      %295 = vmatpush1.bf16.msra.mxu0 0
      %296 = vmatprep.subr.bf16.mxu0 0
      %297 = vmatpush1.bf16.msra.mxu0 0
      %298 = vmatprep.subr.bf16.mxu0 0
      %299 = vmatpush1.bf16.msra.mxu0 0
      %300 = vmatprep.subr.bf16.mxu0 0
      %301 = vmatpush1.bf16.msra.mxu0 0
      %302 = vmatprep.subr.bf16.mxu0 0
      %303 = vmatpush1.bf16.msra.mxu0 0
      %304 = vmatprep.subr.bf16.mxu0 0
      %305 = vmatpush1.bf16.msra.mxu0 0
      %306 = vmatprep.subr.bf16.mxu0 0
      %307 = vmatpush1.bf16.msra.mxu0 0
      %308 = vmatprep.subr.bf16.mxu0 0
      %309 = vmatpush1.bf16.msra.mxu0 0
      %310 = vmatprep.subr.bf16.mxu0 0
      %311 = vmatpush1.bf16.msra.mxu0 0
      %312 = vmatprep.mubr.bf16.mxu0 0
      %313 = vmatmul.mubr.bf16.gmra.mrb[0].mxu0 %v278
      %v314 = vpop.f32.mrb[0].mxu0
      %v315 = vadd.f32 0.0, %v314
      %v316 = vpop.f32.mrb[0].mxu0
      %v317 = vpop.f32.mrb[0].mxu0
      %v318 = vpop.f32.mrb[0].mxu0
      %319 = vdwg.mxu0
      %v320 = vadd.f32 %v259, %v315
      %vm321 = vcmask 785408
      %322 = vst.msk [vmem:[#allocation2] sm:$0xff] %vm321, %v320
      // Predicated region
      $region37: #{encoder_only_transformer.11} parent=31 // pred_check
        %p323 = pneg %p252
      $region38: #{encoder_only_transformer.11} parent=31 // pred_check_branch
        %325 = sbr.rel (%p323) target = $region40
      $region39: #{encoder_only_transformer.11} parent=31 // pred_region
        %v326 = vld [vmem:[#allocation2] sm:$0xff]
        %v327 = vld [vmem:[%s243] sm:$0x1]
        %v329 = vlaneseq
        %v330 = vshrl.u32 %v329, 7
        %v331 = vsub.s32 0, %v330
        %v332 = vrot.slane %v327, %v331
        %v334 = vadd.f32 %v326, %v332
        %v335 = vpack.c.bf16 %v334, %v334
        %vm336 = vcmask 781312
        %337 = vst.msk [vmem:[%s250] sm:$0xf] %vm336, %v335
      $region40: #{encoder_only_transformer.11} parent=31 // pred_fallthru
        _
      %p338 = scmp.lt.s32.totalorder %s19, 1
      %s339 = scalar_select %p338, %s19, 1
      %p340 = scmp.lt.s32.totalorder %s20, 0
      %s341 = scalar_select %p340, %s20, 0
      %s342 = sadd.s32 %s341, %s339
      %s343 = smul.addr %s342, 4
      %s344 = scalar_lea.vmem %s3, %s343
      // Predicated region
      $region41: #{encoder_only_transformer.11} parent=31 // pred_check
        %p345 = pneg %p135
      $region42: #{encoder_only_transformer.11} parent=31 // pred_check_branch
        %347 = sbr.rel (%p345) target = $region44
      $region43: #{encoder_only_transformer.11} parent=31 // pred_region
        _
      $region44: #{encoder_only_transformer.11} parent=31 // pred_fallthru
        _
    $region32: #{encoder_only_transformer.11} parent=5 // pred_fallthru
      _
    %p348 = scmp.le.s32.totalorder 2, %s9
    // Predicated region
    $region45: #{encoder_only_transformer.11} parent=5 // pred_check
      %p349 = pneg %p348
    $region46: #{encoder_only_transformer.11} parent=5 // pred_check_branch
      %351 = sbr.rel (%p349) target = $region48
    $region47: #{encoder_only_transformer.11} parent=5 // pred_region
      %s352 = ssub.s32 %s9, 2
      // Predicated region
      $region49: #{encoder_only_transformer.11} parent=47 // pred_check
        %p353 = pneg %p141
      $region50: #{encoder_only_transformer.11} parent=47 // pred_check_branch
        %355 = sbr.rel (%p353) target = $region52
      $region51: #{encoder_only_transformer.11} parent=47 // pred_region
        %p356 = scmp.lt.s32.totalorder %s22, 1
        %s357 = scalar_select %p356, %s22, 1
        %p358 = scmp.lt.s32.totalorder %s23, 0
        %s359 = scalar_select %p358, %s23, 0
        %s360 = sadd.s32 %s359, %s357
        %s361 = smul.addr %s360, 4
        %s362 = scalar_lea.vmem %s3, %s361
      $region52: #{encoder_only_transformer.11} parent=47 // pred_fallthru
        _
    $region48: #{encoder_only_transformer.11} parent=5 // pred_fallthru
      _
  $region6: #{encoder_only_transformer.11} parent=0 // loop_footer
    %s13 = sadd.s32 1, %s9
  $region7: #{encoder_only_transformer.11} parent=0 // loop_footer_branch
    %8 = sbr.rel target = $region3
  $region8: #{encoder_only_transformer.11} parent=0 // loop_exit
    _

// kernel: encoder_only_transformer.13
$region0: #{encoder_only_transformer.13}
  #allocation0 [shape = 'u32[]', space=smem, size = 0x4, offset = 0x4, fixed_abs, tag = 'smem constant byte address 0x4 - core index']
  #allocation1 [shape = 'u32[144,128]{1,0:T(1,128)}', space=vmem, size = 0x12000, scoped, tag = 'internal scratch']
  #allocation2 [shape = 'f32[8,32]{1,0:T(8,128)}', space=vmem, size = 0x1000, scoped, tag = 'scratch operand']
  %s0 = inlined_call_operand.vmem [shape: bf16[16,32], index: 0, kind: input, shape index: {}]
  %s1 = inlined_call_operand.vmem [shape: bf16[32,32], index: 1, kind: input, shape index: {}]
  %s2 = inlined_call_operand.vmem [shape: f32[1,32], index: 2, kind: input, shape index: {}]
  %s3 = inlined_call_operand.vmem [shape: bf16[16,32], index: 3, kind: input, shape index: {}]
  %s4 = inlined_call_operand.vmem [shape: f32[1,32], index: 4, kind: input, shape index: {}]
  %s5 = inlined_call_operand.vmem [shape: f32[1,32], index: 5, kind: input, shape index: {}]
  %s6 = inlined_call_operand.vmem [shape: bf16[16,32], index: 6, kind: output, shape index: {}]
  %s7 = sld [smem:[#allocation0]]
  $region65: #{encoder_only_transformer.13} parent=0
    _
  %s9 = ssub.s32 1, %s7
  %s10 = scalar_select 0, %s9, %s7
  loop: start=0, step=1, limit=4
  $region2: #{encoder_only_transformer.13} parent=0 // loop_pre_header
    _
  $region3: #{encoder_only_transformer.13} parent=0 // loop_header
    %s12 = sphi 0, %s16
    %p13 = scmp.ge.s32.totalorder %s12, 4
    %s19 = sphi 0, %s31
    %s20 = sphi 0, %s27
    %s21 = sphi 0, %s19
    %s22 = sphi 0, %s20
    %s23 = sphi 0, %s21
    %s24 = sphi 0, %s22
    %s36 = sphi 0, %s38
    %s39 = sphi 0, %s36
    %s40 = sphi 0, %s39
    %s56 = sphi 0, %s40
    %s62 = sphi 0, %s64
    %s65 = sphi 0, %s62
    %s66 = sphi 0, %s65
    %s82 = sphi 0, %s66
    %s86 = sphi 0, %s86
    %s88 = sphi 0, %s86
    %s89 = sphi 0, %s88
    %s103 = sphi 0, %s89
    %s109 = sphi 0, %s111
    %s112 = sphi 0, %s109
    %s113 = sphi 0, %s112
    %s129 = sphi 0, %s113
    %s133 = sphi 0, %s133
    %s135 = sphi 0, %s133
    %s136 = sphi 0, %s135
    %s150 = sphi 0, %s136
    %s154 = sphi 0, %s154
    %s156 = sphi 0, %s154
    %s157 = sphi 0, %s156
    %s171 = sphi 0, %s157
    %s177 = sphi 0, %s179
    %s180 = sphi 0, %s177
    %s181 = sphi 0, %s180
    %s197 = sphi 0, %s181
  $region4: #{encoder_only_transformer.13} parent=0 // loop_header_branch
    %15 = sbr.rel (%p13) target = $region8
  $region5: #{encoder_only_transformer.13} parent=0 // loop_body
    %s17 = ssub.s32 %s12, 1
    %s18 = ssub.s32 %s12, 2
    %s25 = sadd.s32 1, %s20
    %p26 = scmp.ge.s32.totalorder %s25, 1
    %s27 = scalar_select %p26, 0, %s25
    %s28 = sadd.s32 1, %s19
    %s29 = scalar_select %p26, %s28, %s19
    %p30 = scmp.ge.s32.totalorder %s29, 2
    %s31 = scalar_select %p30, 0, %s29
    %s32 = ssub.s32 %s19, %s31
    %s33 = ssub.s32 %s20, %s27
    %s34 = sor.u32 %s32, %s33
    %p35 = scmp.eq.s32.totalorder %s34, 0
    %s37 = sadd.s32 %s36, 1
    %s38 = scalar_select %p35, %s36, %s37
    %p41 = pneg %p35
    %p42 = scmp.eq.s32.totalorder %s12, 1
    %p43 = por %p41, %p42
    %p44 = scmp.ne.s32.totalorder %s36, %s39
    %p45 = scmp.eq.s32.totalorder %s12, 0
    %p46 = por %p44, %p45
    %p47 = scmp.ne.s32.totalorder %s36, %s39
    %p48 = scmp.eq.s32.totalorder %s17, 1
    %p49 = por %p47, %p48
    %p50 = scmp.ne.s32.totalorder %s39, %s40
    %p51 = scmp.eq.s32.totalorder %s17, 0
    %p52 = por %p50, %p51
    %p53 = scmp.ne.s32.totalorder %s39, %s40
    %p54 = scmp.eq.s32.totalorder %s18, 1
    %p55 = por %p53, %p54
    %p57 = scmp.ne.s32.totalorder %s40, %s56
    %p58 = scmp.eq.s32.totalorder %s18, 0
    %p59 = por %p57, %p58
    %s60 = ssub.s32 %s20, %s27
    %p61 = scmp.eq.s32.totalorder %s60, 0
    %s63 = sadd.s32 %s62, 1
    %s64 = scalar_select %p61, %s62, %s63
    %p67 = pneg %p61
    %p68 = scmp.eq.s32.totalorder %s12, 1
    %p69 = por %p67, %p68
    %p70 = scmp.ne.s32.totalorder %s62, %s65
    %p71 = scmp.eq.s32.totalorder %s12, 0
    %p72 = por %p70, %p71
    %p73 = scmp.ne.s32.totalorder %s62, %s65
    %p74 = scmp.eq.s32.totalorder %s17, 1
    %p75 = por %p73, %p74
    %p76 = scmp.ne.s32.totalorder %s65, %s66
    %p77 = scmp.eq.s32.totalorder %s17, 0
    %p78 = por %p76, %p77
    %p79 = scmp.ne.s32.totalorder %s65, %s66
    %p80 = scmp.eq.s32.totalorder %s18, 1
    %p81 = por %p79, %p80
    %p83 = scmp.ne.s32.totalorder %s66, %s82
    %p84 = scmp.eq.s32.totalorder %s18, 0
    %p85 = por %p83, %p84
    %s87 = sadd.s32 %s86, 1
    %p90 = scmp.eq.s32.totalorder %s12, 1
    %p91 = scmp.ne.s32.totalorder %s86, %s88
    %p92 = scmp.eq.s32.totalorder %s12, 0
    %p93 = por %p91, %p92
    %p94 = scmp.ne.s32.totalorder %s86, %s88
    %p95 = scmp.eq.s32.totalorder %s17, 1
    %p96 = por %p94, %p95
    %p97 = scmp.ne.s32.totalorder %s88, %s89
    %p98 = scmp.eq.s32.totalorder %s17, 0
    %p99 = por %p97, %p98
    %p100 = scmp.ne.s32.totalorder %s88, %s89
    %p101 = scmp.eq.s32.totalorder %s18, 1
    %p102 = por %p100, %p101
    %p104 = scmp.ne.s32.totalorder %s89, %s103
    %p105 = scmp.eq.s32.totalorder %s18, 0
    %p106 = por %p104, %p105
    %s107 = ssub.s32 %s19, %s31
    %p108 = scmp.eq.s32.totalorder %s107, 0
    %s110 = sadd.s32 %s109, 1
    %s111 = scalar_select %p108, %s109, %s110
    %p114 = pneg %p108
    %p115 = scmp.eq.s32.totalorder %s12, 1
    %p116 = por %p114, %p115
    %p117 = scmp.ne.s32.totalorder %s109, %s112
    %p118 = scmp.eq.s32.totalorder %s12, 0
    %p119 = por %p117, %p118
    %p120 = scmp.ne.s32.totalorder %s109, %s112
    %p121 = scmp.eq.s32.totalorder %s17, 1
    %p122 = por %p120, %p121
    %p123 = scmp.ne.s32.totalorder %s112, %s113
    %p124 = scmp.eq.s32.totalorder %s17, 0
    %p125 = por %p123, %p124
    %p126 = scmp.ne.s32.totalorder %s112, %s113
    %p127 = scmp.eq.s32.totalorder %s18, 1
    %p128 = por %p126, %p127
    %p130 = scmp.ne.s32.totalorder %s113, %s129
    %p131 = scmp.eq.s32.totalorder %s18, 0
    %p132 = por %p130, %p131
    %s134 = sadd.s32 %s133, 1
    %p137 = scmp.eq.s32.totalorder %s12, 1
    %p138 = scmp.ne.s32.totalorder %s133, %s135
    %p139 = scmp.eq.s32.totalorder %s12, 0
    %p140 = por %p138, %p139
    %p141 = scmp.ne.s32.totalorder %s133, %s135
    %p142 = scmp.eq.s32.totalorder %s17, 1
    %p143 = por %p141, %p142
    %p144 = scmp.ne.s32.totalorder %s135, %s136
    %p145 = scmp.eq.s32.totalorder %s17, 0
    %p146 = por %p144, %p145
    %p147 = scmp.ne.s32.totalorder %s135, %s136
    %p148 = scmp.eq.s32.totalorder %s18, 1
    %p149 = por %p147, %p148
    %p151 = scmp.ne.s32.totalorder %s136, %s150
    %p152 = scmp.eq.s32.totalorder %s18, 0
    %p153 = por %p151, %p152
    %s155 = sadd.s32 %s154, 1
    %p158 = scmp.eq.s32.totalorder %s12, 1
    %p159 = scmp.ne.s32.totalorder %s154, %s156
    %p160 = scmp.eq.s32.totalorder %s12, 0
    %p161 = por %p159, %p160
    %p162 = scmp.ne.s32.totalorder %s154, %s156
    %p163 = scmp.eq.s32.totalorder %s17, 1
    %p164 = por %p162, %p163
    %p165 = scmp.ne.s32.totalorder %s156, %s157
    %p166 = scmp.eq.s32.totalorder %s17, 0
    %p167 = por %p165, %p166
    %p168 = scmp.ne.s32.totalorder %s156, %s157
    %p169 = scmp.eq.s32.totalorder %s18, 1
    %p170 = por %p168, %p169
    %p172 = scmp.ne.s32.totalorder %s157, %s171
    %p173 = scmp.eq.s32.totalorder %s18, 0
    %p174 = por %p172, %p173
    %s175 = ssub.s32 %s19, %s31
    %p176 = scmp.eq.s32.totalorder %s175, 0
    %s178 = sadd.s32 %s177, 1
    %s179 = scalar_select %p176, %s177, %s178
    %p182 = pneg %p176
    %p183 = scmp.eq.s32.totalorder %s12, 1
    %p184 = por %p182, %p183
    %p185 = scmp.ne.s32.totalorder %s177, %s180
    %p186 = scmp.eq.s32.totalorder %s12, 0
    %p187 = por %p185, %p186
    %p188 = scmp.ne.s32.totalorder %s177, %s180
    %p189 = scmp.eq.s32.totalorder %s17, 1
    %p190 = por %p188, %p189
    %p191 = scmp.ne.s32.totalorder %s180, %s181
    %p192 = scmp.eq.s32.totalorder %s17, 0
    %p193 = por %p191, %p192
    %p194 = scmp.ne.s32.totalorder %s180, %s181
    %p195 = scmp.eq.s32.totalorder %s18, 1
    %p196 = por %p194, %p195
    %p198 = scmp.ne.s32.totalorder %s181, %s197
    %p199 = scmp.eq.s32.totalorder %s18, 0
    %p200 = por %p198, %p199
    %p201 = scmp.le.s32.totalorder 1, %s12
    %p202 = scmp.lt.s32.totalorder %s12, 3
    %p203 = pnand %p201, %p202
    %p204 = pneg %p203
    // Predicated region
    $region9: #{encoder_only_transformer.13} parent=5 // pred_check
      _
    $region10: #{encoder_only_transformer.13} parent=5 // pred_check_branch
      %206 = sbr.rel (%p203) target = $region12
    $region11: #{encoder_only_transformer.13} parent=5 // pred_region
      %s207 = ssub.s32 %s12, 1
      // Predicated region
      $region13: #{encoder_only_transformer.13} parent=11 // pred_check
        %p208 = pneg %p78
      $region14: #{encoder_only_transformer.13} parent=11 // pred_check_branch
        %210 = sbr.rel (%p208) target = $region16
      $region15: #{encoder_only_transformer.13} parent=11 // pred_region
        %s211 = smul.u32 4, %s22
        %p212 = scmp.lt.s32.totalorder %s211, 3
        %s213 = scalar_select %p212, %s211, 3
        %s214 = smul.addr %s213, 4
        %s215 = scalar_lea.vmem %s1, %s214
        %s216 = smul.u32 4, %s22
      $region16: #{encoder_only_transformer.13} parent=11 // pred_fallthru
        _
      // Predicated region
      $region17: #{encoder_only_transformer.13} parent=11 // pred_check
        %p217 = pneg %p99
      $region18: #{encoder_only_transformer.13} parent=11 // pred_check_branch
        %219 = sbr.rel (%p217) target = $region20
      $region19: #{encoder_only_transformer.13} parent=11 // pred_region
        _
      $region20: #{encoder_only_transformer.13} parent=11 // pred_fallthru
        _
      // Predicated region
      $region21: #{encoder_only_transformer.13} parent=11 // pred_check
        %p220 = pneg %p146
      $region22: #{encoder_only_transformer.13} parent=11 // pred_check_branch
        %222 = sbr.rel (%p220) target = $region24
      $region23: #{encoder_only_transformer.13} parent=11 // pred_region
        _
      $region24: #{encoder_only_transformer.13} parent=11 // pred_fallthru
        _
      // Predicated region
      $region25: #{encoder_only_transformer.13} parent=11 // pred_check
        %p223 = pneg %p167
      $region26: #{encoder_only_transformer.13} parent=11 // pred_check_branch
        %225 = sbr.rel (%p223) target = $region28
      $region27: #{encoder_only_transformer.13} parent=11 // pred_region
        _
      $region28: #{encoder_only_transformer.13} parent=11 // pred_fallthru
        _
    $region12: #{encoder_only_transformer.13} parent=5 // pred_fallthru
      _
    %p226 = scmp.lt.s32.totalorder %s12, 2
    // Predicated region
    $region29: #{encoder_only_transformer.13} parent=5 // pred_check
      %p227 = pneg %p226
    $region30: #{encoder_only_transformer.13} parent=5 // pred_check_branch
      %229 = sbr.rel (%p227) target = $region32
    $region31: #{encoder_only_transformer.13} parent=5 // pred_region
      // Predicated region
      $region33: #{encoder_only_transformer.13} parent=31 // pred_check
        %p230 = pneg %p46
      $region34: #{encoder_only_transformer.13} parent=31 // pred_check_branch
        %232 = sbr.rel (%p230) target = $region36
      $region35: #{encoder_only_transformer.13} parent=31 // pred_region
        %p233 = scmp.lt.s32.totalorder %s19, 1
        %s234 = scalar_select %p233, %s19, 1
        %p235 = scmp.lt.s32.totalorder %s20, 0
        %s236 = scalar_select %p235, %s20, 0
        %s237 = sadd.s32 %s236, %s234
        %s238 = smul.addr %s237, 4
        %s239 = scalar_lea.vmem %s0, %s238
      $region36: #{encoder_only_transformer.13} parent=31 // pred_fallthru
        _
      // Predicated region
      $region37: #{encoder_only_transformer.13} parent=31 // pred_check
        %p240 = pneg %p119
      $region38: #{encoder_only_transformer.13} parent=31 // pred_check_branch
        %242 = sbr.rel (%p240) target = $region40
      $region39: #{encoder_only_transformer.13} parent=31 // pred_region
        %p243 = scmp.lt.s32.totalorder %s19, 1
        %s244 = scalar_select %p243, %s19, 1
        %s245 = smul.addr %s244, 4
        %s246 = scalar_lea.vmem %s3, %s245
      $region40: #{encoder_only_transformer.13} parent=31 // pred_fallthru
        _
    $region32: #{encoder_only_transformer.13} parent=5 // pred_fallthru
      _
    %p247 = scmp.le.s32.totalorder 1, %s12
    %p248 = scmp.lt.s32.totalorder %s12, 3
    %p249 = pnand %p247, %p248
    %p250 = pneg %p249
    // Predicated region
    $region41: #{encoder_only_transformer.13} parent=5 // pred_check
      _
    $region42: #{encoder_only_transformer.13} parent=5 // pred_check_branch
      %252 = sbr.rel (%p249) target = $region44
    $region43: #{encoder_only_transformer.13} parent=5 // pred_region
      %s253 = ssub.s32 %s12, 1
      %p254 = scmp.lt.s32.totalorder %s21, 1
      %s255 = scalar_select %p254, %s21, 1
      %p256 = scmp.lt.s32.totalorder %s22, 0
      %s257 = scalar_select %p256, %s22, 0
      %s258 = sadd.s32 %s257, %s255
      %s259 = smul.addr %s258, 4
      %s260 = scalar_lea.vmem %s0, %s259
      %p261 = pneg %p52
      %p262 = pneg %p49
      %s263 = smul.u32 4, %s22
      %p264 = scmp.lt.s32.totalorder %s263, 3
      %s265 = scalar_select %p264, %s263, 3
      %s266 = smul.addr %s265, 4
      %s267 = scalar_lea.vmem %s1, %s266
      %p268 = pneg %p78
      %p269 = pneg %p75
      %p270 = pneg %p99
      %p271 = pneg %p96
      %p272 = scmp.lt.s32.totalorder %s21, 1
      %s273 = scalar_select %p272, %s21, 1
      %s274 = smul.addr %s273, 4
      %s275 = scalar_lea.vmem %s3, %s274
      %p276 = pneg %p125
      %p277 = pneg %p122
      %p278 = pneg %p146
      %p279 = pneg %p143
      %p280 = pneg %p167
      %p281 = pneg %p164
      %p282 = pneg %p193
      %p283 = pneg %p190
      %p284 = scmp.lt.s32.totalorder %s21, 1
      %s285 = scalar_select %p284, %s21, 1
      %s286 = smul.addr %s285, 4
      %s287 = scalar_lea.vmem %s6, %s286
      %p288 = scmp.lt.s32.totalorder %s21, 1
      %s289 = scalar_select %p288, %s21, 1
      %p290 = scmp.lt.s32.totalorder %s22, 0
      %s291 = scalar_select %p290, %s22, 0
      %s292 = sadd.s32 %s291, %s289
      %s293 = smul.addr %s292, 4
      %s294 = scalar_lea.vmem %s0, %s293
      %s295 = smul.u32 4, %s22
      %p296 = scmp.lt.s32.totalorder %s295, 3
      %s297 = scalar_select %p296, %s295, 3
      %s298 = smul.addr %s297, 4
      %s299 = scalar_lea.vmem %s1, %s298
      %s300 = smul.u32 4, %s22
      %p301 = scmp.lt.s32.totalorder %s21, 1
      %s302 = scalar_select %p301, %s21, 1
      %s303 = smul.addr %s302, 4
      %s304 = scalar_lea.vmem %s3, %s303
      %p305 = scmp.lt.s32.totalorder %s21, 1
      %s306 = scalar_select %p305, %s21, 1
      %s307 = smul.addr %s306, 4
      %s308 = scalar_lea.vmem %s6, %s307
      %p310 = scmp.eq.s32.totalorder %s22, 0
      // Predicated region
      $region45: #{encoder_only_transformer.13} parent=43 // pred_check
        %p311 = pneg %p310
      $region46: #{encoder_only_transformer.13} parent=43 // pred_check_branch
        %313 = sbr.rel (%p311) target = $region48
      $region47: #{encoder_only_transformer.13} parent=43 // pred_region
        %vm314 = vcmask 261120
        %315 = vst.msk [vmem:[#allocation2] sm:$0xff] %vm314, 0.0
      $region48: #{encoder_only_transformer.13} parent=43 // pred_fallthru
        _
      %v316 = vld [vmem:[%s294] sm:$0xf]
      %v317 = vld [vmem:[#allocation2] sm:$0xff]
      %v318 = vld [vmem:[%s299] sm:$0xf]
      %v319 = vld [vmem:[%s299 + $0x4] sm:$0xf]
      %v320 = vld [vmem:[%s299 + $0x8] sm:$0xf]
      %v321 = vld [vmem:[%s299 + $0xc] sm:$0xf]
      %v326 = vunpack.c.l.b16 %v318
      %v327 = vunpack.c.l.b16 %v319
      %v328 = vunpack.c.l.b16 %v320
      %v329 = vunpack.c.l.b16 %v321
      %v330 = vpack.c.b16 %v327, %v326
      %v331 = vpack.c.b16 %v329, %v328
      %vm334 = vcmask 261120
      %v336 = vsel %vm334, %v316, 0
      %338 = vmatprep.subr.bf16.mxu0 0
      %339 = vmatpush1.bf16.msra.mxu0 %v330
      %340 = vmatprep.subr.bf16.mxu0 0
      %341 = vmatpush1.bf16.msra.mxu0 %v331
      %342 = vmatprep.subr.bf16.mxu0 0
      %343 = vmatpush1.bf16.msra.mxu0 0
      %344 = vmatprep.subr.bf16.mxu0 0
      %345 = vmatpush1.bf16.msra.mxu0 0
      %346 = vmatprep.subr.bf16.mxu0 0
      %347 = vmatpush1.bf16.msra.mxu0 0
      %348 = vmatprep.subr.bf16.mxu0 0
      %349 = vmatpush1.bf16.msra.mxu0 0
      %350 = vmatprep.subr.bf16.mxu0 0
      %351 = vmatpush1.bf16.msra.mxu0 0
      %352 = vmatprep.subr.bf16.mxu0 0
      %353 = vmatpush1.bf16.msra.mxu0 0
      %354 = vmatprep.subr.bf16.mxu0 0
      %355 = vmatpush1.bf16.msra.mxu0 0
      %356 = vmatprep.subr.bf16.mxu0 0
      %357 = vmatpush1.bf16.msra.mxu0 0
      %358 = vmatprep.subr.bf16.mxu0 0
      %359 = vmatpush1.bf16.msra.mxu0 0
      %360 = vmatprep.subr.bf16.mxu0 0
      %361 = vmatpush1.bf16.msra.mxu0 0
      %362 = vmatprep.subr.bf16.mxu0 0
      %363 = vmatpush1.bf16.msra.mxu0 0
      %364 = vmatprep.subr.bf16.mxu0 0
      %365 = vmatpush1.bf16.msra.mxu0 0
      %366 = vmatprep.subr.bf16.mxu0 0
      %367 = vmatpush1.bf16.msra.mxu0 0
      %368 = vmatprep.subr.bf16.mxu0 0
      %369 = vmatpush1.bf16.msra.mxu0 0
      %370 = vmatprep.mubr.bf16.mxu0 0
      %371 = vmatmul.mubr.bf16.gmra.mrb[0].mxu0 %v336
      %v372 = vpop.f32.mrb[0].mxu0
      %v373 = vadd.f32 0.0, %v372
      %v374 = vpop.f32.mrb[0].mxu0
      %v375 = vpop.f32.mrb[0].mxu0
      %v376 = vpop.f32.mrb[0].mxu0
      %377 = vdwg.mxu0
      %v378 = vadd.f32 %v317, %v373
      %379 = vst.msk [vmem:[#allocation2] sm:$0xff] %vm334, %v378
      // Predicated region
      $region49: #{encoder_only_transformer.13} parent=43 // pred_check
        %p380 = pneg %p310
      $region50: #{encoder_only_transformer.13} parent=43 // pred_check_branch
        %382 = sbr.rel (%p380) target = $region52
      $region51: #{encoder_only_transformer.13} parent=43 // pred_region
        %v383 = vld [vmem:[#allocation2] sm:$0xff]
        %v384 = vld [vmem:[%s2] sm:$0x1]
        %v386 = vlaneseq
        %v387 = vshrl.u32 %v386, 7
        %v388 = vsub.s32 0, %v387
        %v389 = vrot.slane %v384, %v388
        %v391 = vadd.f32 %v383, %v389
        %v392 = vld [vmem:[%s304] sm:$0xf]
        %v393 = vunpack.c.l.bf16 %v392
        %v394 = vadd.f32 %v391, %v393
        %v395 = vsel %vm334, %v394, 0.0
        %396 = vadd.xlane.f32.xlu0 %v395
        %v397 = vpop.xlane.xlu0 %396
        %v398 = vrcp.pop 32.0
        %v399 = vmul.f32 %v397, %v398
        %v400 = vsub.f32 %v394, %v399
        %v401 = vmul.f32 %v400, %v400
        %v402 = vsel %vm334, %v401, 0.0
        %403 = vadd.xlane.f32.xlu0 %v402
        %v404 = vpop.xlane.xlu0 %403
        %v405 = vmul.f32 %v404, %v398
        %v406 = vadd.f32 %v405, 1e-05
        %v407 = vrsqrt.pop %v406
        %v408 = vmul.f32 %v400, %v407
        %v409 = vld [vmem:[%s4] sm:$0x1]
        %v411 = vlaneseq
        %v412 = vshrl.u32 %v411, 7
        %v413 = vsub.s32 0, %v412
        %v414 = vrot.slane %v409, %v413
        %v416 = vmul.f32 %v408, %v414
        %v417 = vld [vmem:[%s5] sm:$0x1]
        %v419 = vlaneseq
        %v420 = vshrl.u32 %v419, 7
        %v421 = vsub.s32 0, %v420
        %v422 = vrot.slane %v417, %v421
        %v424 = vadd.f32 %v416, %v422
        %v425 = vpack.c.bf16 %v424, %v424
        %vm426 = vcmask 257024
        %427 = vst.msk [vmem:[%s308] sm:$0xf] %vm426, %v425
      $region52: #{encoder_only_transformer.13} parent=43 // pred_fallthru
        _
      %p428 = scmp.lt.s32.totalorder %s21, 1
      %s429 = scalar_select %p428, %s21, 1
      %s430 = smul.addr %s429, 4
      %s431 = scalar_lea.vmem %s6, %s430
      // Predicated region
      $region53: #{encoder_only_transformer.13} parent=43 // pred_check
        %p432 = pneg %p190
      $region54: #{encoder_only_transformer.13} parent=43 // pred_check_branch
        %434 = sbr.rel (%p432) target = $region56
      $region55: #{encoder_only_transformer.13} parent=43 // pred_region
        _
      $region56: #{encoder_only_transformer.13} parent=43 // pred_fallthru
        _
    $region44: #{encoder_only_transformer.13} parent=5 // pred_fallthru
      _
    %p435 = scmp.le.s32.totalorder 2, %s12
    // Predicated region
    $region57: #{encoder_only_transformer.13} parent=5 // pred_check
      %p436 = pneg %p435
    $region58: #{encoder_only_transformer.13} parent=5 // pred_check_branch
      %438 = sbr.rel (%p436) target = $region60
    $region59: #{encoder_only_transformer.13} parent=5 // pred_region
      %s439 = ssub.s32 %s12, 2
      // Predicated region
      $region61: #{encoder_only_transformer.13} parent=59 // pred_check
        %p440 = pneg %p196
      $region62: #{encoder_only_transformer.13} parent=59 // pred_check_branch
        %442 = sbr.rel (%p440) target = $region64
      $region63: #{encoder_only_transformer.13} parent=59 // pred_region
        %p443 = scmp.lt.s32.totalorder %s23, 1
        %s444 = scalar_select %p443, %s23, 1
        %s445 = smul.addr %s444, 4
        %s446 = scalar_lea.vmem %s6, %s445
      $region64: #{encoder_only_transformer.13} parent=59 // pred_fallthru
        _
    $region60: #{encoder_only_transformer.13} parent=5 // pred_fallthru
      _
  $region6: #{encoder_only_transformer.13} parent=0 // loop_footer
    %s16 = sadd.s32 1, %s12
  $region7: #{encoder_only_transformer.13} parent=0 // loop_footer_branch
    %11 = sbr.rel target = $region3
  $region8: #{encoder_only_transformer.13} parent=0 // loop_exit
    _

// kernel: encoder_only_transformer.14
$region0: #{encoder_only_transformer.14}
  #allocation0 [shape = 'u32[]', space=smem, size = 0x4, offset = 0x4, fixed_abs, tag = 'smem constant byte address 0x4 - core index']
  #allocation1 [shape = 'u32[144,128]{1,0:T(1,128)}', space=vmem, size = 0x12000, scoped, tag = 'internal scratch']
  #allocation2 [shape = 'f32[8,64]{1,0:T(8,128)}', space=vmem, size = 0x1000, scoped, tag = 'scratch operand']
  %s0 = inlined_call_operand.vmem [shape: bf16[16,32], index: 0, kind: input, shape index: {}]
  %s1 = inlined_call_operand.vmem [shape: bf16[32,64], index: 1, kind: input, shape index: {}]
  %s2 = inlined_call_operand.vmem [shape: f32[1,64], index: 2, kind: input, shape index: {}]
  %s3 = inlined_call_operand.vmem [shape: bf16[16,64], index: 3, kind: output, shape index: {}]
  %s4 = sld [smem:[#allocation0]]
  $region53: #{encoder_only_transformer.14} parent=0
    _
  %s6 = ssub.s32 1, %s4
  %s7 = scalar_select 0, %s6, %s4
  loop: start=0, step=1, limit=4
  $region2: #{encoder_only_transformer.14} parent=0 // loop_pre_header
    _
  $region3: #{encoder_only_transformer.14} parent=0 // loop_header
    %s9 = sphi 0, %s13
    %p10 = scmp.ge.s32.totalorder %s9, 4
    %s16 = sphi 0, %s35
    %s17 = sphi 0, %s31
    %s18 = sphi 0, %s27
    %s19 = sphi 0, %s16
    %s20 = sphi 0, %s17
    %s21 = sphi 0, %s18
    %s22 = sphi 0, %s19
    %s23 = sphi 0, %s20
    %s24 = sphi 0, %s21
    %s40 = sphi 0, %s42
    %s43 = sphi 0, %s40
    %s44 = sphi 0, %s43
    %s60 = sphi 0, %s44
    %s68 = sphi 0, %s70
    %s71 = sphi 0, %s68
    %s72 = sphi 0, %s71
    %s88 = sphi 0, %s72
    %s94 = sphi 0, %s96
    %s97 = sphi 0, %s94
    %s98 = sphi 0, %s97
    %s114 = sphi 0, %s98
    %s122 = sphi 0, %s124
    %s125 = sphi 0, %s122
    %s126 = sphi 0, %s125
    %s142 = sphi 0, %s126
  $region4: #{encoder_only_transformer.14} parent=0 // loop_header_branch
    %12 = sbr.rel (%p10) target = $region8
  $region5: #{encoder_only_transformer.14} parent=0 // loop_body
    %s14 = ssub.s32 %s9, 1
    %s15 = ssub.s32 %s9, 2
    %s25 = sadd.s32 1, %s18
    %p26 = scmp.ge.s32.totalorder %s25, 1
    %s27 = scalar_select %p26, 0, %s25
    %s28 = sadd.s32 1, %s17
    %s29 = scalar_select %p26, %s28, %s17
    %p30 = scmp.ge.s32.totalorder %s29, 1
    %s31 = scalar_select %p30, 0, %s29
    %s32 = sadd.s32 1, %s16
    %s33 = scalar_select %p30, %s32, %s16
    %p34 = scmp.ge.s32.totalorder %s33, 2
    %s35 = scalar_select %p34, 0, %s33
    %s36 = ssub.s32 %s16, %s35
    %s37 = ssub.s32 %s18, %s27
    %s38 = sor.u32 %s36, %s37
    %p39 = scmp.eq.s32.totalorder %s38, 0
    %s41 = sadd.s32 %s40, 1
    %s42 = scalar_select %p39, %s40, %s41
    %p45 = pneg %p39
    %p46 = scmp.eq.s32.totalorder %s9, 1
    %p47 = por %p45, %p46
    %p48 = scmp.ne.s32.totalorder %s40, %s43
    %p49 = scmp.eq.s32.totalorder %s9, 0
    %p50 = por %p48, %p49
    %p51 = scmp.ne.s32.totalorder %s40, %s43
    %p52 = scmp.eq.s32.totalorder %s14, 1
    %p53 = por %p51, %p52
    %p54 = scmp.ne.s32.totalorder %s43, %s44
    %p55 = scmp.eq.s32.totalorder %s14, 0
    %p56 = por %p54, %p55
    %p57 = scmp.ne.s32.totalorder %s43, %s44
    %p58 = scmp.eq.s32.totalorder %s15, 1
    %p59 = por %p57, %p58
    %p61 = scmp.ne.s32.totalorder %s44, %s60
    %p62 = scmp.eq.s32.totalorder %s15, 0
    %p63 = por %p61, %p62
    %s64 = ssub.s32 %s18, %s27
    %s65 = ssub.s32 %s17, %s31
    %s66 = sor.u32 %s64, %s65
    %p67 = scmp.eq.s32.totalorder %s66, 0
    %s69 = sadd.s32 %s68, 1
    %s70 = scalar_select %p67, %s68, %s69
    %p73 = pneg %p67
    %p74 = scmp.eq.s32.totalorder %s9, 1
    %p75 = por %p73, %p74
    %p76 = scmp.ne.s32.totalorder %s68, %s71
    %p77 = scmp.eq.s32.totalorder %s9, 0
    %p78 = por %p76, %p77
    %p79 = scmp.ne.s32.totalorder %s68, %s71
    %p80 = scmp.eq.s32.totalorder %s14, 1
    %p81 = por %p79, %p80
    %p82 = scmp.ne.s32.totalorder %s71, %s72
    %p83 = scmp.eq.s32.totalorder %s14, 0
    %p84 = por %p82, %p83
    %p85 = scmp.ne.s32.totalorder %s71, %s72
    %p86 = scmp.eq.s32.totalorder %s15, 1
    %p87 = por %p85, %p86
    %p89 = scmp.ne.s32.totalorder %s72, %s88
    %p90 = scmp.eq.s32.totalorder %s15, 0
    %p91 = por %p89, %p90
    %s92 = ssub.s32 %s17, %s31
    %p93 = scmp.eq.s32.totalorder %s92, 0
    %s95 = sadd.s32 %s94, 1
    %s96 = scalar_select %p93, %s94, %s95
    %p99 = pneg %p93
    %p100 = scmp.eq.s32.totalorder %s9, 1
    %p101 = por %p99, %p100
    %p102 = scmp.ne.s32.totalorder %s94, %s97
    %p103 = scmp.eq.s32.totalorder %s9, 0
    %p104 = por %p102, %p103
    %p105 = scmp.ne.s32.totalorder %s94, %s97
    %p106 = scmp.eq.s32.totalorder %s14, 1
    %p107 = por %p105, %p106
    %p108 = scmp.ne.s32.totalorder %s97, %s98
    %p109 = scmp.eq.s32.totalorder %s14, 0
    %p110 = por %p108, %p109
    %p111 = scmp.ne.s32.totalorder %s97, %s98
    %p112 = scmp.eq.s32.totalorder %s15, 1
    %p113 = por %p111, %p112
    %p115 = scmp.ne.s32.totalorder %s98, %s114
    %p116 = scmp.eq.s32.totalorder %s15, 0
    %p117 = por %p115, %p116
    %s118 = ssub.s32 %s16, %s35
    %s119 = ssub.s32 %s17, %s31
    %s120 = sor.u32 %s118, %s119
    %p121 = scmp.eq.s32.totalorder %s120, 0
    %s123 = sadd.s32 %s122, 1
    %s124 = scalar_select %p121, %s122, %s123
    %p127 = pneg %p121
    %p128 = scmp.eq.s32.totalorder %s9, 1
    %p129 = por %p127, %p128
    %p130 = scmp.ne.s32.totalorder %s122, %s125
    %p131 = scmp.eq.s32.totalorder %s9, 0
    %p132 = por %p130, %p131
    %p133 = scmp.ne.s32.totalorder %s122, %s125
    %p134 = scmp.eq.s32.totalorder %s14, 1
    %p135 = por %p133, %p134
    %p136 = scmp.ne.s32.totalorder %s125, %s126
    %p137 = scmp.eq.s32.totalorder %s14, 0
    %p138 = por %p136, %p137
    %p139 = scmp.ne.s32.totalorder %s125, %s126
    %p140 = scmp.eq.s32.totalorder %s15, 1
    %p141 = por %p139, %p140
    %p143 = scmp.ne.s32.totalorder %s126, %s142
    %p144 = scmp.eq.s32.totalorder %s15, 0
    %p145 = por %p143, %p144
    %p146 = scmp.le.s32.totalorder 1, %s9
    %p147 = scmp.lt.s32.totalorder %s9, 3
    %p148 = pnand %p146, %p147
    %p149 = pneg %p148
    // Predicated region
    $region9: #{encoder_only_transformer.14} parent=5 // pred_check
      _
    $region10: #{encoder_only_transformer.14} parent=5 // pred_check_branch
      %151 = sbr.rel (%p148) target = $region12
    $region11: #{encoder_only_transformer.14} parent=5 // pred_region
      %s152 = ssub.s32 %s9, 1
      // Predicated region
      $region13: #{encoder_only_transformer.14} parent=11 // pred_check
        %p153 = pneg %p84
      $region14: #{encoder_only_transformer.14} parent=11 // pred_check_branch
        %155 = sbr.rel (%p153) target = $region16
      $region15: #{encoder_only_transformer.14} parent=11 // pred_region
        %s156 = smul.u32 4, %s21
        %p157 = scmp.lt.s32.totalorder %s156, 3
        %s158 = scalar_select %p157, %s156, 3
        %p159 = scmp.lt.s32.totalorder %s20, 0
        %s160 = scalar_select %p159, %s20, 0
        %s161 = sadd.s32 %s160, %s158
        %s162 = smul.addr %s161, 4
        %s163 = scalar_lea.vmem %s1, %s162
        %s164 = smul.u32 4, %s21
      $region16: #{encoder_only_transformer.14} parent=11 // pred_fallthru
        _
      // Predicated region
      $region17: #{encoder_only_transformer.14} parent=11 // pred_check
        %p165 = pneg %p110
      $region18: #{encoder_only_transformer.14} parent=11 // pred_check_branch
        %167 = sbr.rel (%p165) target = $region20
      $region19: #{encoder_only_transformer.14} parent=11 // pred_region
        %p168 = scmp.lt.s32.totalorder %s20, 0
        %s169 = scalar_select %p168, %s20, 0
        %s170 = scalar_lea.vmem %s2, %s169
      $region20: #{encoder_only_transformer.14} parent=11 // pred_fallthru
        _
    $region12: #{encoder_only_transformer.14} parent=5 // pred_fallthru
      _
    %p171 = scmp.lt.s32.totalorder %s9, 2
    // Predicated region
    $region21: #{encoder_only_transformer.14} parent=5 // pred_check
      %p172 = pneg %p171
    $region22: #{encoder_only_transformer.14} parent=5 // pred_check_branch
      %174 = sbr.rel (%p172) target = $region24
    $region23: #{encoder_only_transformer.14} parent=5 // pred_region
      // Predicated region
      $region25: #{encoder_only_transformer.14} parent=23 // pred_check
        %p175 = pneg %p50
      $region26: #{encoder_only_transformer.14} parent=23 // pred_check_branch
        %177 = sbr.rel (%p175) target = $region28
      $region27: #{encoder_only_transformer.14} parent=23 // pred_region
        %p178 = scmp.lt.s32.totalorder %s16, 1
        %s179 = scalar_select %p178, %s16, 1
        %p180 = scmp.lt.s32.totalorder %s18, 0
        %s181 = scalar_select %p180, %s18, 0
        %s182 = sadd.s32 %s181, %s179
        %s183 = smul.addr %s182, 4
        %s184 = scalar_lea.vmem %s0, %s183
      $region28: #{encoder_only_transformer.14} parent=23 // pred_fallthru
        _
    $region24: #{encoder_only_transformer.14} parent=5 // pred_fallthru
      _
    %p185 = scmp.le.s32.totalorder 1, %s9
    %p186 = scmp.lt.s32.totalorder %s9, 3
    %p187 = pnand %p185, %p186
    %p188 = pneg %p187
    // Predicated region
    $region29: #{encoder_only_transformer.14} parent=5 // pred_check
      _
    $region30: #{encoder_only_transformer.14} parent=5 // pred_check_branch
      %190 = sbr.rel (%p187) target = $region32
    $region31: #{encoder_only_transformer.14} parent=5 // pred_region
      %s191 = ssub.s32 %s9, 1
      %p192 = scmp.lt.s32.totalorder %s19, 1
      %s193 = scalar_select %p192, %s19, 1
      %p194 = scmp.lt.s32.totalorder %s21, 0
      %s195 = scalar_select %p194, %s21, 0
      %s196 = sadd.s32 %s195, %s193
      %s197 = smul.addr %s196, 4
      %s198 = scalar_lea.vmem %s0, %s197
      %p199 = pneg %p56
      %p200 = pneg %p53
      %s201 = smul.u32 4, %s21
      %p202 = scmp.lt.s32.totalorder %s201, 3
      %s203 = scalar_select %p202, %s201, 3
      %p204 = scmp.lt.s32.totalorder %s20, 0
      %s205 = scalar_select %p204, %s20, 0
      %s206 = sadd.s32 %s205, %s203
      %s207 = smul.addr %s206, 4
      %s208 = scalar_lea.vmem %s1, %s207
      %p209 = pneg %p84
      %p210 = pneg %p81
      %p211 = scmp.lt.s32.totalorder %s20, 0
      %s212 = scalar_select %p211, %s20, 0
      %s213 = scalar_lea.vmem %s2, %s212
      %p214 = pneg %p110
      %p215 = pneg %p107
      %p216 = pneg %p138
      %p217 = pneg %p135
      %p218 = scmp.lt.s32.totalorder %s19, 1
      %s219 = scalar_select %p218, %s19, 1
      %p220 = scmp.lt.s32.totalorder %s20, 0
      %s221 = scalar_select %p220, %s20, 0
      %s222 = sadd.s32 %s221, %s219
      %s223 = smul.addr %s222, 4
      %s224 = scalar_lea.vmem %s3, %s223
      %p225 = scmp.lt.s32.totalorder %s19, 1
      %s226 = scalar_select %p225, %s19, 1
      %p227 = scmp.lt.s32.totalorder %s21, 0
      %s228 = scalar_select %p227, %s21, 0
      %s229 = sadd.s32 %s228, %s226
      %s230 = smul.addr %s229, 4
      %s231 = scalar_lea.vmem %s0, %s230
      %s232 = smul.u32 4, %s21
      %p233 = scmp.lt.s32.totalorder %s232, 3
      %s234 = scalar_select %p233, %s232, 3
      %p235 = scmp.lt.s32.totalorder %s20, 0
      %s236 = scalar_select %p235, %s20, 0
      %s237 = sadd.s32 %s236, %s234
      %s238 = smul.addr %s237, 4
      %s239 = scalar_lea.vmem %s1, %s238
      %s240 = smul.u32 4, %s21
      %p241 = scmp.lt.s32.totalorder %s20, 0
      %s242 = scalar_select %p241, %s20, 0
      %s243 = scalar_lea.vmem %s2, %s242
      %p244 = scmp.lt.s32.totalorder %s19, 1
      %s245 = scalar_select %p244, %s19, 1
      %p246 = scmp.lt.s32.totalorder %s20, 0
      %s247 = scalar_select %p246, %s20, 0
      %s248 = sadd.s32 %s247, %s245
      %s249 = smul.addr %s248, 4
      %s250 = scalar_lea.vmem %s3, %s249
      %p252 = scmp.eq.s32.totalorder %s21, 0
      // Predicated region
      $region33: #{encoder_only_transformer.14} parent=31 // pred_check
        %p253 = pneg %p252
      $region34: #{encoder_only_transformer.14} parent=31 // pred_check_branch
        %255 = sbr.rel (%p253) target = $region36
      $region35: #{encoder_only_transformer.14} parent=31 // pred_region
        %vm256 = vcmask 523264
        %257 = vst.msk [vmem:[#allocation2] sm:$0xff] %vm256, 0.0
      $region36: #{encoder_only_transformer.14} parent=31 // pred_fallthru
        _
      %v258 = vld [vmem:[%s231] sm:$0xf]
      %v259 = vld [vmem:[#allocation2] sm:$0xff]
      %v260 = vld [vmem:[%s239] sm:$0xf]
      %v261 = vld [vmem:[%s239 + $0x4] sm:$0xf]
      %v262 = vld [vmem:[%s239 + $0x8] sm:$0xf]
      %v263 = vld [vmem:[%s239 + $0xc] sm:$0xf]
      %v268 = vunpack.c.l.b16 %v260
      %v269 = vunpack.c.l.b16 %v261
      %v270 = vunpack.c.l.b16 %v262
      %v271 = vunpack.c.l.b16 %v263
      %v272 = vpack.c.b16 %v269, %v268
      %v273 = vpack.c.b16 %v271, %v270
      %vm276 = vcmask 261120
      %v278 = vsel %vm276, %v258, 0
      %280 = vmatprep.subr.bf16.mxu0 0
      %281 = vmatpush1.bf16.msra.mxu0 %v272
      %282 = vmatprep.subr.bf16.mxu0 0
      %283 = vmatpush1.bf16.msra.mxu0 %v273
      %284 = vmatprep.subr.bf16.mxu0 0
      %285 = vmatpush1.bf16.msra.mxu0 0
      %286 = vmatprep.subr.bf16.mxu0 0
      %287 = vmatpush1.bf16.msra.mxu0 0
      %288 = vmatprep.subr.bf16.mxu0 0
      %289 = vmatpush1.bf16.msra.mxu0 0
      %290 = vmatprep.subr.bf16.mxu0 0
      %291 = vmatpush1.bf16.msra.mxu0 0
      %292 = vmatprep.subr.bf16.mxu0 0
      %293 = vmatpush1.bf16.msra.mxu0 0
      %294 = vmatprep.subr.bf16.mxu0 0
      %295 = vmatpush1.bf16.msra.mxu0 0
      %296 = vmatprep.subr.bf16.mxu0 0
      %297 = vmatpush1.bf16.msra.mxu0 0
      %298 = vmatprep.subr.bf16.mxu0 0
      %299 = vmatpush1.bf16.msra.mxu0 0
      %300 = vmatprep.subr.bf16.mxu0 0
      %301 = vmatpush1.bf16.msra.mxu0 0
      %302 = vmatprep.subr.bf16.mxu0 0
      %303 = vmatpush1.bf16.msra.mxu0 0
      %304 = vmatprep.subr.bf16.mxu0 0
      %305 = vmatpush1.bf16.msra.mxu0 0
      %306 = vmatprep.subr.bf16.mxu0 0
      %307 = vmatpush1.bf16.msra.mxu0 0
      %308 = vmatprep.subr.bf16.mxu0 0
      %309 = vmatpush1.bf16.msra.mxu0 0
      %310 = vmatprep.subr.bf16.mxu0 0
      %311 = vmatpush1.bf16.msra.mxu0 0
      %312 = vmatprep.mubr.bf16.mxu0 0
      %313 = vmatmul.mubr.bf16.gmra.mrb[0].mxu0 %v278
      %v314 = vpop.f32.mrb[0].mxu0
      %v315 = vadd.f32 0.0, %v314
      %v316 = vpop.f32.mrb[0].mxu0
      %v317 = vpop.f32.mrb[0].mxu0
      %v318 = vpop.f32.mrb[0].mxu0
      %319 = vdwg.mxu0
      %v320 = vadd.f32 %v259, %v315
      %vm321 = vcmask 523264
      %322 = vst.msk [vmem:[#allocation2] sm:$0xff] %vm321, %v320
      // Predicated region
      $region37: #{encoder_only_transformer.14} parent=31 // pred_check
        %p323 = pneg %p252
      $region38: #{encoder_only_transformer.14} parent=31 // pred_check_branch
        %325 = sbr.rel (%p323) target = $region40
      $region39: #{encoder_only_transformer.14} parent=31 // pred_region
        %v326 = vld [vmem:[#allocation2] sm:$0xff]
        %v327 = vld [vmem:[%s243] sm:$0x1]
        %v329 = vlaneseq
        %v330 = vshrl.u32 %v329, 7
        %v331 = vsub.s32 0, %v330
        %v332 = vrot.slane %v327, %v331
        %v334 = vadd.f32 %v326, %v332
        %v335 = vmax.f32 %v334, 0.0
        %v336 = vpack.c.bf16 %v335, %v335
        %vm337 = vcmask 519168
        %338 = vst.msk [vmem:[%s250] sm:$0xf] %vm337, %v336
      $region40: #{encoder_only_transformer.14} parent=31 // pred_fallthru
        _
      %p339 = scmp.lt.s32.totalorder %s19, 1
      %s340 = scalar_select %p339, %s19, 1
      %p341 = scmp.lt.s32.totalorder %s20, 0
      %s342 = scalar_select %p341, %s20, 0
      %s343 = sadd.s32 %s342, %s340
      %s344 = smul.addr %s343, 4
      %s345 = scalar_lea.vmem %s3, %s344
      // Predicated region
      $region41: #{encoder_only_transformer.14} parent=31 // pred_check
        %p346 = pneg %p135
      $region42: #{encoder_only_transformer.14} parent=31 // pred_check_branch
        %348 = sbr.rel (%p346) target = $region44
      $region43: #{encoder_only_transformer.14} parent=31 // pred_region
        _
      $region44: #{encoder_only_transformer.14} parent=31 // pred_fallthru
        _
    $region32: #{encoder_only_transformer.14} parent=5 // pred_fallthru
      _
    %p349 = scmp.le.s32.totalorder 2, %s9
    // Predicated region
    $region45: #{encoder_only_transformer.14} parent=5 // pred_check
      %p350 = pneg %p349
    $region46: #{encoder_only_transformer.14} parent=5 // pred_check_branch
      %352 = sbr.rel (%p350) target = $region48
    $region47: #{encoder_only_transformer.14} parent=5 // pred_region
      %s353 = ssub.s32 %s9, 2
      // Predicated region
      $region49: #{encoder_only_transformer.14} parent=47 // pred_check
        %p354 = pneg %p141
      $region50: #{encoder_only_transformer.14} parent=47 // pred_check_branch
        %356 = sbr.rel (%p354) target = $region52
      $region51: #{encoder_only_transformer.14} parent=47 // pred_region
        %p357 = scmp.lt.s32.totalorder %s22, 1
        %s358 = scalar_select %p357, %s22, 1
        %p359 = scmp.lt.s32.totalorder %s23, 0
        %s360 = scalar_select %p359, %s23, 0
        %s361 = sadd.s32 %s360, %s358
        %s362 = smul.addr %s361, 4
        %s363 = scalar_lea.vmem %s3, %s362
      $region52: #{encoder_only_transformer.14} parent=47 // pred_fallthru
        _
    $region48: #{encoder_only_transformer.14} parent=5 // pred_fallthru
      _
  $region6: #{encoder_only_transformer.14} parent=0 // loop_footer
    %s13 = sadd.s32 1, %s9
  $region7: #{encoder_only_transformer.14} parent=0 // loop_footer_branch
    %8 = sbr.rel target = $region3
  $region8: #{encoder_only_transformer.14} parent=0 // loop_exit
    _

// kernel: encoder_only_transformer.12
$region0: #{encoder_only_transformer.12}
  #allocation0 [shape = 'u32[]', space=smem, size = 0x4, offset = 0x4, fixed_abs, tag = 'smem constant byte address 0x4 - core index']
  #allocation1 [shape = 'u32[144,128]{1,0:T(1,128)}', space=vmem, size = 0x12000, scoped, tag = 'internal scratch']
  %s0 = inlined_call_operand.vmem [shape: bf16[2,8,96], index: 0, kind: input, shape index: {}]
  %s1 = inlined_call_operand.vmem [shape: bf16[2,8,32], index: 1, kind: output, shape index: {0}]
  %s2 = inlined_call_operand.hbm [shape: f32[2,4,8,8], index: 2, kind: output, shape index: {1}]
  %3 = xla_tuple %s1, %s2
  %s4 = sld [smem:[#allocation0]]
  $region45: #{encoder_only_transformer.12} parent=0
    _
  %s6 = ssub.s32 1, %s4
  %s7 = scalar_select 0, %s6, %s4
  $region1: #{encoder_only_transformer.12} parent=0
    #allocation2 [shape = 'u8[32768]{0}', space=vmem, size = 0x8000, scoped, tag = 'output window, operand 1']
    #allocation3 [shape = 's32[2]{0}', space=sflag, size = 0x8, scoped, tag = 'scoped memory for encoder_only_transformer.12']
    %8 = vsyncpa [#allocation3], 0
    %s9 = scalar_lea.sflag [#allocation3], 1
    %10 = vsyncpa %s9, 0
    loop: start=0, step=1, limit=4
    $region2: #{encoder_only_transformer.12} parent=1 // loop_pre_header
      _
    $region3: #{encoder_only_transformer.12} parent=1 // loop_header
      %s12 = sphi 0, %s16
      %p13 = scmp.ge.s32.totalorder %s12, 4
      %s19 = sphi 0, %s31
      %s20 = sphi 0, %s27
      %s21 = sphi 0, %s19
      %s22 = sphi 0, %s20
      %s23 = sphi 0, %s21
      %s24 = sphi 0, %s22
      %s34 = sphi 0, %s36
      %s37 = sphi 0, %s34
      %s38 = sphi 0, %s37
      %s54 = sphi 0, %s38
      %s62 = sphi 0, %s64
      %s65 = sphi 0, %s62
      %s66 = sphi 0, %s65
      %s82 = sphi 0, %s66
      %s90 = sphi 0, %s92
      %s93 = sphi 0, %s90
      %s94 = sphi 0, %s93
      %s110 = sphi 0, %s94
    $region4: #{encoder_only_transformer.12} parent=1 // loop_header_branch
      %15 = sbr.rel (%p13) target = $region8
    $region5: #{encoder_only_transformer.12} parent=1 // loop_body
      %s17 = ssub.s32 %s12, 1
      %s18 = ssub.s32 %s12, 2
      %s25 = sadd.s32 1, %s20
      %p26 = scmp.ge.s32.totalorder %s25, 1
      %s27 = scalar_select %p26, 0, %s25
      %s28 = sadd.s32 1, %s19
      %s29 = scalar_select %p26, %s28, %s19
      %p30 = scmp.ge.s32.totalorder %s29, 2
      %s31 = scalar_select %p30, 0, %s29
      %s32 = ssub.s32 %s19, %s31
      %p33 = scmp.eq.s32.totalorder %s32, 0
      %s35 = sadd.s32 %s34, 1
      %s36 = scalar_select %p33, %s34, %s35
      %p39 = pneg %p33
      %p40 = scmp.eq.s32.totalorder %s12, 1
      %p41 = por %p39, %p40
      %p42 = scmp.ne.s32.totalorder %s34, %s37
      %p43 = scmp.eq.s32.totalorder %s12, 0
      %p44 = por %p42, %p43
      %p45 = scmp.ne.s32.totalorder %s34, %s37
      %p46 = scmp.eq.s32.totalorder %s17, 1
      %p47 = por %p45, %p46
      %p48 = scmp.ne.s32.totalorder %s37, %s38
      %p49 = scmp.eq.s32.totalorder %s17, 0
      %p50 = por %p48, %p49
      %p51 = scmp.ne.s32.totalorder %s37, %s38
      %p52 = scmp.eq.s32.totalorder %s18, 1
      %p53 = por %p51, %p52
      %p55 = scmp.ne.s32.totalorder %s38, %s54
      %p56 = scmp.eq.s32.totalorder %s18, 0
      %p57 = por %p55, %p56
      %s58 = ssub.s32 %s19, %s31
      %s59 = ssub.s32 %s20, %s27
      %s60 = sor.u32 %s58, %s59
      %p61 = scmp.eq.s32.totalorder %s60, 0
      %s63 = sadd.s32 %s62, 1
      %s64 = scalar_select %p61, %s62, %s63
      %p67 = pneg %p61
      %p68 = scmp.eq.s32.totalorder %s12, 1
      %p69 = por %p67, %p68
      %p70 = scmp.ne.s32.totalorder %s62, %s65
      %p71 = scmp.eq.s32.totalorder %s12, 0
      %p72 = por %p70, %p71
      %p73 = scmp.ne.s32.totalorder %s62, %s65
      %p74 = scmp.eq.s32.totalorder %s17, 1
      %p75 = por %p73, %p74
      %p76 = scmp.ne.s32.totalorder %s65, %s66
      %p77 = scmp.eq.s32.totalorder %s17, 0
      %p78 = por %p76, %p77
      %p79 = scmp.ne.s32.totalorder %s65, %s66
      %p80 = scmp.eq.s32.totalorder %s18, 1
      %p81 = por %p79, %p80
      %p83 = scmp.ne.s32.totalorder %s66, %s82
      %p84 = scmp.eq.s32.totalorder %s18, 0
      %p85 = por %p83, %p84
      %s86 = ssub.s32 %s19, %s31
      %s87 = ssub.s32 %s20, %s27
      %s88 = sor.u32 %s86, %s87
      %p89 = scmp.eq.s32.totalorder %s88, 0
      %s91 = sadd.s32 %s90, 1
      %s92 = scalar_select %p89, %s90, %s91
      %p95 = pneg %p89
      %p96 = scmp.eq.s32.totalorder %s12, 1
      %p97 = por %p95, %p96
      %p98 = scmp.ne.s32.totalorder %s90, %s93
      %p99 = scmp.eq.s32.totalorder %s12, 0
      %p100 = por %p98, %p99
      %p101 = scmp.ne.s32.totalorder %s90, %s93
      %p102 = scmp.eq.s32.totalorder %s17, 1
      %p103 = por %p101, %p102
      %p104 = scmp.ne.s32.totalorder %s93, %s94
      %p105 = scmp.eq.s32.totalorder %s17, 0
      %p106 = por %p104, %p105
      %p107 = scmp.ne.s32.totalorder %s93, %s94
      %p108 = scmp.eq.s32.totalorder %s18, 1
      %p109 = por %p107, %p108
      %p111 = scmp.ne.s32.totalorder %s94, %s110
      %p112 = scmp.eq.s32.totalorder %s18, 0
      %p113 = por %p111, %p112
      %p114 = scmp.le.s32.totalorder 1, %s12
      %p115 = scmp.lt.s32.totalorder %s12, 3
      %p116 = pnand %p114, %p115
      %p117 = pneg %p116
      // Predicated region
      $region9: #{encoder_only_transformer.12} parent=5 // pred_check
        _
      $region10: #{encoder_only_transformer.12} parent=5 // pred_check_branch
        %119 = sbr.rel (%p116) target = $region12
      $region11: #{encoder_only_transformer.12} parent=5 // pred_region
        %s120 = ssub.s32 %s12, 1
      $region12: #{encoder_only_transformer.12} parent=5 // pred_fallthru
        _
      %p121 = scmp.lt.s32.totalorder %s12, 2
      // Predicated region
      $region13: #{encoder_only_transformer.12} parent=5 // pred_check
        %p122 = pneg %p121
      $region14: #{encoder_only_transformer.12} parent=5 // pred_check_branch
        %124 = sbr.rel (%p122) target = $region16
      $region15: #{encoder_only_transformer.12} parent=5 // pred_region
        // Predicated region
        $region17: #{encoder_only_transformer.12} parent=15 // pred_check
          %p125 = pneg %p44
        $region18: #{encoder_only_transformer.12} parent=15 // pred_check_branch
          %127 = sbr.rel (%p125) target = $region20
        $region19: #{encoder_only_transformer.12} parent=15 // pred_region
          %p128 = scmp.lt.s32.totalorder %s19, 1
          %s129 = scalar_select %p128, %s19, 1
          %s130 = smul.addr %s129, 4
          %s131 = scalar_lea.vmem %s0, %s130
        $region20: #{encoder_only_transformer.12} parent=15 // pred_fallthru
          _
      $region16: #{encoder_only_transformer.12} parent=5 // pred_fallthru
        _
      %p132 = scmp.le.s32.totalorder 1, %s12
      %p133 = scmp.lt.s32.totalorder %s12, 3
      %p134 = pnand %p132, %p133
      %p135 = pneg %p134
      // Predicated region
      $region21: #{encoder_only_transformer.12} parent=5 // pred_check
        _
      $region22: #{encoder_only_transformer.12} parent=5 // pred_check_branch
        %137 = sbr.rel (%p134) target = $region24
      $region23: #{encoder_only_transformer.12} parent=5 // pred_region
        %s138 = ssub.s32 %s12, 1
        %p139 = scmp.lt.s32.totalorder %s21, 1
        %s140 = scalar_select %p139, %s21, 1
        %s141 = smul.addr %s140, 4
        %s142 = scalar_lea.vmem %s0, %s141
        %p143 = pneg %p50
        %p144 = pneg %p47
        %p145 = pneg %p78
        %p146 = pneg %p75
        %p147 = scmp.lt.s32.totalorder %s21, 1
        %s148 = scalar_select %p147, %s21, 1
        %p149 = scmp.lt.s32.totalorder %s22, 0
        %s150 = scalar_select %p149, %s22, 0
        %s151 = sadd.s32 %s150, %s148
        %s152 = smul.addr %s151, 4
        %s153 = scalar_lea.vmem %s1, %s152
        %p154 = pneg %p106
        %p155 = pneg %p103
        %s156 = sand.u32 %s93, 1
        %s157 = scalar_lea.sflag [#allocation3], %s156
        %s158 = sand.u32 %s93, 1
        %s159 = smul.addr %s158, 32
        %s160 = scalar_lea.vmem [#allocation2], %s159
        %p161 = scmp.lt.s32.totalorder %s21, 1
        %s162 = scalar_select %p161, %s21, 1
        %s163 = smul.addr %s162, 4
        %s164 = scalar_lea.vmem %s0, %s163
        %p165 = scmp.lt.s32.totalorder %s21, 1
        %s166 = scalar_select %p165, %s21, 1
        %p167 = scmp.lt.s32.totalorder %s22, 0
        %s168 = scalar_select %p167, %s22, 0
        %s169 = sadd.s32 %s168, %s166
        %s170 = smul.addr %s169, 4
        %s171 = scalar_lea.vmem %s1, %s170
        %s173 = smul.u32 %s22, 8
        %s174 = sshra.s32 %s173, 3
        %s175 = sand.u32 %s173, 7
        %s176 = smul.addr %s174, 4
        %s177 = scalar_lea.vmem %s164, %s176
        %v178 = vld [vmem:[%s177] sm:$0xf]
        %v179 = vld [vmem:[%s164] sm:$0xf]
        %v181 = vunpack.c.l.b16 %v179
        %v182 = vpack.c.b16 %v181, %v181
        %183 = vrot.lane.b32.xlu0 %v182, 96
        %v184 = vpop.permute.xlu0 %183
        %vm185 = vcmask 64512
        %v187 = vsel %vm185, %v178, 0
        %v190 = vsel %vm185, %v184, 0
        %192 = vmatprep.subr.bf16.mxu0 0
        %193 = vmatpush1.bf16.xpose.msra.mxu0 %v190
        %194 = vmatprep.subr.bf16.mxu0 0
        %195 = vmatpush1.bf16.xpose.msra.mxu0 0
        %196 = vmatprep.subr.bf16.mxu0 0
        %197 = vmatpush1.bf16.xpose.msra.mxu0 0
        %198 = vmatprep.subr.bf16.mxu0 0
        %199 = vmatpush1.bf16.xpose.msra.mxu0 0
        %200 = vmatprep.subr.bf16.mxu0 0
        %201 = vmatpush1.bf16.xpose.msra.mxu0 0
        %202 = vmatprep.subr.bf16.mxu0 0
        %203 = vmatpush1.bf16.xpose.msra.mxu0 0
        %204 = vmatprep.subr.bf16.mxu0 0
        %205 = vmatpush1.bf16.xpose.msra.mxu0 0
        %206 = vmatprep.subr.bf16.mxu0 0
        %207 = vmatpush1.bf16.xpose.msra.mxu0 0
        %208 = vmatprep.subr.bf16.mxu0 0
        %209 = vmatpush1.bf16.xpose.msra.mxu0 0
        %210 = vmatprep.subr.bf16.mxu0 0
        %211 = vmatpush1.bf16.xpose.msra.mxu0 0
        %212 = vmatprep.subr.bf16.mxu0 0
        %213 = vmatpush1.bf16.xpose.msra.mxu0 0
        %214 = vmatprep.subr.bf16.mxu0 0
        %215 = vmatpush1.bf16.xpose.msra.mxu0 0
        %216 = vmatprep.subr.bf16.mxu0 0
        %217 = vmatpush1.bf16.xpose.msra.mxu0 0
        %218 = vmatprep.subr.bf16.mxu0 0
        %219 = vmatpush1.bf16.xpose.msra.mxu0 0
        %220 = vmatprep.subr.bf16.mxu0 0
        %221 = vmatpush1.bf16.xpose.msra.mxu0 0
        %222 = vmatprep.subr.bf16.mxu0 0
        %223 = vmatpush1.bf16.xpose.msra.mxu0 0
        %224 = vmatprep.mubr.bf16.mxu0 0
        %225 = vmatmul.mubr.bf16.gmra.mrb[0].mxu0 %v187
        %v226 = vpop.f32.mrb[0].mxu0
        %v227 = vadd.f32 0.0, %v226
        %v228 = vpop.f32.mrb[0].mxu0
        %v229 = vpop.f32.mrb[0].mxu0
        %v230 = vpop.f32.mrb[0].mxu0
        %231 = vdwg.mxu0
        %v232 = vmul.f32 %v227, 0.35355338
        %v233 = vsel %vm185, %v232, -inf
        %234 = vmax.xlane.f32.xlu0 %v233
        %v235 = vpop.xlane.xlu0 %234
        %v236 = vsub.f32 %v232, %v235
        %v237 = vmul.f32 %v236, 1.442695
        %v238 = vpow.pop %v237
        %v239 = vsel %vm185, %v238, 0.0
        %240 = vadd.xlane.f32.xlu0 %v239
        %v241 = vpop.xlane.xlu0 %240
        %v242 = vrcp.pop %v241
        %v243 = vmul.f32 %v238, %v242
        %244 = vst.msk [vmem:[%s160] sm:$0xff] %vm185, %v243
        %v245 = vpack.c.bf16 %v243, %v243
        %246 = vrot.lane.b32.xlu0 %v182, 64
        %v247 = vpop.permute.xlu0 %246
        %v249 = vsel %vm185, %v245, 0
        %vm251 = vcmask 1043456
        %v253 = vsel %vm251, %v247, 0
        %255 = vmatprep.subr.bf16.mxu0 0
        %256 = vmatpush1.bf16.msra.mxu0 %v253
        %257 = vmatprep.subr.bf16.mxu0 0
        %258 = vmatpush1.bf16.msra.mxu0 0
        %259 = vmatprep.subr.bf16.mxu0 0
        %260 = vmatpush1.bf16.msra.mxu0 0
        %261 = vmatprep.subr.bf16.mxu0 0
        %262 = vmatpush1.bf16.msra.mxu0 0
        %263 = vmatprep.subr.bf16.mxu0 0
        %264 = vmatpush1.bf16.msra.mxu0 0
        %265 = vmatprep.subr.bf16.mxu0 0
        %266 = vmatpush1.bf16.msra.mxu0 0
        %267 = vmatprep.subr.bf16.mxu0 0
        %268 = vmatpush1.bf16.msra.mxu0 0
        %269 = vmatprep.subr.bf16.mxu0 0
        %270 = vmatpush1.bf16.msra.mxu0 0
        %271 = vmatprep.subr.bf16.mxu0 0
        %272 = vmatpush1.bf16.msra.mxu0 0
        %273 = vmatprep.subr.bf16.mxu0 0
        %274 = vmatpush1.bf16.msra.mxu0 0
        %275 = vmatprep.subr.bf16.mxu0 0
        %276 = vmatpush1.bf16.msra.mxu0 0
        %277 = vmatprep.subr.bf16.mxu0 0
        %278 = vmatpush1.bf16.msra.mxu0 0
        %279 = vmatprep.subr.bf16.mxu0 0
        %280 = vmatpush1.bf16.msra.mxu0 0
        %281 = vmatprep.subr.bf16.mxu0 0
        %282 = vmatpush1.bf16.msra.mxu0 0
        %283 = vmatprep.subr.bf16.mxu0 0
        %284 = vmatpush1.bf16.msra.mxu0 0
        %285 = vmatprep.subr.bf16.mxu0 0
        %286 = vmatpush1.bf16.msra.mxu0 0
        %287 = vmatprep.mubr.bf16.mxu0 0
        %288 = vmatmul.mubr.bf16.gmra.mrb[0].mxu0 %v249
        %v289 = vpop.f32.mrb[0].mxu0
        %v290 = vadd.f32 0.0, %v289
        %v291 = vpop.f32.mrb[0].mxu0
        %v292 = vpop.f32.mrb[0].mxu0
        %v293 = vpop.f32.mrb[0].mxu0
        %294 = vdwg.mxu0
        %v296 = vunpack.c.l.b16 %v178
        %v297 = vpack.c.b16 %v296, %v296
        %298 = vrot.lane.b32.xlu0 %v297, 120
        %v299 = vpop.permute.xlu0 %298
        %300 = vrot.lane.b32.xlu0 %v182, 88
        %v301 = vpop.permute.xlu0 %300
        %v303 = vsel %vm185, %v299, 0
        %v306 = vsel %vm185, %v301, 0
        %308 = vmatprep.subr.bf16.mxu0 0
        %309 = vmatpush1.bf16.xpose.msra.mxu0 %v306
        %310 = vmatprep.subr.bf16.mxu0 0
        %311 = vmatpush1.bf16.xpose.msra.mxu0 0
        %312 = vmatprep.subr.bf16.mxu0 0
        %313 = vmatpush1.bf16.xpose.msra.mxu0 0
        %314 = vmatprep.subr.bf16.mxu0 0
        %315 = vmatpush1.bf16.xpose.msra.mxu0 0
        %316 = vmatprep.subr.bf16.mxu0 0
        %317 = vmatpush1.bf16.xpose.msra.mxu0 0
        %318 = vmatprep.subr.bf16.mxu0 0
        %319 = vmatpush1.bf16.xpose.msra.mxu0 0
        %320 = vmatprep.subr.bf16.mxu0 0
        %321 = vmatpush1.bf16.xpose.msra.mxu0 0
        %322 = vmatprep.subr.bf16.mxu0 0
        %323 = vmatpush1.bf16.xpose.msra.mxu0 0
        %324 = vmatprep.subr.bf16.mxu0 0
        %325 = vmatpush1.bf16.xpose.msra.mxu0 0
        %326 = vmatprep.subr.bf16.mxu0 0
        %327 = vmatpush1.bf16.xpose.msra.mxu0 0
        %328 = vmatprep.subr.bf16.mxu0 0
        %329 = vmatpush1.bf16.xpose.msra.mxu0 0
        %330 = vmatprep.subr.bf16.mxu0 0
        %331 = vmatpush1.bf16.xpose.msra.mxu0 0
        %332 = vmatprep.subr.bf16.mxu0 0
        %333 = vmatpush1.bf16.xpose.msra.mxu0 0
        %334 = vmatprep.subr.bf16.mxu0 0
        %335 = vmatpush1.bf16.xpose.msra.mxu0 0
        %336 = vmatprep.subr.bf16.mxu0 0
        %337 = vmatpush1.bf16.xpose.msra.mxu0 0
        %338 = vmatprep.subr.bf16.mxu0 0
        %339 = vmatpush1.bf16.xpose.msra.mxu0 0
        %340 = vmatprep.mubr.bf16.mxu0 0
        %341 = vmatmul.mubr.bf16.gmra.mrb[0].mxu0 %v303
        %v342 = vpop.f32.mrb[0].mxu0
        %v343 = vadd.f32 0.0, %v342
        %v344 = vpop.f32.mrb[0].mxu0
        %v345 = vpop.f32.mrb[0].mxu0
        %v346 = vpop.f32.mrb[0].mxu0
        %347 = vdwg.mxu0
        %v348 = vmul.f32 %v343, 0.35355338
        %v349 = vsel %vm185, %v348, -inf
        %350 = vmax.xlane.f32.xlu0 %v349
        %v351 = vpop.xlane.xlu0 %350
        %v352 = vsub.f32 %v348, %v351
        %v353 = vmul.f32 %v352, 1.442695
        %v354 = vpow.pop %v353
        %v355 = vsel %vm185, %v354, 0.0
        %356 = vadd.xlane.f32.xlu0 %v355
        %v357 = vpop.xlane.xlu0 %356
        %v358 = vrcp.pop %v357
        %v359 = vmul.f32 %v354, %v358
        %s360 = scalar_lea.vmem %s160, 8 [#allocation2]
        %361 = vst.msk [vmem:[%s360] sm:$0xff] %vm185, %v359
        %v362 = vpack.c.bf16 %v359, %v359
        %363 = vrot.lane.b32.xlu0 %v182, 56
        %v364 = vpop.permute.xlu0 %363
        %v366 = vsel %vm185, %v362, 0
        %v369 = vsel %vm251, %v364, 0
        %371 = vmatprep.subr.bf16.mxu0 0
        %372 = vmatpush1.bf16.msra.mxu0 %v369
        %373 = vmatprep.subr.bf16.mxu0 0
        %374 = vmatpush1.bf16.msra.mxu0 0
        %375 = vmatprep.subr.bf16.mxu0 0
        %376 = vmatpush1.bf16.msra.mxu0 0
        %377 = vmatprep.subr.bf16.mxu0 0
        %378 = vmatpush1.bf16.msra.mxu0 0
        %379 = vmatprep.subr.bf16.mxu0 0
        %380 = vmatpush1.bf16.msra.mxu0 0
        %381 = vmatprep.subr.bf16.mxu0 0
        %382 = vmatpush1.bf16.msra.mxu0 0
        %383 = vmatprep.subr.bf16.mxu0 0
        %384 = vmatpush1.bf16.msra.mxu0 0
        %385 = vmatprep.subr.bf16.mxu0 0
        %386 = vmatpush1.bf16.msra.mxu0 0
        %387 = vmatprep.subr.bf16.mxu0 0
        %388 = vmatpush1.bf16.msra.mxu0 0
        %389 = vmatprep.subr.bf16.mxu0 0
        %390 = vmatpush1.bf16.msra.mxu0 0
        %391 = vmatprep.subr.bf16.mxu0 0
        %392 = vmatpush1.bf16.msra.mxu0 0
        %393 = vmatprep.subr.bf16.mxu0 0
        %394 = vmatpush1.bf16.msra.mxu0 0
        %395 = vmatprep.subr.bf16.mxu0 0
        %396 = vmatpush1.bf16.msra.mxu0 0
        %397 = vmatprep.subr.bf16.mxu0 0
        %398 = vmatpush1.bf16.msra.mxu0 0
        %399 = vmatprep.subr.bf16.mxu0 0
        %400 = vmatpush1.bf16.msra.mxu0 0
        %401 = vmatprep.subr.bf16.mxu0 0
        %402 = vmatpush1.bf16.msra.mxu0 0
        %403 = vmatprep.mubr.bf16.mxu0 0
        %404 = vmatmul.mubr.bf16.gmra.mrb[0].mxu0 %v366
        %v405 = vpop.f32.mrb[0].mxu0
        %v406 = vadd.f32 0.0, %v405
        %v407 = vpop.f32.mrb[0].mxu0
        %v408 = vpop.f32.mrb[0].mxu0
        %v409 = vpop.f32.mrb[0].mxu0
        %410 = vdwg.mxu0
        %411 = vrot.lane.b32.xlu0 %v297, 112
        %v412 = vpop.permute.xlu0 %411
        %413 = vrot.lane.b32.xlu0 %v182, 80
        %v414 = vpop.permute.xlu0 %413
        %v416 = vsel %vm185, %v412, 0
        %v419 = vsel %vm185, %v414, 0
        %421 = vmatprep.subr.bf16.mxu0 0
        %422 = vmatpush1.bf16.xpose.msra.mxu0 %v419
        %423 = vmatprep.subr.bf16.mxu0 0
        %424 = vmatpush1.bf16.xpose.msra.mxu0 0
        %425 = vmatprep.subr.bf16.mxu0 0
        %426 = vmatpush1.bf16.xpose.msra.mxu0 0
        %427 = vmatprep.subr.bf16.mxu0 0
        %428 = vmatpush1.bf16.xpose.msra.mxu0 0
        %429 = vmatprep.subr.bf16.mxu0 0
        %430 = vmatpush1.bf16.xpose.msra.mxu0 0
        %431 = vmatprep.subr.bf16.mxu0 0
        %432 = vmatpush1.bf16.xpose.msra.mxu0 0
        %433 = vmatprep.subr.bf16.mxu0 0
        %434 = vmatpush1.bf16.xpose.msra.mxu0 0
        %435 = vmatprep.subr.bf16.mxu0 0
        %436 = vmatpush1.bf16.xpose.msra.mxu0 0
        %437 = vmatprep.subr.bf16.mxu0 0
        %438 = vmatpush1.bf16.xpose.msra.mxu0 0
        %439 = vmatprep.subr.bf16.mxu0 0
        %440 = vmatpush1.bf16.xpose.msra.mxu0 0
        %441 = vmatprep.subr.bf16.mxu0 0
        %442 = vmatpush1.bf16.xpose.msra.mxu0 0
        %443 = vmatprep.subr.bf16.mxu0 0
        %444 = vmatpush1.bf16.xpose.msra.mxu0 0
        %445 = vmatprep.subr.bf16.mxu0 0
        %446 = vmatpush1.bf16.xpose.msra.mxu0 0
        %447 = vmatprep.subr.bf16.mxu0 0
        %448 = vmatpush1.bf16.xpose.msra.mxu0 0
        %449 = vmatprep.subr.bf16.mxu0 0
        %450 = vmatpush1.bf16.xpose.msra.mxu0 0
        %451 = vmatprep.subr.bf16.mxu0 0
        %452 = vmatpush1.bf16.xpose.msra.mxu0 0
        %453 = vmatprep.mubr.bf16.mxu0 0
        %454 = vmatmul.mubr.bf16.gmra.mrb[0].mxu0 %v416
        %v455 = vpop.f32.mrb[0].mxu0
        %v456 = vadd.f32 0.0, %v455
        %v457 = vpop.f32.mrb[0].mxu0
        %v458 = vpop.f32.mrb[0].mxu0
        %v459 = vpop.f32.mrb[0].mxu0
        %460 = vdwg.mxu0
        %v461 = vmul.f32 %v456, 0.35355338
        %v462 = vsel %vm185, %v461, -inf
        %463 = vmax.xlane.f32.xlu0 %v462
        %v464 = vpop.xlane.xlu0 %463
        %v465 = vsub.f32 %v461, %v464
        %v466 = vmul.f32 %v465, 1.442695
        %v467 = vpow.pop %v466
        %v468 = vsel %vm185, %v467, 0.0
        %469 = vadd.xlane.f32.xlu0 %v468
        %v470 = vpop.xlane.xlu0 %469
        %v471 = vrcp.pop %v470
        %v472 = vmul.f32 %v467, %v471
        %s473 = scalar_lea.vmem %s160, 16 [#allocation2]
        %474 = vst.msk [vmem:[%s473] sm:$0xff] %vm185, %v472
        %v475 = vpack.c.bf16 %v472, %v472
        %476 = vrot.lane.b32.xlu0 %v182, 48
        %v477 = vpop.permute.xlu0 %476
        %v479 = vsel %vm185, %v475, 0
        %v482 = vsel %vm251, %v477, 0
        %484 = vmatprep.subr.bf16.mxu0 0
        %485 = vmatpush1.bf16.msra.mxu0 %v482
        %486 = vmatprep.subr.bf16.mxu0 0
        %487 = vmatpush1.bf16.msra.mxu0 0
        %488 = vmatprep.subr.bf16.mxu0 0
        %489 = vmatpush1.bf16.msra.mxu0 0
        %490 = vmatprep.subr.bf16.mxu0 0
        %491 = vmatpush1.bf16.msra.mxu0 0
        %492 = vmatprep.subr.bf16.mxu0 0
        %493 = vmatpush1.bf16.msra.mxu0 0
        %494 = vmatprep.subr.bf16.mxu0 0
        %495 = vmatpush1.bf16.msra.mxu0 0
        %496 = vmatprep.subr.bf16.mxu0 0
        %497 = vmatpush1.bf16.msra.mxu0 0
        %498 = vmatprep.subr.bf16.mxu0 0
        %499 = vmatpush1.bf16.msra.mxu0 0
        %500 = vmatprep.subr.bf16.mxu0 0
        %501 = vmatpush1.bf16.msra.mxu0 0
        %502 = vmatprep.subr.bf16.mxu0 0
        %503 = vmatpush1.bf16.msra.mxu0 0
        %504 = vmatprep.subr.bf16.mxu0 0
        %505 = vmatpush1.bf16.msra.mxu0 0
        %506 = vmatprep.subr.bf16.mxu0 0
        %507 = vmatpush1.bf16.msra.mxu0 0
        %508 = vmatprep.subr.bf16.mxu0 0
        %509 = vmatpush1.bf16.msra.mxu0 0
        %510 = vmatprep.subr.bf16.mxu0 0
        %511 = vmatpush1.bf16.msra.mxu0 0
        %512 = vmatprep.subr.bf16.mxu0 0
        %513 = vmatpush1.bf16.msra.mxu0 0
        %514 = vmatprep.subr.bf16.mxu0 0
        %515 = vmatpush1.bf16.msra.mxu0 0
        %516 = vmatprep.mubr.bf16.mxu0 0
        %517 = vmatmul.mubr.bf16.gmra.mrb[0].mxu0 %v479
        %v518 = vpop.f32.mrb[0].mxu0
        %v519 = vadd.f32 0.0, %v518
        %v520 = vpop.f32.mrb[0].mxu0
        %v521 = vpop.f32.mrb[0].mxu0
        %v522 = vpop.f32.mrb[0].mxu0
        %523 = vdwg.mxu0
        %524 = vrot.lane.b32.xlu0 %v297, 104
        %v525 = vpop.permute.xlu0 %524
        %526 = vrot.lane.b32.xlu0 %v182, 72
        %v527 = vpop.permute.xlu0 %526
        %v529 = vsel %vm185, %v525, 0
        %v532 = vsel %vm185, %v527, 0
        %534 = vmatprep.subr.bf16.mxu0 0
        %535 = vmatpush1.bf16.xpose.msra.mxu0 %v532
        %536 = vmatprep.subr.bf16.mxu0 0
        %537 = vmatpush1.bf16.xpose.msra.mxu0 0
        %538 = vmatprep.subr.bf16.mxu0 0
        %539 = vmatpush1.bf16.xpose.msra.mxu0 0
        %540 = vmatprep.subr.bf16.mxu0 0
        %541 = vmatpush1.bf16.xpose.msra.mxu0 0
        %542 = vmatprep.subr.bf16.mxu0 0
        %543 = vmatpush1.bf16.xpose.msra.mxu0 0
        %544 = vmatprep.subr.bf16.mxu0 0
        %545 = vmatpush1.bf16.xpose.msra.mxu0 0
        %546 = vmatprep.subr.bf16.mxu0 0
        %547 = vmatpush1.bf16.xpose.msra.mxu0 0
        %548 = vmatprep.subr.bf16.mxu0 0
        %549 = vmatpush1.bf16.xpose.msra.mxu0 0
        %550 = vmatprep.subr.bf16.mxu0 0
        %551 = vmatpush1.bf16.xpose.msra.mxu0 0
        %552 = vmatprep.subr.bf16.mxu0 0
        %553 = vmatpush1.bf16.xpose.msra.mxu0 0
        %554 = vmatprep.subr.bf16.mxu0 0
        %555 = vmatpush1.bf16.xpose.msra.mxu0 0
        %556 = vmatprep.subr.bf16.mxu0 0
        %557 = vmatpush1.bf16.xpose.msra.mxu0 0
        %558 = vmatprep.subr.bf16.mxu0 0
        %559 = vmatpush1.bf16.xpose.msra.mxu0 0
        %560 = vmatprep.subr.bf16.mxu0 0
        %561 = vmatpush1.bf16.xpose.msra.mxu0 0
        %562 = vmatprep.subr.bf16.mxu0 0
        %563 = vmatpush1.bf16.xpose.msra.mxu0 0
        %564 = vmatprep.subr.bf16.mxu0 0
        %565 = vmatpush1.bf16.xpose.msra.mxu0 0
        %566 = vmatprep.mubr.bf16.mxu0 0
        %567 = vmatmul.mubr.bf16.gmra.mrb[0].mxu0 %v529
        %v568 = vpop.f32.mrb[0].mxu0
        %v569 = vadd.f32 0.0, %v568
        %v570 = vpop.f32.mrb[0].mxu0
        %v571 = vpop.f32.mrb[0].mxu0
        %v572 = vpop.f32.mrb[0].mxu0
        %573 = vdwg.mxu0
        %v574 = vmul.f32 %v569, 0.35355338
        %v575 = vsel %vm185, %v574, -inf
        %576 = vmax.xlane.f32.xlu0 %v575
        %v577 = vpop.xlane.xlu0 %576
        %v578 = vsub.f32 %v574, %v577
        %v579 = vmul.f32 %v578, 1.442695
        %v580 = vpow.pop %v579
        %v581 = vsel %vm185, %v580, 0.0
        %582 = vadd.xlane.f32.xlu0 %v581
        %v583 = vpop.xlane.xlu0 %582
        %v584 = vrcp.pop %v583
        %v585 = vmul.f32 %v580, %v584
        %s586 = scalar_lea.vmem %s160, 24 [#allocation2]
        %587 = vst.msk [vmem:[%s586] sm:$0xff] %vm185, %v585
        %v588 = vpack.c.bf16 %v585, %v585
        %589 = vrot.lane.b32.xlu0 %v182, 40
        %v590 = vpop.permute.xlu0 %589
        %v592 = vsel %vm185, %v588, 0
        %v595 = vsel %vm251, %v590, 0
        %597 = vmatprep.subr.bf16.mxu0 0
        %598 = vmatpush1.bf16.msra.mxu0 %v595
        %599 = vmatprep.subr.bf16.mxu0 0
        %600 = vmatpush1.bf16.msra.mxu0 0
        %601 = vmatprep.subr.bf16.mxu0 0
        %602 = vmatpush1.bf16.msra.mxu0 0
        %603 = vmatprep.subr.bf16.mxu0 0
        %604 = vmatpush1.bf16.msra.mxu0 0
        %605 = vmatprep.subr.bf16.mxu0 0
        %606 = vmatpush1.bf16.msra.mxu0 0
        %607 = vmatprep.subr.bf16.mxu0 0
        %608 = vmatpush1.bf16.msra.mxu0 0
        %609 = vmatprep.subr.bf16.mxu0 0
        %610 = vmatpush1.bf16.msra.mxu0 0
        %611 = vmatprep.subr.bf16.mxu0 0
        %612 = vmatpush1.bf16.msra.mxu0 0
        %613 = vmatprep.subr.bf16.mxu0 0
        %614 = vmatpush1.bf16.msra.mxu0 0
        %615 = vmatprep.subr.bf16.mxu0 0
        %616 = vmatpush1.bf16.msra.mxu0 0
        %617 = vmatprep.subr.bf16.mxu0 0
        %618 = vmatpush1.bf16.msra.mxu0 0
        %619 = vmatprep.subr.bf16.mxu0 0
        %620 = vmatpush1.bf16.msra.mxu0 0
        %621 = vmatprep.subr.bf16.mxu0 0
        %622 = vmatpush1.bf16.msra.mxu0 0
        %623 = vmatprep.subr.bf16.mxu0 0
        %624 = vmatpush1.bf16.msra.mxu0 0
        %625 = vmatprep.subr.bf16.mxu0 0
        %626 = vmatpush1.bf16.msra.mxu0 0
        %627 = vmatprep.subr.bf16.mxu0 0
        %628 = vmatpush1.bf16.msra.mxu0 0
        %629 = vmatprep.mubr.bf16.mxu0 0
        %630 = vmatmul.mubr.bf16.gmra.mrb[0].mxu0 %v592
        %v631 = vpop.f32.mrb[0].mxu0
        %v632 = vadd.f32 0.0, %v631
        %v633 = vpop.f32.mrb[0].mxu0
        %v634 = vpop.f32.mrb[0].mxu0
        %v635 = vpop.f32.mrb[0].mxu0
        %636 = vdwg.mxu0
        %638 = vrot.lane.b32.xlu0 %v406, 8
        %v639 = vpop.permute.xlu0 %638
        %642 = vrot.lane.b32.xlu0 %v519, 16
        %v643 = vpop.permute.xlu0 %642
        %646 = vrot.lane.b32.xlu0 %v632, 24
        %v647 = vpop.permute.xlu0 %646
        %v649 = vsel %vm185, %v290, %v639
        %vm650 = vcmask 130048
        %v651 = vsel %vm650, %v649, %v643
        %vm652 = vcmask 195584
        %v653 = vsel %vm652, %v651, %v647
        %v654 = vpack.c.bf16 %v653, %v653
        %vm655 = vcmask 257024
        %656 = vst.msk [vmem:[%s171] sm:$0xf] %vm655, %v654
        %p657 = scmp.lt.s32.totalorder %s21, 1
        %s658 = scalar_select %p657, %s21, 1
        %p659 = scmp.lt.s32.totalorder %s22, 0
        %s660 = scalar_select %p659, %s22, 0
        %s661 = sadd.s32 %s660, %s658
        %s662 = smul.addr %s661, 4
        %s663 = scalar_lea.vmem %s1, %s662
        %s664 = sand.u32 %s93, 1
        %s665 = scalar_lea.sflag [#allocation3], %s664
        %s666 = sand.u32 %s93, 1
        %s667 = smul.addr %s666, 32
        %s668 = scalar_lea.vmem [#allocation2], %s667
        // Predicated region
        $region25: #{encoder_only_transformer.12} parent=23 // pred_check
          %p669 = pneg %p75
        $region26: #{encoder_only_transformer.12} parent=23 // pred_check_branch
          %671 = sbr.rel (%p669) target = $region28
        $region27: #{encoder_only_transformer.12} parent=23 // pred_region
          _
        $region28: #{encoder_only_transformer.12} parent=23 // pred_fallthru
          _
        // Predicated region
        $region29: #{encoder_only_transformer.12} parent=23 // pred_check
          %p672 = pneg %p103
        $region30: #{encoder_only_transformer.12} parent=23 // pred_check_branch
          %674 = sbr.rel (%p672) target = $region32
        $region31: #{encoder_only_transformer.12} parent=23 // pred_region
          %s676 = ssub.s32 512, 512
          %677 = vsyncadd %s665, %s676
          %s678 = smul.addr %s21, 4
          %s679 = sadd.s32 %s22, %s678
          %s680 = smul.addr %s679, 128
          %s681 = scalar_lea.hbm %s2, %s680
          %s682 = sshll.u32 %s668, 4
          %s683 = int_to_ptr.vmem [resolvable:$true] %s682
          %688 = dma.vmem_to_hbm [thread:$0]  %s683, 512, %s681, %s665, 128, 128, 8
        $region32: #{encoder_only_transformer.12} parent=23 // pred_fallthru
          _
      $region24: #{encoder_only_transformer.12} parent=5 // pred_fallthru
        _
      %p689 = scmp.le.s32.totalorder 2, %s12
      // Predicated region
      $region33: #{encoder_only_transformer.12} parent=5 // pred_check
        %p690 = pneg %p689
      $region34: #{encoder_only_transformer.12} parent=5 // pred_check_branch
        %692 = sbr.rel (%p690) target = $region36
      $region35: #{encoder_only_transformer.12} parent=5 // pred_region
        %s693 = ssub.s32 %s12, 2
        // Predicated region
        $region37: #{encoder_only_transformer.12} parent=35 // pred_check
          %p694 = pneg %p81
        $region38: #{encoder_only_transformer.12} parent=35 // pred_check_branch
          %696 = sbr.rel (%p694) target = $region40
        $region39: #{encoder_only_transformer.12} parent=35 // pred_region
          %p697 = scmp.lt.s32.totalorder %s23, 1
          %s698 = scalar_select %p697, %s23, 1
          %p699 = scmp.lt.s32.totalorder %s24, 0
          %s700 = scalar_select %p699, %s24, 0
          %s701 = sadd.s32 %s700, %s698
          %s702 = smul.addr %s701, 4
          %s703 = scalar_lea.vmem %s1, %s702
        $region40: #{encoder_only_transformer.12} parent=35 // pred_fallthru
          _
        // Predicated region
        $region41: #{encoder_only_transformer.12} parent=35 // pred_check
          %p704 = pneg %p109
        $region42: #{encoder_only_transformer.12} parent=35 // pred_check_branch
          %706 = sbr.rel (%p704) target = $region44
        $region43: #{encoder_only_transformer.12} parent=35 // pred_region
          %s707 = sand.u32 %s94, 1
          %s708 = scalar_lea.sflag [#allocation3], %s707
          %s709 = sand.u32 %s94, 1
          %s710 = smul.addr %s709, 32
          %s711 = scalar_lea.vmem [#allocation2], %s710
          %712 = dma.done %s708, 512
        $region44: #{encoder_only_transformer.12} parent=35 // pred_fallthru
          _
      $region36: #{encoder_only_transformer.12} parent=5 // pred_fallthru
        _
    $region6: #{encoder_only_transformer.12} parent=1 // loop_footer
      %s16 = sadd.s32 1, %s12
    $region7: #{encoder_only_transformer.12} parent=1 // loop_footer_branch
      %11 = sbr.rel target = $region3
    $region8: #{encoder_only_transformer.12} parent=1 // loop_exit
      _
    %713 = vsyncpa [#allocation3], 1
    %s714 = scalar_lea.sflag [#allocation3], 1
    %715 = vsyncpa %s714, 1

// kernel: encoder_only_transformer.21
$region0: #{encoder_only_transformer.21}
  #allocation0 [shape = 'u32[]', space=smem, size = 0x4, offset = 0x4, fixed_abs, tag = 'smem constant byte address 0x4 - core index']
  #allocation1 [shape = 'u32[144,128]{1,0:T(1,128)}', space=vmem, size = 0x12000, scoped, tag = 'internal scratch']
  #allocation2 [shape = 'bf16[8,32]{1,0:T(8,128)(2,1)}', space=vmem, size = 0x800, scoped, tag = 'scratch operand']
  %s0 = inlined_call_operand.vmem [shape: bf16[16,32], index: 0, kind: input, shape index: {}]
  %s1 = inlined_call_operand.vmem [shape: f32[1,32], index: 1, kind: input, shape index: {}]
  %s2 = inlined_call_operand.vmem [shape: f32[1,32], index: 2, kind: input, shape index: {}]
  %s3 = inlined_call_operand.vmem [shape: bf16[32,128], index: 3, kind: input, shape index: {}]
  %s4 = inlined_call_operand.vmem [shape: f32[1,128], index: 4, kind: input, shape index: {}]
  %s5 = inlined_call_operand.hbm [shape: f32[16,128], index: 5, kind: output, shape index: {}]
  %s6 = sld [smem:[#allocation0]]
  $region57: #{encoder_only_transformer.21} parent=0
    _
  %s8 = ssub.s32 1, %s6
  %s9 = scalar_select 0, %s8, %s6
  $region1: #{encoder_only_transformer.21} parent=0
    #allocation3 [shape = 'u8[8192]{0}', space=vmem, size = 0x2000, scoped, tag = 'output window, operand 0']
    #allocation4 [shape = 's32[2]{0}', space=sflag, size = 0x8, scoped, tag = 'scoped memory for encoder_only_transformer.21']
    %10 = vsyncpa [#allocation4], 0
    %s11 = scalar_lea.sflag [#allocation4], 1
    %12 = vsyncpa %s11, 0
    loop: start=0, step=1, limit=4
    $region2: #{encoder_only_transformer.21} parent=1 // loop_pre_header
      _
    $region3: #{encoder_only_transformer.21} parent=1 // loop_header
      %s14 = sphi 0, %s18
      %p15 = scmp.ge.s32.totalorder %s14, 4
      %s21 = sphi 0, %s33
      %s22 = sphi 0, %s29
      %s23 = sphi 0, %s21
      %s24 = sphi 0, %s22
      %s25 = sphi 0, %s23
      %s26 = sphi 0, %s24
      %s36 = sphi 0, %s38
      %s39 = sphi 0, %s36
      %s40 = sphi 0, %s39
      %s56 = sphi 0, %s40
      %s60 = sphi 0, %s60
      %s62 = sphi 0, %s60
      %s63 = sphi 0, %s62
      %s77 = sphi 0, %s63
      %s81 = sphi 0, %s81
      %s83 = sphi 0, %s81
      %s84 = sphi 0, %s83
      %s98 = sphi 0, %s84
      %s104 = sphi 0, %s106
      %s107 = sphi 0, %s104
      %s108 = sphi 0, %s107
      %s124 = sphi 0, %s108
      %s130 = sphi 0, %s132
      %s133 = sphi 0, %s130
      %s134 = sphi 0, %s133
      %s150 = sphi 0, %s134
      %s158 = sphi 0, %s160
      %s161 = sphi 0, %s158
      %s162 = sphi 0, %s161
      %s178 = sphi 0, %s162
    $region4: #{encoder_only_transformer.21} parent=1 // loop_header_branch
      %17 = sbr.rel (%p15) target = $region8
    $region5: #{encoder_only_transformer.21} parent=1 // loop_body
      %s19 = ssub.s32 %s14, 1
      %s20 = ssub.s32 %s14, 2
      %s27 = sadd.s32 1, %s22
      %p28 = scmp.ge.s32.totalorder %s27, 1
      %s29 = scalar_select %p28, 0, %s27
      %s30 = sadd.s32 1, %s21
      %s31 = scalar_select %p28, %s30, %s21
      %p32 = scmp.ge.s32.totalorder %s31, 2
      %s33 = scalar_select %p32, 0, %s31
      %s34 = ssub.s32 %s21, %s33
      %p35 = scmp.eq.s32.totalorder %s34, 0
      %s37 = sadd.s32 %s36, 1
      %s38 = scalar_select %p35, %s36, %s37
      %p41 = pneg %p35
      %p42 = scmp.eq.s32.totalorder %s14, 1
      %p43 = por %p41, %p42
      %p44 = scmp.ne.s32.totalorder %s36, %s39
      %p45 = scmp.eq.s32.totalorder %s14, 0
      %p46 = por %p44, %p45
      %p47 = scmp.ne.s32.totalorder %s36, %s39
      %p48 = scmp.eq.s32.totalorder %s19, 1
      %p49 = por %p47, %p48
      %p50 = scmp.ne.s32.totalorder %s39, %s40
      %p51 = scmp.eq.s32.totalorder %s19, 0
      %p52 = por %p50, %p51
      %p53 = scmp.ne.s32.totalorder %s39, %s40
      %p54 = scmp.eq.s32.totalorder %s20, 1
      %p55 = por %p53, %p54
      %p57 = scmp.ne.s32.totalorder %s40, %s56
      %p58 = scmp.eq.s32.totalorder %s20, 0
      %p59 = por %p57, %p58
      %s61 = sadd.s32 %s60, 1
      %p64 = scmp.eq.s32.totalorder %s14, 1
      %p65 = scmp.ne.s32.totalorder %s60, %s62
      %p66 = scmp.eq.s32.totalorder %s14, 0
      %p67 = por %p65, %p66
      %p68 = scmp.ne.s32.totalorder %s60, %s62
      %p69 = scmp.eq.s32.totalorder %s19, 1
      %p70 = por %p68, %p69
      %p71 = scmp.ne.s32.totalorder %s62, %s63
      %p72 = scmp.eq.s32.totalorder %s19, 0
      %p73 = por %p71, %p72
      %p74 = scmp.ne.s32.totalorder %s62, %s63
      %p75 = scmp.eq.s32.totalorder %s20, 1
      %p76 = por %p74, %p75
      %p78 = scmp.ne.s32.totalorder %s63, %s77
      %p79 = scmp.eq.s32.totalorder %s20, 0
      %p80 = por %p78, %p79
      %s82 = sadd.s32 %s81, 1
      %p85 = scmp.eq.s32.totalorder %s14, 1
      %p86 = scmp.ne.s32.totalorder %s81, %s83
      %p87 = scmp.eq.s32.totalorder %s14, 0
      %p88 = por %p86, %p87
      %p89 = scmp.ne.s32.totalorder %s81, %s83
      %p90 = scmp.eq.s32.totalorder %s19, 1
      %p91 = por %p89, %p90
      %p92 = scmp.ne.s32.totalorder %s83, %s84
      %p93 = scmp.eq.s32.totalorder %s19, 0
      %p94 = por %p92, %p93
      %p95 = scmp.ne.s32.totalorder %s83, %s84
      %p96 = scmp.eq.s32.totalorder %s20, 1
      %p97 = por %p95, %p96
      %p99 = scmp.ne.s32.totalorder %s84, %s98
      %p100 = scmp.eq.s32.totalorder %s20, 0
      %p101 = por %p99, %p100
      %s102 = ssub.s32 %s22, %s29
      %p103 = scmp.eq.s32.totalorder %s102, 0
      %s105 = sadd.s32 %s104, 1
      %s106 = scalar_select %p103, %s104, %s105
      %p109 = pneg %p103
      %p110 = scmp.eq.s32.totalorder %s14, 1
      %p111 = por %p109, %p110
      %p112 = scmp.ne.s32.totalorder %s104, %s107
      %p113 = scmp.eq.s32.totalorder %s14, 0
      %p114 = por %p112, %p113
      %p115 = scmp.ne.s32.totalorder %s104, %s107
      %p116 = scmp.eq.s32.totalorder %s19, 1
      %p117 = por %p115, %p116
      %p118 = scmp.ne.s32.totalorder %s107, %s108
      %p119 = scmp.eq.s32.totalorder %s19, 0
      %p120 = por %p118, %p119
      %p121 = scmp.ne.s32.totalorder %s107, %s108
      %p122 = scmp.eq.s32.totalorder %s20, 1
      %p123 = por %p121, %p122
      %p125 = scmp.ne.s32.totalorder %s108, %s124
      %p126 = scmp.eq.s32.totalorder %s20, 0
      %p127 = por %p125, %p126
      %s128 = ssub.s32 %s22, %s29
      %p129 = scmp.eq.s32.totalorder %s128, 0
      %s131 = sadd.s32 %s130, 1
      %s132 = scalar_select %p129, %s130, %s131
      %p135 = pneg %p129
      %p136 = scmp.eq.s32.totalorder %s14, 1
      %p137 = por %p135, %p136
      %p138 = scmp.ne.s32.totalorder %s130, %s133
      %p139 = scmp.eq.s32.totalorder %s14, 0
      %p140 = por %p138, %p139
      %p141 = scmp.ne.s32.totalorder %s130, %s133
      %p142 = scmp.eq.s32.totalorder %s19, 1
      %p143 = por %p141, %p142
      %p144 = scmp.ne.s32.totalorder %s133, %s134
      %p145 = scmp.eq.s32.totalorder %s19, 0
      %p146 = por %p144, %p145
      %p147 = scmp.ne.s32.totalorder %s133, %s134
      %p148 = scmp.eq.s32.totalorder %s20, 1
      %p149 = por %p147, %p148
      %p151 = scmp.ne.s32.totalorder %s134, %s150
      %p152 = scmp.eq.s32.totalorder %s20, 0
      %p153 = por %p151, %p152
      %s154 = ssub.s32 %s21, %s33
      %s155 = ssub.s32 %s22, %s29
      %s156 = sor.u32 %s154, %s155
      %p157 = scmp.eq.s32.totalorder %s156, 0
      %s159 = sadd.s32 %s158, 1
      %s160 = scalar_select %p157, %s158, %s159
      %p163 = pneg %p157
      %p164 = scmp.eq.s32.totalorder %s14, 1
      %p165 = por %p163, %p164
      %p166 = scmp.ne.s32.totalorder %s158, %s161
      %p167 = scmp.eq.s32.totalorder %s14, 0
      %p168 = por %p166, %p167
      %p169 = scmp.ne.s32.totalorder %s158, %s161
      %p170 = scmp.eq.s32.totalorder %s19, 1
      %p171 = por %p169, %p170
      %p172 = scmp.ne.s32.totalorder %s161, %s162
      %p173 = scmp.eq.s32.totalorder %s19, 0
      %p174 = por %p172, %p173
      %p175 = scmp.ne.s32.totalorder %s161, %s162
      %p176 = scmp.eq.s32.totalorder %s20, 1
      %p177 = por %p175, %p176
      %p179 = scmp.ne.s32.totalorder %s162, %s178
      %p180 = scmp.eq.s32.totalorder %s20, 0
      %p181 = por %p179, %p180
      %p182 = scmp.le.s32.totalorder 1, %s14
      %p183 = scmp.lt.s32.totalorder %s14, 3
      %p184 = pnand %p182, %p183
      %p185 = pneg %p184
      // Predicated region
      $region9: #{encoder_only_transformer.21} parent=5 // pred_check
        _
      $region10: #{encoder_only_transformer.21} parent=5 // pred_check_branch
        %187 = sbr.rel (%p184) target = $region12
      $region11: #{encoder_only_transformer.21} parent=5 // pred_region
        %s188 = ssub.s32 %s14, 1
        // Predicated region
        $region13: #{encoder_only_transformer.21} parent=11 // pred_check
          %p189 = pneg %p73
        $region14: #{encoder_only_transformer.21} parent=11 // pred_check_branch
          %191 = sbr.rel (%p189) target = $region16
        $region15: #{encoder_only_transformer.21} parent=11 // pred_region
          _
        $region16: #{encoder_only_transformer.21} parent=11 // pred_fallthru
          _
        // Predicated region
        $region17: #{encoder_only_transformer.21} parent=11 // pred_check
          %p192 = pneg %p94
        $region18: #{encoder_only_transformer.21} parent=11 // pred_check_branch
          %194 = sbr.rel (%p192) target = $region20
        $region19: #{encoder_only_transformer.21} parent=11 // pred_region
          _
        $region20: #{encoder_only_transformer.21} parent=11 // pred_fallthru
          _
        // Predicated region
        $region21: #{encoder_only_transformer.21} parent=11 // pred_check
          %p195 = pneg %p120
        $region22: #{encoder_only_transformer.21} parent=11 // pred_check_branch
          %197 = sbr.rel (%p195) target = $region24
        $region23: #{encoder_only_transformer.21} parent=11 // pred_region
          %p198 = scmp.lt.s32.totalorder %s24, 0
          %s199 = scalar_select %p198, %s24, 0
          %s200 = smul.addr %s199, 4
          %s201 = scalar_lea.vmem %s3, %s200
        $region24: #{encoder_only_transformer.21} parent=11 // pred_fallthru
          _
        // Predicated region
        $region25: #{encoder_only_transformer.21} parent=11 // pred_check
          %p202 = pneg %p146
        $region26: #{encoder_only_transformer.21} parent=11 // pred_check_branch
          %204 = sbr.rel (%p202) target = $region28
        $region27: #{encoder_only_transformer.21} parent=11 // pred_region
          %p205 = scmp.lt.s32.totalorder %s24, 0
          %s206 = scalar_select %p205, %s24, 0
          %s207 = scalar_lea.vmem %s4, %s206
        $region28: #{encoder_only_transformer.21} parent=11 // pred_fallthru
          _
      $region12: #{encoder_only_transformer.21} parent=5 // pred_fallthru
        _
      %p208 = scmp.lt.s32.totalorder %s14, 2
      // Predicated region
      $region29: #{encoder_only_transformer.21} parent=5 // pred_check
        %p209 = pneg %p208
      $region30: #{encoder_only_transformer.21} parent=5 // pred_check_branch
        %211 = sbr.rel (%p209) target = $region32
      $region31: #{encoder_only_transformer.21} parent=5 // pred_region
        // Predicated region
        $region33: #{encoder_only_transformer.21} parent=31 // pred_check
          %p212 = pneg %p46
        $region34: #{encoder_only_transformer.21} parent=31 // pred_check_branch
          %214 = sbr.rel (%p212) target = $region36
        $region35: #{encoder_only_transformer.21} parent=31 // pred_region
          %p215 = scmp.lt.s32.totalorder %s21, 1
          %s216 = scalar_select %p215, %s21, 1
          %s217 = smul.addr %s216, 4
          %s218 = scalar_lea.vmem %s0, %s217
        $region36: #{encoder_only_transformer.21} parent=31 // pred_fallthru
          _
      $region32: #{encoder_only_transformer.21} parent=5 // pred_fallthru
        _
      %p219 = scmp.le.s32.totalorder 1, %s14
      %p220 = scmp.lt.s32.totalorder %s14, 3
      %p221 = pnand %p219, %p220
      %p222 = pneg %p221
      // Predicated region
      $region37: #{encoder_only_transformer.21} parent=5 // pred_check
        _
      $region38: #{encoder_only_transformer.21} parent=5 // pred_check_branch
        %224 = sbr.rel (%p221) target = $region40
      $region39: #{encoder_only_transformer.21} parent=5 // pred_region
        %s225 = ssub.s32 %s14, 1
        %p226 = scmp.lt.s32.totalorder %s23, 1
        %s227 = scalar_select %p226, %s23, 1
        %s228 = smul.addr %s227, 4
        %s229 = scalar_lea.vmem %s0, %s228
        %p230 = pneg %p52
        %p231 = pneg %p49
        %p232 = pneg %p73
        %p233 = pneg %p70
        %p234 = pneg %p94
        %p235 = pneg %p91
        %p236 = scmp.lt.s32.totalorder %s24, 0
        %s237 = scalar_select %p236, %s24, 0
        %s238 = smul.addr %s237, 4
        %s239 = scalar_lea.vmem %s3, %s238
        %p240 = pneg %p120
        %p241 = pneg %p117
        %p242 = scmp.lt.s32.totalorder %s24, 0
        %s243 = scalar_select %p242, %s24, 0
        %s244 = scalar_lea.vmem %s4, %s243
        %p245 = pneg %p146
        %p246 = pneg %p143
        %p247 = pneg %p174
        %p248 = pneg %p171
        %s249 = sand.u32 %s161, 1
        %s250 = scalar_lea.sflag [#allocation4], %s249
        %s251 = sand.u32 %s161, 1
        %s252 = smul.addr %s251, 8
        %s253 = scalar_lea.vmem [#allocation3], %s252
        %p254 = scmp.lt.s32.totalorder %s23, 1
        %s255 = scalar_select %p254, %s23, 1
        %s256 = smul.addr %s255, 4
        %s257 = scalar_lea.vmem %s0, %s256
        %p258 = scmp.lt.s32.totalorder %s24, 0
        %s259 = scalar_select %p258, %s24, 0
        %s260 = smul.addr %s259, 4
        %s261 = scalar_lea.vmem %s3, %s260
        %p262 = scmp.lt.s32.totalorder %s24, 0
        %s263 = scalar_select %p262, %s24, 0
        %s264 = scalar_lea.vmem %s4, %s263
        %p266 = scmp.eq.s32.totalorder %s24, 0
        // Predicated region
        $region41: #{encoder_only_transformer.21} parent=39 // pred_check
          %p267 = pneg %p266
        $region42: #{encoder_only_transformer.21} parent=39 // pred_check_branch
          %269 = sbr.rel (%p267) target = $region44
        $region43: #{encoder_only_transformer.21} parent=39 // pred_region
          %v270 = vld [vmem:[%s257] sm:$0xf]
          %v271 = vunpack.c.l.bf16 %v270
          %vm272 = vcmask 261120
          %v273 = vsel %vm272, %v271, 0.0
          %274 = vadd.xlane.f32.xlu0 %v273
          %v275 = vpop.xlane.xlu0 %274
          %v276 = vrcp.pop 32.0
          %v277 = vmul.f32 %v275, %v276
          %v278 = vsub.f32 %v271, %v277
          %v279 = vmul.f32 %v278, %v278
          %v280 = vsel %vm272, %v279, 0.0
          %281 = vadd.xlane.f32.xlu0 %v280
          %v282 = vpop.xlane.xlu0 %281
          %v283 = vmul.f32 %v282, %v276
          %v284 = vadd.f32 %v283, 1e-05
          %v285 = vrsqrt.pop %v284
          %v286 = vmul.f32 %v278, %v285
          %v287 = vld [vmem:[%s1] sm:$0x1]
          %v289 = vlaneseq
          %v290 = vshrl.u32 %v289, 7
          %v291 = vsub.s32 0, %v290
          %v292 = vrot.slane %v287, %v291
          %v294 = vmul.f32 %v286, %v292
          %v295 = vld [vmem:[%s2] sm:$0x1]
          %v297 = vlaneseq
          %v298 = vshrl.u32 %v297, 7
          %v299 = vsub.s32 0, %v298
          %v300 = vrot.slane %v295, %v299
          %v302 = vadd.f32 %v294, %v300
          %v303 = vpack.c.bf16 %v302, %v302
          %vm304 = vcmask 257024
          %305 = vst.msk [vmem:[#allocation2] sm:$0xf] %vm304, %v303
        $region44: #{encoder_only_transformer.21} parent=39 // pred_fallthru
          _
        %v306 = vld [vmem:[#allocation2] sm:$0xf]
        %v307 = vld [vmem:[%s261] sm:$0xf]
        %v308 = vld [vmem:[%s261 + $0x4] sm:$0xf]
        %v309 = vld [vmem:[%s261 + $0x8] sm:$0xf]
        %v310 = vld [vmem:[%s261 + $0xc] sm:$0xf]
        %v311 = vld [vmem:[%s264] sm:$0x1]
        %v313 = vlaneseq
        %v314 = vshrl.u32 %v313, 7
        %v315 = vsub.s32 0, %v314
        %v316 = vrot.slane %v311, %v315
        %v322 = vunpack.c.l.b16 %v307
        %v323 = vunpack.c.l.b16 %v308
        %v324 = vunpack.c.l.b16 %v309
        %v325 = vunpack.c.l.b16 %v310
        %v326 = vpack.c.b16 %v323, %v322
        %v327 = vpack.c.b16 %v325, %v324
        %vm330 = vcmask 261120
        %v332 = vsel %vm330, %v306, 0
        %334 = vmatprep.subr.bf16.mxu0 0
        %335 = vmatpush1.bf16.msra.mxu0 %v326
        %336 = vmatprep.subr.bf16.mxu0 0
        %337 = vmatpush1.bf16.msra.mxu0 %v327
        %338 = vmatprep.subr.bf16.mxu0 0
        %339 = vmatpush1.bf16.msra.mxu0 0
        %340 = vmatprep.subr.bf16.mxu0 0
        %341 = vmatpush1.bf16.msra.mxu0 0
        %342 = vmatprep.subr.bf16.mxu0 0
        %343 = vmatpush1.bf16.msra.mxu0 0
        %344 = vmatprep.subr.bf16.mxu0 0
        %345 = vmatpush1.bf16.msra.mxu0 0
        %346 = vmatprep.subr.bf16.mxu0 0
        %347 = vmatpush1.bf16.msra.mxu0 0
        %348 = vmatprep.subr.bf16.mxu0 0
        %349 = vmatpush1.bf16.msra.mxu0 0
        %350 = vmatprep.subr.bf16.mxu0 0
        %351 = vmatpush1.bf16.msra.mxu0 0
        %352 = vmatprep.subr.bf16.mxu0 0
        %353 = vmatpush1.bf16.msra.mxu0 0
        %354 = vmatprep.subr.bf16.mxu0 0
        %355 = vmatpush1.bf16.msra.mxu0 0
        %356 = vmatprep.subr.bf16.mxu0 0
        %357 = vmatpush1.bf16.msra.mxu0 0
        %358 = vmatprep.subr.bf16.mxu0 0
        %359 = vmatpush1.bf16.msra.mxu0 0
        %360 = vmatprep.subr.bf16.mxu0 0
        %361 = vmatpush1.bf16.msra.mxu0 0
        %362 = vmatprep.subr.bf16.mxu0 0
        %363 = vmatpush1.bf16.msra.mxu0 0
        %364 = vmatprep.subr.bf16.mxu0 0
        %365 = vmatpush1.bf16.msra.mxu0 0
        %366 = vmatprep.mubr.bf16.mxu0 0
        %367 = vmatmul.mubr.bf16.gmra.mrb[0].mxu0 %v332
        %v368 = vpop.f32.mrb[0].mxu0
        %v369 = vadd.f32 %v316, %v368
        %v370 = vpop.f32.mrb[0].mxu0
        %v371 = vpop.f32.mrb[0].mxu0
        %v372 = vpop.f32.mrb[0].mxu0
        %373 = vdwg.mxu0
        %374 = vst [vmem:[%s253] sm:$0xff] %v369
        %s375 = sand.u32 %s161, 1
        %s376 = scalar_lea.sflag [#allocation4], %s375
        %s377 = sand.u32 %s161, 1
        %s378 = smul.addr %s377, 8
        %s379 = scalar_lea.vmem [#allocation3], %s378
        // Predicated region
        $region45: #{encoder_only_transformer.21} parent=39 // pred_check
          %p380 = pneg %p171
        $region46: #{encoder_only_transformer.21} parent=39 // pred_check_branch
          %382 = sbr.rel (%p380) target = $region48
        $region47: #{encoder_only_transformer.21} parent=39 // pred_region
          %s384 = ssub.s32 128, 128
          %385 = vsyncadd %s376, %s384
          %s386 = sadd.s32 %s24, %s23
          %s387 = smul.addr %s386, 128
          %s388 = scalar_lea.hbm %s5, %s387
          %s390 = sshll.u32 %s379, 4
          %s391 = int_to_ptr.vmem [resolvable:$true] %s390
          %393 = dma.vmem_to_hbm [thread:$0]  %s391, 128, %s388, %s376
        $region48: #{encoder_only_transformer.21} parent=39 // pred_fallthru
          _
      $region40: #{encoder_only_transformer.21} parent=5 // pred_fallthru
        _
      %p394 = scmp.le.s32.totalorder 2, %s14
      // Predicated region
      $region49: #{encoder_only_transformer.21} parent=5 // pred_check
        %p395 = pneg %p394
      $region50: #{encoder_only_transformer.21} parent=5 // pred_check_branch
        %397 = sbr.rel (%p395) target = $region52
      $region51: #{encoder_only_transformer.21} parent=5 // pred_region
        %s398 = ssub.s32 %s14, 2
        // Predicated region
        $region53: #{encoder_only_transformer.21} parent=51 // pred_check
          %p399 = pneg %p177
        $region54: #{encoder_only_transformer.21} parent=51 // pred_check_branch
          %401 = sbr.rel (%p399) target = $region56
        $region55: #{encoder_only_transformer.21} parent=51 // pred_region
          %s402 = sand.u32 %s162, 1
          %s403 = scalar_lea.sflag [#allocation4], %s402
          %s404 = sand.u32 %s162, 1
          %s405 = smul.addr %s404, 8
          %s406 = scalar_lea.vmem [#allocation3], %s405
          %407 = dma.done %s403, 128
        $region56: #{encoder_only_transformer.21} parent=51 // pred_fallthru
          _
      $region52: #{encoder_only_transformer.21} parent=5 // pred_fallthru
        _
    $region6: #{encoder_only_transformer.21} parent=1 // loop_footer
      %s18 = sadd.s32 1, %s14
    $region7: #{encoder_only_transformer.21} parent=1 // loop_footer_branch
      %13 = sbr.rel target = $region3
    $region8: #{encoder_only_transformer.21} parent=1 // loop_exit
      _
    %408 = vsyncpa [#allocation4], 1
    %s409 = scalar_lea.sflag [#allocation4], 1
    %410 = vsyncpa %s409, 1

// kernel: encoder_only_transformer.15
$region0: #{encoder_only_transformer.15}
  #allocation0 [shape = 'u32[]', space=smem, size = 0x4, offset = 0x4, fixed_abs, tag = 'smem constant byte address 0x4 - core index']
  #allocation1 [shape = 'u32[144,128]{1,0:T(1,128)}', space=vmem, size = 0x12000, scoped, tag = 'internal scratch']
  #allocation2 [shape = 'f32[8,32]{1,0:T(8,128)}', space=vmem, size = 0x1000, scoped, tag = 'scratch operand']
  %s0 = inlined_call_operand.vmem [shape: bf16[16,64], index: 0, kind: input, shape index: {}]
  %s1 = inlined_call_operand.vmem [shape: bf16[64,32], index: 1, kind: input, shape index: {}]
  %s2 = inlined_call_operand.vmem [shape: f32[1,32], index: 2, kind: input, shape index: {}]
  %s3 = inlined_call_operand.vmem [shape: bf16[16,32], index: 3, kind: input, shape index: {}]
  %s4 = inlined_call_operand.vmem [shape: f32[1,32], index: 4, kind: input, shape index: {}]
  %s5 = inlined_call_operand.vmem [shape: f32[1,32], index: 5, kind: input, shape index: {}]
  %s6 = inlined_call_operand.vmem [shape: bf16[16,32], index: 6, kind: output, shape index: {}]
  %s7 = sld [smem:[#allocation0]]
  $region65: #{encoder_only_transformer.15} parent=0
    _
  %s9 = ssub.s32 1, %s7
  %s10 = scalar_select 0, %s9, %s7
  loop: start=0, step=1, limit=4
  $region2: #{encoder_only_transformer.15} parent=0 // loop_pre_header
    _
  $region3: #{encoder_only_transformer.15} parent=0 // loop_header
    %s12 = sphi 0, %s16
    %p13 = scmp.ge.s32.totalorder %s12, 4
    %s19 = sphi 0, %s31
    %s20 = sphi 0, %s27
    %s21 = sphi 0, %s19
    %s22 = sphi 0, %s20
    %s23 = sphi 0, %s21
    %s24 = sphi 0, %s22
    %s36 = sphi 0, %s38
    %s39 = sphi 0, %s36
    %s40 = sphi 0, %s39
    %s56 = sphi 0, %s40
    %s62 = sphi 0, %s64
    %s65 = sphi 0, %s62
    %s66 = sphi 0, %s65
    %s82 = sphi 0, %s66
    %s86 = sphi 0, %s86
    %s88 = sphi 0, %s86
    %s89 = sphi 0, %s88
    %s103 = sphi 0, %s89
    %s109 = sphi 0, %s111
    %s112 = sphi 0, %s109
    %s113 = sphi 0, %s112
    %s129 = sphi 0, %s113
    %s133 = sphi 0, %s133
    %s135 = sphi 0, %s133
    %s136 = sphi 0, %s135
    %s150 = sphi 0, %s136
    %s154 = sphi 0, %s154
    %s156 = sphi 0, %s154
    %s157 = sphi 0, %s156
    %s171 = sphi 0, %s157
    %s177 = sphi 0, %s179
    %s180 = sphi 0, %s177
    %s181 = sphi 0, %s180
    %s197 = sphi 0, %s181
  $region4: #{encoder_only_transformer.15} parent=0 // loop_header_branch
    %15 = sbr.rel (%p13) target = $region8
  $region5: #{encoder_only_transformer.15} parent=0 // loop_body
    %s17 = ssub.s32 %s12, 1
    %s18 = ssub.s32 %s12, 2
    %s25 = sadd.s32 1, %s20
    %p26 = scmp.ge.s32.totalorder %s25, 1
    %s27 = scalar_select %p26, 0, %s25
    %s28 = sadd.s32 1, %s19
    %s29 = scalar_select %p26, %s28, %s19
    %p30 = scmp.ge.s32.totalorder %s29, 2
    %s31 = scalar_select %p30, 0, %s29
    %s32 = ssub.s32 %s19, %s31
    %s33 = ssub.s32 %s20, %s27
    %s34 = sor.u32 %s32, %s33
    %p35 = scmp.eq.s32.totalorder %s34, 0
    %s37 = sadd.s32 %s36, 1
    %s38 = scalar_select %p35, %s36, %s37
    %p41 = pneg %p35
    %p42 = scmp.eq.s32.totalorder %s12, 1
    %p43 = por %p41, %p42
    %p44 = scmp.ne.s32.totalorder %s36, %s39
    %p45 = scmp.eq.s32.totalorder %s12, 0
    %p46 = por %p44, %p45
    %p47 = scmp.ne.s32.totalorder %s36, %s39
    %p48 = scmp.eq.s32.totalorder %s17, 1
    %p49 = por %p47, %p48
    %p50 = scmp.ne.s32.totalorder %s39, %s40
    %p51 = scmp.eq.s32.totalorder %s17, 0
    %p52 = por %p50, %p51
    %p53 = scmp.ne.s32.totalorder %s39, %s40
    %p54 = scmp.eq.s32.totalorder %s18, 1
    %p55 = por %p53, %p54
    %p57 = scmp.ne.s32.totalorder %s40, %s56
    %p58 = scmp.eq.s32.totalorder %s18, 0
    %p59 = por %p57, %p58
    %s60 = ssub.s32 %s20, %s27
    %p61 = scmp.eq.s32.totalorder %s60, 0
    %s63 = sadd.s32 %s62, 1
    %s64 = scalar_select %p61, %s62, %s63
    %p67 = pneg %p61
    %p68 = scmp.eq.s32.totalorder %s12, 1
    %p69 = por %p67, %p68
    %p70 = scmp.ne.s32.totalorder %s62, %s65
    %p71 = scmp.eq.s32.totalorder %s12, 0
    %p72 = por %p70, %p71
    %p73 = scmp.ne.s32.totalorder %s62, %s65
    %p74 = scmp.eq.s32.totalorder %s17, 1
    %p75 = por %p73, %p74
    %p76 = scmp.ne.s32.totalorder %s65, %s66
    %p77 = scmp.eq.s32.totalorder %s17, 0
    %p78 = por %p76, %p77
    %p79 = scmp.ne.s32.totalorder %s65, %s66
    %p80 = scmp.eq.s32.totalorder %s18, 1
    %p81 = por %p79, %p80
    %p83 = scmp.ne.s32.totalorder %s66, %s82
    %p84 = scmp.eq.s32.totalorder %s18, 0
    %p85 = por %p83, %p84
    %s87 = sadd.s32 %s86, 1
    %p90 = scmp.eq.s32.totalorder %s12, 1
    %p91 = scmp.ne.s32.totalorder %s86, %s88
    %p92 = scmp.eq.s32.totalorder %s12, 0
    %p93 = por %p91, %p92
    %p94 = scmp.ne.s32.totalorder %s86, %s88
    %p95 = scmp.eq.s32.totalorder %s17, 1
    %p96 = por %p94, %p95
    %p97 = scmp.ne.s32.totalorder %s88, %s89
    %p98 = scmp.eq.s32.totalorder %s17, 0
    %p99 = por %p97, %p98
    %p100 = scmp.ne.s32.totalorder %s88, %s89
    %p101 = scmp.eq.s32.totalorder %s18, 1
    %p102 = por %p100, %p101
    %p104 = scmp.ne.s32.totalorder %s89, %s103
    %p105 = scmp.eq.s32.totalorder %s18, 0
    %p106 = por %p104, %p105
    %s107 = ssub.s32 %s19, %s31
    %p108 = scmp.eq.s32.totalorder %s107, 0
    %s110 = sadd.s32 %s109, 1
    %s111 = scalar_select %p108, %s109, %s110
    %p114 = pneg %p108
    %p115 = scmp.eq.s32.totalorder %s12, 1
    %p116 = por %p114, %p115
    %p117 = scmp.ne.s32.totalorder %s109, %s112
    %p118 = scmp.eq.s32.totalorder %s12, 0
    %p119 = por %p117, %p118
    %p120 = scmp.ne.s32.totalorder %s109, %s112
    %p121 = scmp.eq.s32.totalorder %s17, 1
    %p122 = por %p120, %p121
    %p123 = scmp.ne.s32.totalorder %s112, %s113
    %p124 = scmp.eq.s32.totalorder %s17, 0
    %p125 = por %p123, %p124
    %p126 = scmp.ne.s32.totalorder %s112, %s113
    %p127 = scmp.eq.s32.totalorder %s18, 1
    %p128 = por %p126, %p127
    %p130 = scmp.ne.s32.totalorder %s113, %s129
    %p131 = scmp.eq.s32.totalorder %s18, 0
    %p132 = por %p130, %p131
    %s134 = sadd.s32 %s133, 1
    %p137 = scmp.eq.s32.totalorder %s12, 1
    %p138 = scmp.ne.s32.totalorder %s133, %s135
    %p139 = scmp.eq.s32.totalorder %s12, 0
    %p140 = por %p138, %p139
    %p141 = scmp.ne.s32.totalorder %s133, %s135
    %p142 = scmp.eq.s32.totalorder %s17, 1
    %p143 = por %p141, %p142
    %p144 = scmp.ne.s32.totalorder %s135, %s136
    %p145 = scmp.eq.s32.totalorder %s17, 0
    %p146 = por %p144, %p145
    %p147 = scmp.ne.s32.totalorder %s135, %s136
    %p148 = scmp.eq.s32.totalorder %s18, 1
    %p149 = por %p147, %p148
    %p151 = scmp.ne.s32.totalorder %s136, %s150
    %p152 = scmp.eq.s32.totalorder %s18, 0
    %p153 = por %p151, %p152
    %s155 = sadd.s32 %s154, 1
    %p158 = scmp.eq.s32.totalorder %s12, 1
    %p159 = scmp.ne.s32.totalorder %s154, %s156
    %p160 = scmp.eq.s32.totalorder %s12, 0
    %p161 = por %p159, %p160
    %p162 = scmp.ne.s32.totalorder %s154, %s156
    %p163 = scmp.eq.s32.totalorder %s17, 1
    %p164 = por %p162, %p163
    %p165 = scmp.ne.s32.totalorder %s156, %s157
    %p166 = scmp.eq.s32.totalorder %s17, 0
    %p167 = por %p165, %p166
    %p168 = scmp.ne.s32.totalorder %s156, %s157
    %p169 = scmp.eq.s32.totalorder %s18, 1
    %p170 = por %p168, %p169
    %p172 = scmp.ne.s32.totalorder %s157, %s171
    %p173 = scmp.eq.s32.totalorder %s18, 0
    %p174 = por %p172, %p173
    %s175 = ssub.s32 %s19, %s31
    %p176 = scmp.eq.s32.totalorder %s175, 0
    %s178 = sadd.s32 %s177, 1
    %s179 = scalar_select %p176, %s177, %s178
    %p182 = pneg %p176
    %p183 = scmp.eq.s32.totalorder %s12, 1
    %p184 = por %p182, %p183
    %p185 = scmp.ne.s32.totalorder %s177, %s180
    %p186 = scmp.eq.s32.totalorder %s12, 0
    %p187 = por %p185, %p186
    %p188 = scmp.ne.s32.totalorder %s177, %s180
    %p189 = scmp.eq.s32.totalorder %s17, 1
    %p190 = por %p188, %p189
    %p191 = scmp.ne.s32.totalorder %s180, %s181
    %p192 = scmp.eq.s32.totalorder %s17, 0
    %p193 = por %p191, %p192
    %p194 = scmp.ne.s32.totalorder %s180, %s181
    %p195 = scmp.eq.s32.totalorder %s18, 1
    %p196 = por %p194, %p195
    %p198 = scmp.ne.s32.totalorder %s181, %s197
    %p199 = scmp.eq.s32.totalorder %s18, 0
    %p200 = por %p198, %p199
    %p201 = scmp.le.s32.totalorder 1, %s12
    %p202 = scmp.lt.s32.totalorder %s12, 3
    %p203 = pnand %p201, %p202
    %p204 = pneg %p203
    // Predicated region
    $region9: #{encoder_only_transformer.15} parent=5 // pred_check
      _
    $region10: #{encoder_only_transformer.15} parent=5 // pred_check_branch
      %206 = sbr.rel (%p203) target = $region12
    $region11: #{encoder_only_transformer.15} parent=5 // pred_region
      %s207 = ssub.s32 %s12, 1
      // Predicated region
      $region13: #{encoder_only_transformer.15} parent=11 // pred_check
        %p208 = pneg %p78
      $region14: #{encoder_only_transformer.15} parent=11 // pred_check_branch
        %210 = sbr.rel (%p208) target = $region16
      $region15: #{encoder_only_transformer.15} parent=11 // pred_region
        %s211 = smul.u32 8, %s22
        %p212 = scmp.lt.s32.totalorder %s211, 7
        %s213 = scalar_select %p212, %s211, 7
        %s214 = smul.addr %s213, 4
        %s215 = scalar_lea.vmem %s1, %s214
        %s216 = smul.u32 8, %s22
      $region16: #{encoder_only_transformer.15} parent=11 // pred_fallthru
        _
      // Predicated region
      $region17: #{encoder_only_transformer.15} parent=11 // pred_check
        %p217 = pneg %p99
      $region18: #{encoder_only_transformer.15} parent=11 // pred_check_branch
        %219 = sbr.rel (%p217) target = $region20
      $region19: #{encoder_only_transformer.15} parent=11 // pred_region
        _
      $region20: #{encoder_only_transformer.15} parent=11 // pred_fallthru
        _
      // Predicated region
      $region21: #{encoder_only_transformer.15} parent=11 // pred_check
        %p220 = pneg %p146
      $region22: #{encoder_only_transformer.15} parent=11 // pred_check_branch
        %222 = sbr.rel (%p220) target = $region24
      $region23: #{encoder_only_transformer.15} parent=11 // pred_region
        _
      $region24: #{encoder_only_transformer.15} parent=11 // pred_fallthru
        _
      // Predicated region
      $region25: #{encoder_only_transformer.15} parent=11 // pred_check
        %p223 = pneg %p167
      $region26: #{encoder_only_transformer.15} parent=11 // pred_check_branch
        %225 = sbr.rel (%p223) target = $region28
      $region27: #{encoder_only_transformer.15} parent=11 // pred_region
        _
      $region28: #{encoder_only_transformer.15} parent=11 // pred_fallthru
        _
    $region12: #{encoder_only_transformer.15} parent=5 // pred_fallthru
      _
    %p226 = scmp.lt.s32.totalorder %s12, 2
    // Predicated region
    $region29: #{encoder_only_transformer.15} parent=5 // pred_check
      %p227 = pneg %p226
    $region30: #{encoder_only_transformer.15} parent=5 // pred_check_branch
      %229 = sbr.rel (%p227) target = $region32
    $region31: #{encoder_only_transformer.15} parent=5 // pred_region
      // Predicated region
      $region33: #{encoder_only_transformer.15} parent=31 // pred_check
        %p230 = pneg %p46
      $region34: #{encoder_only_transformer.15} parent=31 // pred_check_branch
        %232 = sbr.rel (%p230) target = $region36
      $region35: #{encoder_only_transformer.15} parent=31 // pred_region
        %p233 = scmp.lt.s32.totalorder %s19, 1
        %s234 = scalar_select %p233, %s19, 1
        %p235 = scmp.lt.s32.totalorder %s20, 0
        %s236 = scalar_select %p235, %s20, 0
        %s237 = sadd.s32 %s236, %s234
        %s238 = smul.addr %s237, 4
        %s239 = scalar_lea.vmem %s0, %s238
      $region36: #{encoder_only_transformer.15} parent=31 // pred_fallthru
        _
      // Predicated region
      $region37: #{encoder_only_transformer.15} parent=31 // pred_check
        %p240 = pneg %p119
      $region38: #{encoder_only_transformer.15} parent=31 // pred_check_branch
        %242 = sbr.rel (%p240) target = $region40
      $region39: #{encoder_only_transformer.15} parent=31 // pred_region
        %p243 = scmp.lt.s32.totalorder %s19, 1
        %s244 = scalar_select %p243, %s19, 1
        %s245 = smul.addr %s244, 4
        %s246 = scalar_lea.vmem %s3, %s245
      $region40: #{encoder_only_transformer.15} parent=31 // pred_fallthru
        _
    $region32: #{encoder_only_transformer.15} parent=5 // pred_fallthru
      _
    %p247 = scmp.le.s32.totalorder 1, %s12
    %p248 = scmp.lt.s32.totalorder %s12, 3
    %p249 = pnand %p247, %p248
    %p250 = pneg %p249
    // Predicated region
    $region41: #{encoder_only_transformer.15} parent=5 // pred_check
      _
    $region42: #{encoder_only_transformer.15} parent=5 // pred_check_branch
      %252 = sbr.rel (%p249) target = $region44
    $region43: #{encoder_only_transformer.15} parent=5 // pred_region
      %s253 = ssub.s32 %s12, 1
      %p254 = scmp.lt.s32.totalorder %s21, 1
      %s255 = scalar_select %p254, %s21, 1
      %p256 = scmp.lt.s32.totalorder %s22, 0
      %s257 = scalar_select %p256, %s22, 0
      %s258 = sadd.s32 %s257, %s255
      %s259 = smul.addr %s258, 4
      %s260 = scalar_lea.vmem %s0, %s259
      %p261 = pneg %p52
      %p262 = pneg %p49
      %s263 = smul.u32 8, %s22
      %p264 = scmp.lt.s32.totalorder %s263, 7
      %s265 = scalar_select %p264, %s263, 7
      %s266 = smul.addr %s265, 4
      %s267 = scalar_lea.vmem %s1, %s266
      %p268 = pneg %p78
      %p269 = pneg %p75
      %p270 = pneg %p99
      %p271 = pneg %p96
      %p272 = scmp.lt.s32.totalorder %s21, 1
      %s273 = scalar_select %p272, %s21, 1
      %s274 = smul.addr %s273, 4
      %s275 = scalar_lea.vmem %s3, %s274
      %p276 = pneg %p125
      %p277 = pneg %p122
      %p278 = pneg %p146
      %p279 = pneg %p143
      %p280 = pneg %p167
      %p281 = pneg %p164
      %p282 = pneg %p193
      %p283 = pneg %p190
      %p284 = scmp.lt.s32.totalorder %s21, 1
      %s285 = scalar_select %p284, %s21, 1
      %s286 = smul.addr %s285, 4
      %s287 = scalar_lea.vmem %s6, %s286
      %p288 = scmp.lt.s32.totalorder %s21, 1
      %s289 = scalar_select %p288, %s21, 1
      %p290 = scmp.lt.s32.totalorder %s22, 0
      %s291 = scalar_select %p290, %s22, 0
      %s292 = sadd.s32 %s291, %s289
      %s293 = smul.addr %s292, 4
      %s294 = scalar_lea.vmem %s0, %s293
      %s295 = smul.u32 8, %s22
      %p296 = scmp.lt.s32.totalorder %s295, 7
      %s297 = scalar_select %p296, %s295, 7
      %s298 = smul.addr %s297, 4
      %s299 = scalar_lea.vmem %s1, %s298
      %s300 = smul.u32 8, %s22
      %p301 = scmp.lt.s32.totalorder %s21, 1
      %s302 = scalar_select %p301, %s21, 1
      %s303 = smul.addr %s302, 4
      %s304 = scalar_lea.vmem %s3, %s303
      %p305 = scmp.lt.s32.totalorder %s21, 1
      %s306 = scalar_select %p305, %s21, 1
      %s307 = smul.addr %s306, 4
      %s308 = scalar_lea.vmem %s6, %s307
      %p310 = scmp.eq.s32.totalorder %s22, 0
      // Predicated region
      $region45: #{encoder_only_transformer.15} parent=43 // pred_check
        %p311 = pneg %p310
      $region46: #{encoder_only_transformer.15} parent=43 // pred_check_branch
        %313 = sbr.rel (%p311) target = $region48
      $region47: #{encoder_only_transformer.15} parent=43 // pred_region
        %vm314 = vcmask 261120
        %315 = vst.msk [vmem:[#allocation2] sm:$0xff] %vm314, 0.0
      $region48: #{encoder_only_transformer.15} parent=43 // pred_fallthru
        _
      %v316 = vld [vmem:[%s294] sm:$0xf]
      %v317 = vld [vmem:[#allocation2] sm:$0xff]
      %v318 = vld [vmem:[%s299] sm:$0xf]
      %v319 = vld [vmem:[%s299 + $0x4] sm:$0xf]
      %v320 = vld [vmem:[%s299 + $0x8] sm:$0xf]
      %v321 = vld [vmem:[%s299 + $0xc] sm:$0xf]
      %v322 = vld [vmem:[%s299 + $0x10] sm:$0xf]
      %v323 = vld [vmem:[%s299 + $0x14] sm:$0xf]
      %v324 = vld [vmem:[%s299 + $0x18] sm:$0xf]
      %v325 = vld [vmem:[%s299 + $0x1c] sm:$0xf]
      %v334 = vunpack.c.l.b16 %v318
      %v335 = vunpack.c.l.b16 %v319
      %v336 = vunpack.c.l.b16 %v320
      %v337 = vunpack.c.l.b16 %v321
      %v338 = vunpack.c.l.b16 %v322
      %v339 = vunpack.c.l.b16 %v323
      %v340 = vunpack.c.l.b16 %v324
      %v341 = vunpack.c.l.b16 %v325
      %v342 = vpack.c.b16 %v335, %v334
      %v343 = vpack.c.b16 %v337, %v336
      %v344 = vpack.c.b16 %v339, %v338
      %v345 = vpack.c.b16 %v341, %v340
      %vm350 = vcmask 523264
      %v352 = vsel %vm350, %v316, 0
      %354 = vmatprep.subr.bf16.mxu0 0
      %355 = vmatpush1.bf16.msra.mxu0 %v342
      %356 = vmatprep.subr.bf16.mxu0 0
      %357 = vmatpush1.bf16.msra.mxu0 %v343
      %358 = vmatprep.subr.bf16.mxu0 0
      %359 = vmatpush1.bf16.msra.mxu0 %v344
      %360 = vmatprep.subr.bf16.mxu0 0
      %361 = vmatpush1.bf16.msra.mxu0 %v345
      %362 = vmatprep.subr.bf16.mxu0 0
      %363 = vmatpush1.bf16.msra.mxu0 0
      %364 = vmatprep.subr.bf16.mxu0 0
      %365 = vmatpush1.bf16.msra.mxu0 0
      %366 = vmatprep.subr.bf16.mxu0 0
      %367 = vmatpush1.bf16.msra.mxu0 0
      %368 = vmatprep.subr.bf16.mxu0 0
      %369 = vmatpush1.bf16.msra.mxu0 0
      %370 = vmatprep.subr.bf16.mxu0 0
      %371 = vmatpush1.bf16.msra.mxu0 0
      %372 = vmatprep.subr.bf16.mxu0 0
      %373 = vmatpush1.bf16.msra.mxu0 0
      %374 = vmatprep.subr.bf16.mxu0 0
      %375 = vmatpush1.bf16.msra.mxu0 0
      %376 = vmatprep.subr.bf16.mxu0 0
      %377 = vmatpush1.bf16.msra.mxu0 0
      %378 = vmatprep.subr.bf16.mxu0 0
      %379 = vmatpush1.bf16.msra.mxu0 0
      %380 = vmatprep.subr.bf16.mxu0 0
      %381 = vmatpush1.bf16.msra.mxu0 0
      %382 = vmatprep.subr.bf16.mxu0 0
      %383 = vmatpush1.bf16.msra.mxu0 0
      %384 = vmatprep.subr.bf16.mxu0 0
      %385 = vmatpush1.bf16.msra.mxu0 0
      %386 = vmatprep.mubr.bf16.mxu0 0
      %387 = vmatmul.mubr.bf16.gmra.mrb[0].mxu0 %v352
      %v388 = vpop.f32.mrb[0].mxu0
      %v389 = vadd.f32 0.0, %v388
      %v390 = vpop.f32.mrb[0].mxu0
      %v391 = vpop.f32.mrb[0].mxu0
      %v392 = vpop.f32.mrb[0].mxu0
      %393 = vdwg.mxu0
      %v394 = vadd.f32 %v317, %v389
      %vm395 = vcmask 261120
      %396 = vst.msk [vmem:[#allocation2] sm:$0xff] %vm395, %v394
      // Predicated region
      $region49: #{encoder_only_transformer.15} parent=43 // pred_check
        %p397 = pneg %p310
      $region50: #{encoder_only_transformer.15} parent=43 // pred_check_branch
        %399 = sbr.rel (%p397) target = $region52
      $region51: #{encoder_only_transformer.15} parent=43 // pred_region
        %v400 = vld [vmem:[#allocation2] sm:$0xff]
        %v401 = vld [vmem:[%s2] sm:$0x1]
        %v403 = vlaneseq
        %v404 = vshrl.u32 %v403, 7
        %v405 = vsub.s32 0, %v404
        %v406 = vrot.slane %v401, %v405
        %v408 = vadd.f32 %v400, %v406
        %v409 = vld [vmem:[%s304] sm:$0xf]
        %v410 = vunpack.c.l.bf16 %v409
        %v411 = vadd.f32 %v408, %v410
        %v412 = vsel %vm395, %v411, 0.0
        %413 = vadd.xlane.f32.xlu0 %v412
        %v414 = vpop.xlane.xlu0 %413
        %v415 = vrcp.pop 32.0
        %v416 = vmul.f32 %v414, %v415
        %v417 = vsub.f32 %v411, %v416
        %v418 = vmul.f32 %v417, %v417
        %v419 = vsel %vm395, %v418, 0.0
        %420 = vadd.xlane.f32.xlu0 %v419
        %v421 = vpop.xlane.xlu0 %420
        %v422 = vmul.f32 %v421, %v415
        %v423 = vadd.f32 %v422, 1e-05
        %v424 = vrsqrt.pop %v423
        %v425 = vmul.f32 %v417, %v424
        %v426 = vld [vmem:[%s4] sm:$0x1]
        %v428 = vlaneseq
        %v429 = vshrl.u32 %v428, 7
        %v430 = vsub.s32 0, %v429
        %v431 = vrot.slane %v426, %v430
        %v433 = vmul.f32 %v425, %v431
        %v434 = vld [vmem:[%s5] sm:$0x1]
        %v436 = vlaneseq
        %v437 = vshrl.u32 %v436, 7
        %v438 = vsub.s32 0, %v437
        %v439 = vrot.slane %v434, %v438
        %v441 = vadd.f32 %v433, %v439
        %v442 = vpack.c.bf16 %v441, %v441
        %vm443 = vcmask 257024
        %444 = vst.msk [vmem:[%s308] sm:$0xf] %vm443, %v442
      $region52: #{encoder_only_transformer.15} parent=43 // pred_fallthru
        _
      %p445 = scmp.lt.s32.totalorder %s21, 1
      %s446 = scalar_select %p445, %s21, 1
      %s447 = smul.addr %s446, 4
      %s448 = scalar_lea.vmem %s6, %s447
      // Predicated region
      $region53: #{encoder_only_transformer.15} parent=43 // pred_check
        %p449 = pneg %p190
      $region54: #{encoder_only_transformer.15} parent=43 // pred_check_branch
        %451 = sbr.rel (%p449) target = $region56
      $region55: #{encoder_only_transformer.15} parent=43 // pred_region
        _
      $region56: #{encoder_only_transformer.15} parent=43 // pred_fallthru
        _
    $region44: #{encoder_only_transformer.15} parent=5 // pred_fallthru
      _
    %p452 = scmp.le.s32.totalorder 2, %s12
    // Predicated region
    $region57: #{encoder_only_transformer.15} parent=5 // pred_check
      %p453 = pneg %p452
    $region58: #{encoder_only_transformer.15} parent=5 // pred_check_branch
      %455 = sbr.rel (%p453) target = $region60
    $region59: #{encoder_only_transformer.15} parent=5 // pred_region
      %s456 = ssub.s32 %s12, 2
      // Predicated region
      $region61: #{encoder_only_transformer.15} parent=59 // pred_check
        %p457 = pneg %p196
      $region62: #{encoder_only_transformer.15} parent=59 // pred_check_branch
        %459 = sbr.rel (%p457) target = $region64
      $region63: #{encoder_only_transformer.15} parent=59 // pred_region
        %p460 = scmp.lt.s32.totalorder %s23, 1
        %s461 = scalar_select %p460, %s23, 1
        %s462 = smul.addr %s461, 4
        %s463 = scalar_lea.vmem %s6, %s462
      $region64: #{encoder_only_transformer.15} parent=59 // pred_fallthru
        _
    $region60: #{encoder_only_transformer.15} parent=5 // pred_fallthru
      _
  $region6: #{encoder_only_transformer.15} parent=0 // loop_footer
    %s16 = sadd.s32 1, %s12
  $region7: #{encoder_only_transformer.15} parent=0 // loop_footer_branch
    %11 = sbr.rel target = $region3
  $region8: #{encoder_only_transformer.15} parent=0 // loop_exit
    _

</llo_original>
